<compile_context>
chip_gen: v5e
topology: v5e:2x2
jax: 0.10.0
libtpu: 0.0.40
codegen_flags: <defaults>
</compile_context>

<pallas_src>
import functools

import jax
import jax.numpy as jnp
from jax.experimental import pallas as pl
from jax.experimental.pallas import tpu as pltpu


# ---------------------------------------------------------------------------
# Weight packing (done once, outside the kernel, in XLA).
# ---------------------------------------------------------------------------
def _pack_conv_weights(w, cin_pad, cout_pad, dtype):
    """w: (3, 3, Cin, Cout) HWIO -> (3, 3*cin_pad, cout_pad).

    out[kh, kw*cin_pad + c, o] = w[kh, kw, c, o].  Only the 9 real taps are
    stored (no zero blocks beyond optional channel padding).
    """
    cin, cout = w.shape[2], w.shape[3]
    wp = jnp.pad(w, ((0, 0), (0, 0), (0, cin_pad - cin), (0, cout_pad - cout)))
    return jnp.concatenate([wp[:, 0], wp[:, 1], wp[:, 2]], axis=1).astype(dtype)


# ---------------------------------------------------------------------------
# Fused kernel: one batch element per grid step.
#
# Input layout presented by the wrapper (free reshape of NHWC):
#   x4[n, i, r, j, b*Cin + c] = x[n, 2*i + r, 4*j + b, c]
# so a 3x3 / stride-2 / pad-1 conv becomes, per tap row kh, one matmul with
# K = 3*Cin over an "im2col over width" operand:
#   even output col 2j   needs input cols (4j-1, 4j,   4j+1)  <-> w[kh, 0..2]
#   odd  output col 2j+1 needs input cols (4j+1, 4j+2, 4j+3)  <-> w[kh, 0..2]
# Both parities share the same weight, so they are fused along the M dim.
# ---------------------------------------------------------------------------
def _fused_p6p7_kernel(x4_ref, w6_ref, b6_ref, w7_ref, b7_ref,
                       p6_ref, p7_ref,
                       xi_ref, acc6_ref, p6i_ref, acc7_ref,
                       *, Ho, Wo2, Ho2, Cin, Cp, cdt):
    f32 = jnp.float32
    HW = Ho * Wo2           # p6 positions per column-parity stream
    HW2 = Ho2 * Wo2         # p7 positions
    C3 = 3 * Cin
    # (row-slice start, row-parity plane) for tap row kh = 0, 1, 2 of a
    # 3x3 / stride-2 / pad-1 conv whose input rows are stored pair-split:
    #   kh=0 -> odd plane, pair i-1 ; kh=1 -> even plane, pair i ; kh=2 -> odd, pair i
    DI_R = ((0, 1), (1, 0), (1, 1))

    # -- stage 0: zero only the halo cells (top row / left column).  The
    #    interior is fully overwritten every grid step, so no full-buffer clear.
    for r in (0, 1):
        xi_ref[r, :, 0, 0, 0:Cin] = jnp.zeros((Ho + 1, Cin), cdt)
        p6i_ref[r, :, 0, 0:Cp] = jnp.zeros((Ho2 + 1, Cp), cdt)
    xi_ref[1, 0] = jnp.zeros((2, Wo2, C3), cdt)
    p6i_ref[1, 0] = jnp.zeros((Wo2, 3 * Cp), cdt)

    # -- stage 1: build, once per row-parity plane, the two column-window
    #    operands so every per-tap-row matmul operand below is a pure
    #    leading-row slice of a width-Wo2 buffer (free reshape, no per-tap
    #    relayout copies).
    #      stream 0 (even output cols): channel blocks = input cols 4j-1|4j|4j+1
    #      stream 1 (odd  output cols): channel blocks = input cols 4j+1|4j+2|4j+3
    for r in (0, 1):
        xi_ref[r, 1:, 1, :, :] = x4_ref[0, :, r, :, Cin:4 * Cin]
        xi_ref[r, 1:, 0, :, Cin:C3] = x4_ref[0, :, r, :, 0:2 * Cin]
        xi_ref[r, 1:, 0, 1:, 0:Cin] = x4_ref[0, :, r, 0:Wo2 - 1, 3 * Cin:4 * Cin]

    # -- stage 2: conv1 -> p6.  One MXU pass per tap row (K = 3*Cin,
    #    M = 2*Ho*Wo2 covers both column parities), bias folded into the
    #    accumulator init, one RMW += per tap row, f32 accumulation in VMEM.
    acc6_ref[...] = jnp.broadcast_to(b6_ref[...], (2 * HW, Cp))
    for kh, (di, r) in enumerate(DI_R):
        patch = xi_ref[r, di:di + Ho].reshape(2 * HW, C3)
        acc6_ref[...] += jnp.dot(patch, w6_ref[kh], preferred_element_type=f32)

    # -- stage 3: epilogue in per-row chunks (avoids holding the whole f32
    #    accumulator live): write p6 (pre-ReLU, matching the PyTorch output) to
    #    HBM, apply ReLU exactly once, and restage relu(p6) into the conv2
    #    im2col scratch (p6 never leaves VMEM on the conv2 path).
    for i in range(Ho):
        base = i * 2 * Wo2
        even = acc6_ref[base:base + Wo2, :]               # p6[i, 0::2, :]
        odd = acc6_ref[base + Wo2:base + 2 * Wo2, :]      # p6[i, 1::2, :]
        p6_ref[0, i, 0] = even.astype(p6_ref.dtype)
        p6_ref[0, i, 1] = odd.astype(p6_ref.dtype)
        e = jnp.maximum(even, 0.0).astype(cdt)
        o = jnp.maximum(odd, 0.0).astype(cdt)
        r2, p2 = i % 2, i // 2
        p6i_ref[r2, 1 + p2, :, Cp:2 * Cp] = e             # p6 col 2*j2   <-> kw=1
        p6i_ref[r2, 1 + p2, :, 2 * Cp:3 * Cp] = o         # p6 col 2*j2+1 <-> kw=2
        p6i_ref[r2, 1 + p2, 1:, 0:Cp] = o[0:Wo2 - 1, :]   # p6 col 2*j2-1 <-> kw=0

    # -- stage 4: conv2 -> p7, same structure (K = 3*Cp per tap row).
    acc7_ref[...] = jnp.broadcast_to(b7_ref[...], (HW2, Cp))
    for kh, (di, r2) in enumerate(DI_R):
        patch = p6i_ref[r2, di:di + Ho2].reshape(HW2, 3 * Cp)
        acc7_ref[...] += jnp.dot(patch, w7_ref[kh], preferred_element_type=f32)
    p7_ref[0] = acc7_ref[...].reshape(Ho2, Wo2, Cp).astype(p7_ref.dtype)


# ---------------------------------------------------------------------------
# Wrapper (NCHW in / NCHW out, like the PyTorch module).
# ---------------------------------------------------------------------------
@functools.partial(jax.jit, static_argnames=("compute_dtype",))
def lastlevel_p6p7_fused(x_nchw, w6, b6, w7, b7, *, compute_dtype=jnp.bfloat16):
    N, Cin, H, W = x_nchw.shape
    Cout = w6.shape[-1]
    assert H % 4 == 0 and W % 4 == 0, "fused P6/P7 kernel requires H, W % 4 == 0"
    Ho, Wo = H // 2, W // 2
    Ho2, Wo2 = Ho // 2, Wo // 2
    Cp = ((Cout + 127) // 128) * 128          # lane-dense output channels
    Cin4 = 4 * Cin

    # NCHW -> NHWC, cast to the MXU operand dtype once in the wrapper (halves
    # input HBM traffic for bf16), then a free reshape to (N, H/2, 2, W/4, 4*Cin):
    # row pairs + width space-to-depth by 4.
    x_nhwc = jnp.transpose(x_nchw, (0, 2, 3, 1)).astype(compute_dtype)
    x4 = x_nhwc.reshape(N, Ho, 2, Wo2, Cin4)

    # Packed weights hold exactly the 9 real taps each (no zero blocks).
    w6p = _pack_conv_weights(w6, Cin, Cp, compute_dtype)    # (3, 3*Cin, Cp)
    w7p = _pack_conv_weights(w7, Cp, Cp, compute_dtype)     # (3, 3*Cp,  Cp)
    b6p = jnp.pad(b6, (0, Cp - Cout)).reshape(1, Cp).astype(jnp.float32)
    b7p = jnp.pad(b7, (0, Cp - Cout)).reshape(1, Cp).astype(jnp.float32)

    kernel = functools.partial(_fused_p6p7_kernel, Ho=Ho, Wo2=Wo2, Ho2=Ho2,
                               Cin=Cin, Cp=Cp, cdt=compute_dtype)
    p6s, p7s = pl.pallas_call(
        kernel,
        out_shape=(jax.ShapeDtypeStruct((N, Ho, 2, Wo2, Cp), x_nchw.dtype),
                   jax.ShapeDtypeStruct((N, Ho2, Wo2, Cp), x_nchw.dtype)),
        grid=(N,),
        in_specs=[
            pl.BlockSpec((1, Ho, 2, Wo2, Cin4), lambda n: (n, 0, 0, 0, 0)),
            pl.BlockSpec((3, 3 * Cin, Cp), lambda n: (0, 0, 0)),
            pl.BlockSpec((1, Cp), lambda n: (0, 0)),
            pl.BlockSpec((3, 3 * Cp, Cp), lambda n: (0, 0, 0)),
            pl.BlockSpec((1, Cp), lambda n: (0, 0)),
        ],
        out_specs=(
            pl.BlockSpec((1, Ho, 2, Wo2, Cp), lambda n: (n, 0, 0, 0, 0)),
            pl.BlockSpec((1, Ho2, Wo2, Cp), lambda n: (n, 0, 0, 0)),
        ),
        scratch_shapes=[
            pltpu.VMEM((2, Ho + 1, 2, Wo2, 3 * Cin), compute_dtype),  # conv1 im2col
            pltpu.VMEM((2 * Ho * Wo2, Cp), jnp.float32),              # acc p6
            pltpu.VMEM((2, Ho2 + 1, Wo2, 3 * Cp), compute_dtype),     # conv2 im2col
            pltpu.VMEM((Ho2 * Wo2, Cp), jnp.float32),                 # acc p7
        ],
        compiler_params=pltpu.CompilerParams(
            dimension_semantics=("parallel",)),
    )(x4, w6p, b6p, w7p, b7p)

    # Undo the kernel-friendly layouts: one transpose per output (which the
    # NCHW interface forces anyway) + dropping the Cout padding lanes.
    p6 = jnp.transpose(p6s[..., :Cout], (0, 4, 1, 3, 2)).reshape(N, Cout, Ho, Wo)
    p7 = jnp.transpose(p7s[..., :Cout], (0, 3, 1, 2))
    return p6, p7


class LastLevelP6P7:
    """JAX/Pallas port of the PyTorch LastLevelP6P7 module (NCHW interface)."""

    def __init__(self, in_channels, out_channels, key):
        self.use_P5 = in_channels == out_channels
        k = jax.random.split(key, 4)

        def init_conv(kw_key, kb_key, cin, cout):
            # deterministic stand-in for PyTorch's default Conv2d init
            fan_in = cin * 9
            bound = 1.0 / float(fan_in) ** 0.5
            w = jax.random.uniform(kw_key, (3, 3, cin, cout), jnp.float32,
                                   -bound, bound)
            b = jax.random.uniform(kb_key, (cout,), jnp.float32, -bound, bound)
            return w, b

        self.w6, self.b6 = init_conv(k[0], k[1], in_channels, out_channels)
        self.w7, self.b7 = init_conv(k[2], k[3], out_channels, out_channels)

    def __call__(self, c5, p5, compute_dtype=jnp.bfloat16):
        x = p5 if self.use_P5 else c5               # NCHW
        p6, p7 = lastlevel_p6p7_fused(x, self.w6, self.b6, self.w7, self.b7,
                                      compute_dtype=compute_dtype)
        return [p6, p7]


def _reference(c5, p5, mod):
    """Plain-XLA reference for correctness checking."""
    x = p5 if mod.use_P5 else c5
    x = jnp.transpose(x, (0, 2, 3, 1))

    def conv(x, w, b):
        y = jax.lax.conv_general_dilated(
            x, w, window_strides=(2, 2), padding=((1, 1), (1, 1)),
            dimension_numbers=("NHWC", "HWIO", "NHWC"))
        return y + b[None, None, None, :]

    p6 = conv(x, mod.w6, mod.b6)
    p7 = conv(jnp.maximum(p6, 0.0), mod.w7, mod.b7)
    return [jnp.transpose(p6, (0, 3, 1, 2)), jnp.transpose(p7, (0, 3, 1, 2))]


if __name__ == "__main__":
    key = jax.random.PRNGKey(0)
    k_mod, k_c5, k_p5 = jax.random.split(key, 3)

    N, Cin, Cout, H, W = 2, 16, 8, 16, 16   # use_P5 == False -> conv runs on c5
    c5 = jax.random.normal(k_c5, (N, Cin, H, W), jnp.float32)
    p5 = jax.random.normal(k_p5, (N, Cout, H, W), jnp.float32)

    mod = LastLevelP6P7(Cin, Cout, k_mod)
    r6, r7 = _reference(c5, p5, mod)

    # Default path: bf16 MXU operands (v5e/v6e/v7x fast path), f32 accumulation.
    p6, p7 = mod(c5, p5)
    jax.block_until_ready(p6)
    jax.block_until_ready(p7)
    assert p6.shape == (N, Cout, H // 2, W // 2), p6.shape
    assert p7.shape == (N, Cout, H // 4, W // 4), p7.shape
    assert jnp.allclose(p6, r6, atol=5e-2, rtol=5e-2)
    assert jnp.allclose(p7, r7, atol=5e-2, rtol=5e-2)

    # f32 MXU operands: tight check against the XLA reference.
    p6f, p7f = mod(c5, p5, compute_dtype=jnp.float32)
    jax.block_until_ready(p6f)
    jax.block_until_ready(p7f)
    assert jnp.allclose(p6f, r6, atol=1e-4, rtol=1e-4)
    assert jnp.allclose(p7f, r7, atol=1e-4, rtol=1e-4)

    print("KERNEL_OK")
</pallas_src>

<mosaic_0001>
module attributes {stable_mosaic.version = 11 : i64} {
  func.func @_fused_p6p7_kernel(%arg0: i32, %arg1: memref<1x8x2x4x64xbf16, #tpu.memory_space<vmem>>, %arg2: memref<3x48x128xbf16, #tpu.memory_space<vmem>>, %arg3: memref<1x128xf32, #tpu.memory_space<vmem>>, %arg4: memref<3x384x128xbf16, #tpu.memory_space<vmem>>, %arg5: memref<1x128xf32, #tpu.memory_space<vmem>>, %arg6: memref<1x8x2x4x128xf32, #tpu.memory_space<vmem>>, %arg7: memref<1x4x4x128xf32, #tpu.memory_space<vmem>>, %arg8: memref<2x9x2x4x48xbf16, #tpu.memory_space<vmem>>, %arg9: memref<64x128xf32, #tpu.memory_space<vmem>>, %arg10: memref<2x5x4x384xbf16, #tpu.memory_space<vmem>>, %arg11: memref<16x128xf32, #tpu.memory_space<vmem>>) attributes {dimension_semantics = [#tpu.dimension_semantics<parallel>], iteration_bounds = array<i64: 2>, scalar_prefetch = 0 : i64, scratch_operands = 4 : i64, tpu.core_type = #tpu.core_type<tc>, window_params = [{transform_indices = @transform_0, window_bounds = array<i64: 1, 8, 2, 4, 64>}, {pipeline_mode = #tpu.pipeline_mode<synchronous>, transform_indices = @transform_1, window_bounds = array<i64: 3, 48, 128>}, {pipeline_mode = #tpu.pipeline_mode<synchronous>, transform_indices = @transform_2, window_bounds = array<i64: 1, 128>}, {pipeline_mode = #tpu.pipeline_mode<synchronous>, transform_indices = @transform_3, window_bounds = array<i64: 3, 384, 128>}, {pipeline_mode = #tpu.pipeline_mode<synchronous>, transform_indices = @transform_4, window_bounds = array<i64: 1, 128>}, {transform_indices = @transform_5, window_bounds = array<i64: 1, 8, 2, 4, 128>}, {transform_indices = @transform_6, window_bounds = array<i64: 1, 4, 4, 128>}]} {
    %cst = arith.constant 0.000000e+00 : bf16
    %0 = vector.broadcast %cst : bf16 to vector<9x16xbf16>
    %c0 = arith.constant 0 : index
    %c0_0 = arith.constant 0 : index
    %c0_1 = arith.constant 0 : index
    %c0_2 = arith.constant 0 : index
    %c0_3 = arith.constant 0 : index
    %1 = vector.load %arg8[%c0, %c0_0, %c0_1, %c0_2, %c0_3] : memref<2x9x2x4x48xbf16, #tpu.memory_space<vmem>>, vector<1x9x1x1x16xbf16>
    %2 = vector.shape_cast %1 : vector<1x9x1x1x16xbf16> to vector<9x16xbf16>
    %3 = vector.shape_cast %0 : vector<9x16xbf16> to vector<1x9x1x1x16xbf16>
    tpu.vector_store %arg8[%c0, %c0_0, %c0_1, %c0_2, %c0_3], %3 {strides = array<i32>} : memref<2x9x2x4x48xbf16, #tpu.memory_space<vmem>>, vector<1x9x1x1x16xbf16>,
    %cst_4 = arith.constant 0.000000e+00 : bf16
    %4 = vector.broadcast %cst_4 : bf16 to vector<5x128xbf16>
    %c0_5 = arith.constant 0 : index
    %c0_6 = arith.constant 0 : index
    %c0_7 = arith.constant 0 : index
    %c0_8 = arith.constant 0 : index
    %5 = vector.load %arg10[%c0_5, %c0_6, %c0_7, %c0_8] : memref<2x5x4x384xbf16, #tpu.memory_space<vmem>>, vector<1x5x1x128xbf16>
    %6 = vector.shape_cast %5 : vector<1x5x1x128xbf16> to vector<5x128xbf16>
    %7 = vector.shape_cast %4 : vector<5x128xbf16> to vector<1x5x1x128xbf16>
    tpu.vector_store %arg10[%c0_5, %c0_6, %c0_7, %c0_8], %7 {strides = array<i32>} : memref<2x5x4x384xbf16, #tpu.memory_space<vmem>>, vector<1x5x1x128xbf16>,
    %cst_9 = arith.constant 0.000000e+00 : bf16
    %8 = vector.broadcast %cst_9 : bf16 to vector<9x16xbf16>
    %c1 = arith.constant 1 : index
    %c0_10 = arith.constant 0 : index
    %c0_11 = arith.constant 0 : index
    %c0_12 = arith.constant 0 : index
    %c0_13 = arith.constant 0 : index
    %9 = vector.load %arg8[%c1, %c0_10, %c0_11, %c0_12, %c0_13] : memref<2x9x2x4x48xbf16, #tpu.memory_space<vmem>>, vector<1x9x1x1x16xbf16>
    %10 = vector.shape_cast %9 : vector<1x9x1x1x16xbf16> to vector<9x16xbf16>
    %11 = vector.shape_cast %8 : vector<9x16xbf16> to vector<1x9x1x1x16xbf16>
    tpu.vector_store %arg8[%c1, %c0_10, %c0_11, %c0_12, %c0_13], %11 {strides = array<i32>} : memref<2x9x2x4x48xbf16, #tpu.memory_space<vmem>>, vector<1x9x1x1x16xbf16>,
    %cst_14 = arith.constant 0.000000e+00 : bf16
    %12 = vector.broadcast %cst_14 : bf16 to vector<5x128xbf16>
    %c1_15 = arith.constant 1 : index
    %c0_16 = arith.constant 0 : index
    %c0_17 = arith.constant 0 : index
    %c0_18 = arith.constant 0 : index
    %13 = vector.load %arg10[%c1_15, %c0_16, %c0_17, %c0_18] : memref<2x5x4x384xbf16, #tpu.memory_space<vmem>>, vector<1x5x1x128xbf16>
    %14 = vector.shape_cast %13 : vector<1x5x1x128xbf16> to vector<5x128xbf16>
    %15 = vector.shape_cast %12 : vector<5x128xbf16> to vector<1x5x1x128xbf16>
    tpu.vector_store %arg10[%c1_15, %c0_16, %c0_17, %c0_18], %15 {strides = array<i32>} : memref<2x5x4x384xbf16, #tpu.memory_space<vmem>>, vector<1x5x1x128xbf16>,
    %cst_19 = arith.constant 0.000000e+00 : bf16
    %16 = vector.broadcast %cst_19 : bf16 to vector<2x4x48xbf16>
    %c1_20 = arith.constant 1 : index
    %c0_21 = arith.constant 0 : index
    %c0_22 = arith.constant 0 : index
    %c0_23 = arith.constant 0 : index
    %c0_24 = arith.constant 0 : index
    %17 = vector.load %arg8[%c1_20, %c0_21, %c0_22, %c0_23, %c0_24] : memref<2x9x2x4x48xbf16, #tpu.memory_space<vmem>>, vector<1x1x2x4x48xbf16>
    %18 = vector.shape_cast %17 : vector<1x1x2x4x48xbf16> to vector<2x4x48xbf16>
    %19 = vector.shape_cast %16 : vector<2x4x48xbf16> to vector<1x1x2x4x48xbf16>
    tpu.vector_store %arg8[%c1_20, %c0_21, %c0_22, %c0_23, %c0_24], %19 {strides = array<i32>} : memref<2x9x2x4x48xbf16, #tpu.memory_space<vmem>>, vector<1x1x2x4x48xbf16>,
    %cst_25 = arith.constant 0.000000e+00 : bf16
    %20 = vector.broadcast %cst_25 : bf16 to vector<4x384xbf16>
    %c1_26 = arith.constant 1 : index
    %c0_27 = arith.constant 0 : index
    %c0_28 = arith.constant 0 : index
    %c0_29 = arith.constant 0 : index
    %21 = vector.load %arg10[%c1_26, %c0_27, %c0_28, %c0_29] : memref<2x5x4x384xbf16, #tpu.memory_space<vmem>>, vector<1x1x4x384xbf16>
    %22 = vector.shape_cast %21 : vector<1x1x4x384xbf16> to vector<4x384xbf16>
    %23 = vector.shape_cast %20 : vector<4x384xbf16> to vector<1x1x4x384xbf16>
    tpu.vector_store %arg10[%c1_26, %c0_27, %c0_28, %c0_29], %23 {strides = array<i32>} : memref<2x5x4x384xbf16, #tpu.memory_space<vmem>>, vector<1x1x4x384xbf16>,
    %c0_30 = arith.constant 0 : index
    %c0_31 = arith.constant 0 : index
    %c0_32 = arith.constant 0 : index
    %c0_33 = arith.constant 0 : index
    %c16 = arith.constant 16 : index
    %24 = vector.load %arg1[%c0_30, %c0_31, %c0_32, %c0_33, %c16] : memref<1x8x2x4x64xbf16, #tpu.memory_space<vmem>>, vector<1x8x1x4x48xbf16>
    %25 = vector.shape_cast %24 : vector<1x8x1x4x48xbf16> to vector<8x4x48xbf16>
    %c0_34 = arith.constant 0 : index
    %c1_35 = arith.constant 1 : index
    %c1_36 = arith.constant 1 : index
    %c0_37 = arith.constant 0 : index
    %c0_38 = arith.constant 0 : index
    %26 = vector.load %arg8[%c0_34, %c1_35, %c1_36, %c0_37, %c0_38] : memref<2x9x2x4x48xbf16, #tpu.memory_space<vmem>>, vector<1x8x1x4x48xbf16>
    %27 = vector.shape_cast %26 : vector<1x8x1x4x48xbf16> to vector<8x4x48xbf16>
    %28 = vector.shape_cast %25 : vector<8x4x48xbf16> to vector<1x8x1x4x48xbf16>
    tpu.vector_store %arg8[%c0_34, %c1_35, %c1_36, %c0_37, %c0_38], %28 {strides = array<i32>} : memref<2x9x2x4x48xbf16, #tpu.memory_space<vmem>>, vector<1x8x1x4x48xbf16>,
    %c0_39 = arith.constant 0 : index
    %c0_40 = arith.constant 0 : index
    %c0_41 = arith.constant 0 : index
    %c0_42 = arith.constant 0 : index
    %c0_43 = arith.constant 0 : index
    %29 = vector.load %arg1[%c0_39, %c0_40, %c0_41, %c0_42, %c0_43] : memref<1x8x2x4x64xbf16, #tpu.memory_space<vmem>>, vector<1x8x1x4x32xbf16>
    %30 = vector.shape_cast %29 : vector<1x8x1x4x32xbf16> to vector<8x4x32xbf16>
    %c0_44 = arith.constant 0 : index
    %c1_45 = arith.constant 1 : index
    %c0_46 = arith.constant 0 : index
    %c0_47 = arith.constant 0 : index
    %c16_48 = arith.constant 16 : index
    %31 = vector.load %arg8[%c0_44, %c1_45, %c0_46, %c0_47, %c16_48] : memref<2x9x2x4x48xbf16, #tpu.memory_space<vmem>>, vector<1x8x1x4x32xbf16>
    %32 = vector.shape_cast %31 : vector<1x8x1x4x32xbf16> to vector<8x4x32xbf16>
    %33 = vector.shape_cast %30 : vector<8x4x32xbf16> to vector<1x8x1x4x32xbf16>
    tpu.vector_store %arg8[%c0_44, %c1_45, %c0_46, %c0_47, %c16_48], %33 {strides = array<i32>} : memref<2x9x2x4x48xbf16, #tpu.memory_space<vmem>>, vector<1x8x1x4x32xbf16>,
    %c0_49 = arith.constant 0 : index
    %c0_50 = arith.constant 0 : index
    %c0_51 = arith.constant 0 : index
    %c0_52 = arith.constant 0 : index
    %c48 = arith.constant 48 : index
    %34 = vector.load %arg1[%c0_49, %c0_50, %c0_51, %c0_52, %c48] : memref<1x8x2x4x64xbf16, #tpu.memory_space<vmem>>, vector<1x8x1x3x16xbf16>
    %35 = vector.shape_cast %34 : vector<1x8x1x3x16xbf16> to vector<8x3x16xbf16>
    %c0_53 = arith.constant 0 : index
    %c1_54 = arith.constant 1 : index
    %c0_55 = arith.constant 0 : index
    %c1_56 = arith.constant 1 : index
    %c0_57 = arith.constant 0 : index
    %36 = vector.load %arg8[%c0_53, %c1_54, %c0_55, %c1_56, %c0_57] : memref<2x9x2x4x48xbf16, #tpu.memory_space<vmem>>, vector<1x8x1x3x16xbf16>
    %37 = vector.shape_cast %36 : vector<1x8x1x3x16xbf16> to vector<8x3x16xbf16>
    %38 = vector.shape_cast %35 : vector<8x3x16xbf16> to vector<1x8x1x3x16xbf16>
    tpu.vector_store %arg8[%c0_53, %c1_54, %c0_55, %c1_56, %c0_57], %38 {strides = array<i32>} : memref<2x9x2x4x48xbf16, #tpu.memory_space<vmem>>, vector<1x8x1x3x16xbf16>,
    %c0_58 = arith.constant 0 : index
    %c0_59 = arith.constant 0 : index
    %c1_60 = arith.constant 1 : index
    %c0_61 = arith.constant 0 : index
    %c16_62 = arith.constant 16 : index
    %39 = vector.load %arg1[%c0_58, %c0_59, %c1_60, %c0_61, %c16_62] : memref<1x8x2x4x64xbf16, #tpu.memory_space<vmem>>, vector<1x8x1x4x48xbf16>
    %40 = vector.shape_cast %39 : vector<1x8x1x4x48xbf16> to vector<8x4x48xbf16>
    %c1_63 = arith.constant 1 : index
    %c1_64 = arith.constant 1 : index
    %c1_65 = arith.constant 1 : index
    %c0_66 = arith.constant 0 : index
    %c0_67 = arith.constant 0 : index
    %41 = vector.load %arg8[%c1_63, %c1_64, %c1_65, %c0_66, %c0_67] : memref<2x9x2x4x48xbf16, #tpu.memory_space<vmem>>, vector<1x8x1x4x48xbf16>
    %42 = vector.shape_cast %41 : vector<1x8x1x4x48xbf16> to vector<8x4x48xbf16>
    %43 = vector.shape_cast %40 : vector<8x4x48xbf16> to vector<1x8x1x4x48xbf16>
    tpu.vector_store %arg8[%c1_63, %c1_64, %c1_65, %c0_66, %c0_67], %43 {strides = array<i32>} : memref<2x9x2x4x48xbf16, #tpu.memory_space<vmem>>, vector<1x8x1x4x48xbf16>,
    %c0_68 = arith.constant 0 : index
    %c0_69 = arith.constant 0 : index
    %c1_70 = arith.constant 1 : index
    %c0_71 = arith.constant 0 : index
    %c0_72 = arith.constant 0 : index
    %44 = vector.load %arg1[%c0_68, %c0_69, %c1_70, %c0_71, %c0_72] : memref<1x8x2x4x64xbf16, #tpu.memory_space<vmem>>, vector<1x8x1x4x32xbf16>
    %45 = vector.shape_cast %44 : vector<1x8x1x4x32xbf16> to vector<8x4x32xbf16>
    %c1_73 = arith.constant 1 : index
    %c1_74 = arith.constant 1 : index
    %c0_75 = arith.constant 0 : index
    %c0_76 = arith.constant 0 : index
    %c16_77 = arith.constant 16 : index
    %46 = vector.load %arg8[%c1_73, %c1_74, %c0_75, %c0_76, %c16_77] : memref<2x9x2x4x48xbf16, #tpu.memory_space<vmem>>, vector<1x8x1x4x32xbf16>
    %47 = vector.shape_cast %46 : vector<1x8x1x4x32xbf16> to vector<8x4x32xbf16>
    %48 = vector.shape_cast %45 : vector<8x4x32xbf16> to vector<1x8x1x4x32xbf16>
    tpu.vector_store %arg8[%c1_73, %c1_74, %c0_75, %c0_76, %c16_77], %48 {strides = array<i32>} : memref<2x9x2x4x48xbf16, #tpu.memory_space<vmem>>, vector<1x8x1x4x32xbf16>,
    %c0_78 = arith.constant 0 : index
    %c0_79 = arith.constant 0 : index
    %c1_80 = arith.constant 1 : index
    %c0_81 = arith.constant 0 : index
    %c48_82 = arith.constant 48 : index
    %49 = vector.load %arg1[%c0_78, %c0_79, %c1_80, %c0_81, %c48_82] : memref<1x8x2x4x64xbf16, #tpu.memory_space<vmem>>, vector<1x8x1x3x16xbf16>
    %50 = vector.shape_cast %49 : vector<1x8x1x3x16xbf16> to vector<8x3x16xbf16>
    %c1_83 = arith.constant 1 : index
    %c1_84 = arith.constant 1 : index
    %c0_85 = arith.constant 0 : index
    %c1_86 = arith.constant 1 : index
    %c0_87 = arith.constant 0 : index
    %51 = vector.load %arg8[%c1_83, %c1_84, %c0_85, %c1_86, %c0_87] : memref<2x9x2x4x48xbf16, #tpu.memory_space<vmem>>, vector<1x8x1x3x16xbf16>
    %52 = vector.shape_cast %51 : vector<1x8x1x3x16xbf16> to vector<8x3x16xbf16>
    %53 = vector.shape_cast %50 : vector<8x3x16xbf16> to vector<1x8x1x3x16xbf16>
    tpu.vector_store %arg8[%c1_83, %c1_84, %c0_85, %c1_86, %c0_87], %53 {strides = array<i32>} : memref<2x9x2x4x48xbf16, #tpu.memory_space<vmem>>, vector<1x8x1x3x16xbf16>,
    %c0_88 = arith.constant 0 : index
    %c0_89 = arith.constant 0 : index
    %54 = vector.load %arg3[%c0_88, %c0_89] : memref<1x128xf32, #tpu.memory_space<vmem>>, vector<1x128xf32>
    %55 = vector.shape_cast %54 : vector<1x128xf32> to vector<1x128xf32>
    %56 = vector.broadcast %55 : vector<1x128xf32> to vector<64x128xf32>
    %c0_90 = arith.constant 0 : index
    %c0_91 = arith.constant 0 : index
    %57 = vector.load %arg9[%c0_90, %c0_91] : memref<64x128xf32, #tpu.memory_space<vmem>>, vector<64x128xf32>
    tpu.vector_store %arg9[%c0_90, %c0_91], %56 {strides = array<i32>} : memref<64x128xf32, #tpu.memory_space<vmem>>, vector<64x128xf32>,
    %c1_92 = arith.constant 1 : index
    %c0_93 = arith.constant 0 : index
    %c0_94 = arith.constant 0 : index
    %c0_95 = arith.constant 0 : index
    %c0_96 = arith.constant 0 : index
    %58 = vector.load %arg8[%c1_92, %c0_93, %c0_94, %c0_95, %c0_96] : memref<2x9x2x4x48xbf16, #tpu.memory_space<vmem>>, vector<1x8x2x4x48xbf16>
    %59 = vector.shape_cast %58 : vector<1x8x2x4x48xbf16> to vector<8x2x4x48xbf16>
    %60 = vector.shape_cast %59 : vector<8x2x4x48xbf16> to vector<64x48xbf16>
    %c0_97 = arith.constant 0 : index
    %c0_98 = arith.constant 0 : index
    %61 = vector.load %arg9[%c0_97, %c0_98] : memref<64x128xf32, #tpu.memory_space<vmem>>, vector<64x128xf32>
    %c0_99 = arith.constant 0 : index
    %c0_100 = arith.constant 0 : index
    %c0_101 = arith.constant 0 : index
    %62 = vector.load %arg2[%c0_99, %c0_100, %c0_101] : memref<3x48x128xbf16, #tpu.memory_space<vmem>>, vector<1x48x128xbf16>
    %63 = vector.shape_cast %62 : vector<1x48x128xbf16> to vector<48x128xbf16>
    %cst_102 = arith.constant dense<0.000000e+00> : vector<64x128xf32>
    %64 = tpu.matmul %60, %63, %cst_102 {dimension_numbers = #tpu.dot_dimension_numbers<[1], [0], [0], [1], [0, 0, 1, 1], [], []>} : vector<64x48xbf16>, vector<48x128xbf16>, vector<64x128xf32> -> vector<64x128xf32>
    %65 = arith.addf %61, %64 : vector<64x128xf32>
    %c0_103 = arith.constant 0 : index
    %c0_104 = arith.constant 0 : index
    %66 = vector.load %arg9[%c0_103, %c0_104] : memref<64x128xf32, #tpu.memory_space<vmem>>, vector<64x128xf32>
    tpu.vector_store %arg9[%c0_103, %c0_104], %65 {strides = array<i32>} : memref<64x128xf32, #tpu.memory_space<vmem>>, vector<64x128xf32>,
    %c0_105 = arith.constant 0 : index
    %c1_106 = arith.constant 1 : index
    %c0_107 = arith.constant 0 : index
    %c0_108 = arith.constant 0 : index
    %c0_109 = arith.constant 0 : index
    %67 = vector.load %arg8[%c0_105, %c1_106, %c0_107, %c0_108, %c0_109] : memref<2x9x2x4x48xbf16, #tpu.memory_space<vmem>>, vector<1x8x2x4x48xbf16>
    %68 = vector.shape_cast %67 : vector<1x8x2x4x48xbf16> to vector<8x2x4x48xbf16>
    %69 = vector.shape_cast %68 : vector<8x2x4x48xbf16> to vector<64x48xbf16>
    %c0_110 = arith.constant 0 : index
    %c0_111 = arith.constant 0 : index
    %70 = vector.load %arg9[%c0_110, %c0_111] : memref<64x128xf32, #tpu.memory_space<vmem>>, vector<64x128xf32>
    %c1_112 = arith.constant 1 : index
    %c0_113 = arith.constant 0 : index
    %c0_114 = arith.constant 0 : index
    %71 = vector.load %arg2[%c1_112, %c0_113, %c0_114] : memref<3x48x128xbf16, #tpu.memory_space<vmem>>, vector<1x48x128xbf16>
    %72 = vector.shape_cast %71 : vector<1x48x128xbf16> to vector<48x128xbf16>
    %cst_115 = arith.constant dense<0.000000e+00> : vector<64x128xf32>
    %73 = tpu.matmul %69, %72, %cst_115 {dimension_numbers = #tpu.dot_dimension_numbers<[1], [0], [0], [1], [0, 0, 1, 1], [], []>} : vector<64x48xbf16>, vector<48x128xbf16>, vector<64x128xf32> -> vector<64x128xf32>
    %74 = arith.addf %70, %73 : vector<64x128xf32>
    %c0_116 = arith.constant 0 : index
    %c0_117 = arith.constant 0 : index
    %75 = vector.load %arg9[%c0_116, %c0_117] : memref<64x128xf32, #tpu.memory_space<vmem>>, vector<64x128xf32>
    tpu.vector_store %arg9[%c0_116, %c0_117], %74 {strides = array<i32>} : memref<64x128xf32, #tpu.memory_space<vmem>>, vector<64x128xf32>,
    %c1_118 = arith.constant 1 : index
    %c1_119 = arith.constant 1 : index
    %c0_120 = arith.constant 0 : index
    %c0_121 = arith.constant 0 : index
    %c0_122 = arith.constant 0 : index
    %76 = vector.load %arg8[%c1_118, %c1_119, %c0_120, %c0_121, %c0_122] : memref<2x9x2x4x48xbf16, #tpu.memory_space<vmem>>, vector<1x8x2x4x48xbf16>
    %77 = vector.shape_cast %76 : vector<1x8x2x4x48xbf16> to vector<8x2x4x48xbf16>
    %78 = vector.shape_cast %77 : vector<8x2x4x48xbf16> to vector<64x48xbf16>
    %c0_123 = arith.constant 0 : index
    %c0_124 = arith.constant 0 : index
    %79 = vector.load %arg9[%c0_123, %c0_124] : memref<64x128xf32, #tpu.memory_space<vmem>>, vector<64x128xf32>
    %c2 = arith.constant 2 : index
    %c0_125 = arith.constant 0 : index
    %c0_126 = arith.constant 0 : index
    %80 = vector.load %arg2[%c2, %c0_125, %c0_126] : memref<3x48x128xbf16, #tpu.memory_space<vmem>>, vector<1x48x128xbf16>
    %81 = vector.shape_cast %80 : vector<1x48x128xbf16> to vector<48x128xbf16>
    %cst_127 = arith.constant dense<0.000000e+00> : vector<64x128xf32>
    %82 = tpu.matmul %78, %81, %cst_127 {dimension_numbers = #tpu.dot_dimension_numbers<[1], [0], [0], [1], [0, 0, 1, 1], [], []>} : vector<64x48xbf16>, vector<48x128xbf16>, vector<64x128xf32> -> vector<64x128xf32>
    %83 = arith.addf %79, %82 : vector<64x128xf32>
    %c0_128 = arith.constant 0 : index
    %c0_129 = arith.constant 0 : index
    %84 = vector.load %arg9[%c0_128, %c0_129] : memref<64x128xf32, #tpu.memory_space<vmem>>, vector<64x128xf32>
    tpu.vector_store %arg9[%c0_128, %c0_129], %83 {strides = array<i32>} : memref<64x128xf32, #tpu.memory_space<vmem>>, vector<64x128xf32>,
    %c0_130 = arith.constant 0 : index
    %c0_131 = arith.constant 0 : index
    %85 = vector.load %arg9[%c0_130, %c0_131] : memref<64x128xf32, #tpu.memory_space<vmem>>, vector<4x128xf32>
    %c4 = arith.constant 4 : index
    %c0_132 = arith.constant 0 : index
    %86 = vector.load %arg9[%c4, %c0_132] : memref<64x128xf32, #tpu.memory_space<vmem>>, vector<4x128xf32>
    %c0_133 = arith.constant 0 : index
    %c0_134 = arith.constant 0 : index
    %c0_135 = arith.constant 0 : index
    %c0_136 = arith.constant 0 : index
    %c0_137 = arith.constant 0 : index
    %87 = vector.load %arg6[%c0_133, %c0_134, %c0_135, %c0_136, %c0_137] : memref<1x8x2x4x128xf32, #tpu.memory_space<vmem>>, vector<1x1x1x4x128xf32>
    %88 = vector.shape_cast %87 : vector<1x1x1x4x128xf32> to vector<4x128xf32>
    %89 = vector.shape_cast %85 : vector<4x128xf32> to vector<1x1x1x4x128xf32>
    tpu.vector_store %arg6[%c0_133, %c0_134, %c0_135, %c0_136, %c0_137], %89 {strides = array<i32>} : memref<1x8x2x4x128xf32, #tpu.memory_space<vmem>>, vector<1x1x1x4x128xf32>,
    %c0_138 = arith.constant 0 : index
    %c0_139 = arith.constant 0 : index
    %c1_140 = arith.constant 1 : index
    %c0_141 = arith.constant 0 : index
    %c0_142 = arith.constant 0 : index
    %90 = vector.load %arg6[%c0_138, %c0_139, %c1_140, %c0_141, %c0_142] : memref<1x8x2x4x128xf32, #tpu.memory_space<vmem>>, vector<1x1x1x4x128xf32>
    %91 = vector.shape_cast %90 : vector<1x1x1x4x128xf32> to vector<4x128xf32>
    %92 = vector.shape_cast %86 : vector<4x128xf32> to vector<1x1x1x4x128xf32>
    tpu.vector_store %arg6[%c0_138, %c0_139, %c1_140, %c0_141, %c0_142], %92 {strides = array<i32>} : memref<1x8x2x4x128xf32, #tpu.memory_space<vmem>>, vector<1x1x1x4x128xf32>,
    %cst_143 = arith.constant 0.000000e+00 : f32
    %93 = vector.broadcast %cst_143 : f32 to vector<4x128xf32>
    %94 = arith.maximumf %85, %93 : vector<4x128xf32>
    %95 = arith.truncf %94 : vector<4x128xf32> to vector<4x128xbf16>
    %cst_144 = arith.constant 0.000000e+00 : f32
    %96 = vector.broadcast %cst_144 : f32 to vector<4x128xf32>
    %97 = arith.maximumf %86, %96 : vector<4x128xf32>
    %98 = arith.truncf %97 : vector<4x128xf32> to vector<4x128xbf16>
    %c0_145 = arith.constant 0 : index
    %c1_146 = arith.constant 1 : index
    %c0_147 = arith.constant 0 : index
    %c128 = arith.constant 128 : index
    %99 = vector.load %arg10[%c0_145, %c1_146, %c0_147, %c128] : memref<2x5x4x384xbf16, #tpu.memory_space<vmem>>, vector<1x1x4x128xbf16>
    %100 = vector.shape_cast %99 : vector<1x1x4x128xbf16> to vector<4x128xbf16>
    %101 = vector.shape_cast %95 : vector<4x128xbf16> to vector<1x1x4x128xbf16>
    tpu.vector_store %arg10[%c0_145, %c1_146, %c0_147, %c128], %101 {strides = array<i32>} : memref<2x5x4x384xbf16, #tpu.memory_space<vmem>>, vector<1x1x4x128xbf16>,
    %c0_148 = arith.constant 0 : index
    %c1_149 = arith.constant 1 : index
    %c0_150 = arith.constant 0 : index
    %c256 = arith.constant 256 : index
    %102 = vector.load %arg10[%c0_148, %c1_149, %c0_150, %c256] : memref<2x5x4x384xbf16, #tpu.memory_space<vmem>>, vector<1x1x4x128xbf16>
    %103 = vector.shape_cast %102 : vector<1x1x4x128xbf16> to vector<4x128xbf16>
    %104 = vector.shape_cast %98 : vector<4x128xbf16> to vector<1x1x4x128xbf16>
    tpu.vector_store %arg10[%c0_148, %c1_149, %c0_150, %c256], %104 {strides = array<i32>} : memref<2x5x4x384xbf16, #tpu.memory_space<vmem>>, vector<1x1x4x128xbf16>,
    %105 = vector.extract_strided_slice %98 {offsets = [0, 0], sizes = [3, 128], strides = [1, 1]} : vector<4x128xbf16> to vector<3x128xbf16>
    %c0_151 = arith.constant 0 : index
    %c1_152 = arith.constant 1 : index
    %c1_153 = arith.constant 1 : index
    %c0_154 = arith.constant 0 : index
    %106 = vector.load %arg10[%c0_151, %c1_152, %c1_153, %c0_154] : memref<2x5x4x384xbf16, #tpu.memory_space<vmem>>, vector<1x1x3x128xbf16>
    %107 = vector.shape_cast %106 : vector<1x1x3x128xbf16> to vector<3x128xbf16>
    %108 = vector.shape_cast %105 : vector<3x128xbf16> to vector<1x1x3x128xbf16>
    tpu.vector_store %arg10[%c0_151, %c1_152, %c1_153, %c0_154], %108 {strides = array<i32>} : memref<2x5x4x384xbf16, #tpu.memory_space<vmem>>, vector<1x1x3x128xbf16>,
    %c8 = arith.constant 8 : index
    %c0_155 = arith.constant 0 : index
    %109 = vector.load %arg9[%c8, %c0_155] : memref<64x128xf32, #tpu.memory_space<vmem>>, vector<4x128xf32>
    %c12 = arith.constant 12 : index
    %c0_156 = arith.constant 0 : index
    %110 = vector.load %arg9[%c12, %c0_156] : memref<64x128xf32, #tpu.memory_space<vmem>>, vector<4x128xf32>
    %c0_157 = arith.constant 0 : index
    %c1_158 = arith.constant 1 : index
    %c0_159 = arith.constant 0 : index
    %c0_160 = arith.constant 0 : index
    %c0_161 = arith.constant 0 : index
    %111 = vector.load %arg6[%c0_157, %c1_158, %c0_159, %c0_160, %c0_161] : memref<1x8x2x4x128xf32, #tpu.memory_space<vmem>>, vector<1x1x1x4x128xf32>
    %112 = vector.shape_cast %111 : vector<1x1x1x4x128xf32> to vector<4x128xf32>
    %113 = vector.shape_cast %109 : vector<4x128xf32> to vector<1x1x1x4x128xf32>
    tpu.vector_store %arg6[%c0_157, %c1_158, %c0_159, %c0_160, %c0_161], %113 {strides = array<i32>} : memref<1x8x2x4x128xf32, #tpu.memory_space<vmem>>, vector<1x1x1x4x128xf32>,
    %c0_162 = arith.constant 0 : index
    %c1_163 = arith.constant 1 : index
    %c1_164 = arith.constant 1 : index
    %c0_165 = arith.constant 0 : index
    %c0_166 = arith.constant 0 : index
    %114 = vector.load %arg6[%c0_162, %c1_163, %c1_164, %c0_165, %c0_166] : memref<1x8x2x4x128xf32, #tpu.memory_space<vmem>>, vector<1x1x1x4x128xf32>
    %115 = vector.shape_cast %114 : vector<1x1x1x4x128xf32> to vector<4x128xf32>
    %116 = vector.shape_cast %110 : vector<4x128xf32> to vector<1x1x1x4x128xf32>
    tpu.vector_store %arg6[%c0_162, %c1_163, %c1_164, %c0_165, %c0_166], %116 {strides = array<i32>} : memref<1x8x2x4x128xf32, #tpu.memory_space<vmem>>, vector<1x1x1x4x128xf32>,
    %cst_167 = arith.constant 0.000000e+00 : f32
    %117 = vector.broadcast %cst_167 : f32 to vector<4x128xf32>
    %118 = arith.maximumf %109, %117 : vector<4x128xf32>
    %119 = arith.truncf %118 : vector<4x128xf32> to vector<4x128xbf16>
    %cst_168 = arith.constant 0.000000e+00 : f32
    %120 = vector.broadcast %cst_168 : f32 to vector<4x128xf32>
    %121 = arith.maximumf %110, %120 : vector<4x128xf32>
    %122 = arith.truncf %121 : vector<4x128xf32> to vector<4x128xbf16>
    %c1_169 = arith.constant 1 : index
    %c1_170 = arith.constant 1 : index
    %c0_171 = arith.constant 0 : index
    %c128_172 = arith.constant 128 : index
    %123 = vector.load %arg10[%c1_169, %c1_170, %c0_171, %c128_172] : memref<2x5x4x384xbf16, #tpu.memory_space<vmem>>, vector<1x1x4x128xbf16>
    %124 = vector.shape_cast %123 : vector<1x1x4x128xbf16> to vector<4x128xbf16>
    %125 = vector.shape_cast %119 : vector<4x128xbf16> to vector<1x1x4x128xbf16>
    tpu.vector_store %arg10[%c1_169, %c1_170, %c0_171, %c128_172], %125 {strides = array<i32>} : memref<2x5x4x384xbf16, #tpu.memory_space<vmem>>, vector<1x1x4x128xbf16>,
    %c1_173 = arith.constant 1 : index
    %c1_174 = arith.constant 1 : index
    %c0_175 = arith.constant 0 : index
    %c256_176 = arith.constant 256 : index
    %126 = vector.load %arg10[%c1_173, %c1_174, %c0_175, %c256_176] : memref<2x5x4x384xbf16, #tpu.memory_space<vmem>>, vector<1x1x4x128xbf16>
    %127 = vector.shape_cast %126 : vector<1x1x4x128xbf16> to vector<4x128xbf16>
    %128 = vector.shape_cast %122 : vector<4x128xbf16> to vector<1x1x4x128xbf16>
    tpu.vector_store %arg10[%c1_173, %c1_174, %c0_175, %c256_176], %128 {strides = array<i32>} : memref<2x5x4x384xbf16, #tpu.memory_space<vmem>>, vector<1x1x4x128xbf16>,
    %129 = vector.extract_strided_slice %122 {offsets = [0, 0], sizes = [3, 128], strides = [1, 1]} : vector<4x128xbf16> to vector<3x128xbf16>
    %c1_177 = arith.constant 1 : index
    %c1_178 = arith.constant 1 : index
    %c1_179 = arith.constant 1 : index
    %c0_180 = arith.constant 0 : index
    %130 = vector.load %arg10[%c1_177, %c1_178, %c1_179, %c0_180] : memref<2x5x4x384xbf16, #tpu.memory_space<vmem>>, vector<1x1x3x128xbf16>
    %131 = vector.shape_cast %130 : vector<1x1x3x128xbf16> to vector<3x128xbf16>
    %132 = vector.shape_cast %129 : vector<3x128xbf16> to vector<1x1x3x128xbf16>
    tpu.vector_store %arg10[%c1_177, %c1_178, %c1_179, %c0_180], %132 {strides = array<i32>} : memref<2x5x4x384xbf16, #tpu.memory_space<vmem>>, vector<1x1x3x128xbf16>,
    %c16_181 = arith.constant 16 : index
    %c0_182 = arith.constant 0 : index
    %133 = vector.load %arg9[%c16_181, %c0_182] : memref<64x128xf32, #tpu.memory_space<vmem>>, vector<4x128xf32>
    %c20 = arith.constant 20 : index
    %c0_183 = arith.constant 0 : index
    %134 = vector.load %arg9[%c20, %c0_183] : memref<64x128xf32, #tpu.memory_space<vmem>>, vector<4x128xf32>
    %c0_184 = arith.constant 0 : index
    %c2_185 = arith.constant 2 : index
    %c0_186 = arith.constant 0 : index
    %c0_187 = arith.constant 0 : index
    %c0_188 = arith.constant 0 : index
    %135 = vector.load %arg6[%c0_184, %c2_185, %c0_186, %c0_187, %c0_188] : memref<1x8x2x4x128xf32, #tpu.memory_space<vmem>>, vector<1x1x1x4x128xf32>
    %136 = vector.shape_cast %135 : vector<1x1x1x4x128xf32> to vector<4x128xf32>
    %137 = vector.shape_cast %133 : vector<4x128xf32> to vector<1x1x1x4x128xf32>
    tpu.vector_store %arg6[%c0_184, %c2_185, %c0_186, %c0_187, %c0_188], %137 {strides = array<i32>} : memref<1x8x2x4x128xf32, #tpu.memory_space<vmem>>, vector<1x1x1x4x128xf32>,
    %c0_189 = arith.constant 0 : index
    %c2_190 = arith.constant 2 : index
    %c1_191 = arith.constant 1 : index
    %c0_192 = arith.constant 0 : index
    %c0_193 = arith.constant 0 : index
    %138 = vector.load %arg6[%c0_189, %c2_190, %c1_191, %c0_192, %c0_193] : memref<1x8x2x4x128xf32, #tpu.memory_space<vmem>>, vector<1x1x1x4x128xf32>
    %139 = vector.shape_cast %138 : vector<1x1x1x4x128xf32> to vector<4x128xf32>
    %140 = vector.shape_cast %134 : vector<4x128xf32> to vector<1x1x1x4x128xf32>
    tpu.vector_store %arg6[%c0_189, %c2_190, %c1_191, %c0_192, %c0_193], %140 {strides = array<i32>} : memref<1x8x2x4x128xf32, #tpu.memory_space<vmem>>, vector<1x1x1x4x128xf32>,
    %cst_194 = arith.constant 0.000000e+00 : f32
    %141 = vector.broadcast %cst_194 : f32 to vector<4x128xf32>
    %142 = arith.maximumf %133, %141 : vector<4x128xf32>
    %143 = arith.truncf %142 : vector<4x128xf32> to vector<4x128xbf16>
    %cst_195 = arith.constant 0.000000e+00 : f32
    %144 = vector.broadcast %cst_195 : f32 to vector<4x128xf32>
    %145 = arith.maximumf %134, %144 : vector<4x128xf32>
    %146 = arith.truncf %145 : vector<4x128xf32> to vector<4x128xbf16>
    %c0_196 = arith.constant 0 : index
    %c2_197 = arith.constant 2 : index
    %c0_198 = arith.constant 0 : index
    %c128_199 = arith.constant 128 : index
    %147 = vector.load %arg10[%c0_196, %c2_197, %c0_198, %c128_199] : memref<2x5x4x384xbf16, #tpu.memory_space<vmem>>, vector<1x1x4x128xbf16>
    %148 = vector.shape_cast %147 : vector<1x1x4x128xbf16> to vector<4x128xbf16>
    %149 = vector.shape_cast %143 : vector<4x128xbf16> to vector<1x1x4x128xbf16>
    tpu.vector_store %arg10[%c0_196, %c2_197, %c0_198, %c128_199], %149 {strides = array<i32>} : memref<2x5x4x384xbf16, #tpu.memory_space<vmem>>, vector<1x1x4x128xbf16>,
    %c0_200 = arith.constant 0 : index
    %c2_201 = arith.constant 2 : index
    %c0_202 = arith.constant 0 : index
    %c256_203 = arith.constant 256 : index
    %150 = vector.load %arg10[%c0_200, %c2_201, %c0_202, %c256_203] : memref<2x5x4x384xbf16, #tpu.memory_space<vmem>>, vector<1x1x4x128xbf16>
    %151 = vector.shape_cast %150 : vector<1x1x4x128xbf16> to vector<4x128xbf16>
    %152 = vector.shape_cast %146 : vector<4x128xbf16> to vector<1x1x4x128xbf16>
    tpu.vector_store %arg10[%c0_200, %c2_201, %c0_202, %c256_203], %152 {strides = array<i32>} : memref<2x5x4x384xbf16, #tpu.memory_space<vmem>>, vector<1x1x4x128xbf16>,
    %153 = vector.extract_strided_slice %146 {offsets = [0, 0], sizes = [3, 128], strides = [1, 1]} : vector<4x128xbf16> to vector<3x128xbf16>
    %c0_204 = arith.constant 0 : index
    %c2_205 = arith.constant 2 : index
    %c1_206 = arith.constant 1 : index
    %c0_207 = arith.constant 0 : index
    %154 = vector.load %arg10[%c0_204, %c2_205, %c1_206, %c0_207] : memref<2x5x4x384xbf16, #tpu.memory_space<vmem>>, vector<1x1x3x128xbf16>
    %155 = vector.shape_cast %154 : vector<1x1x3x128xbf16> to vector<3x128xbf16>
    %156 = vector.shape_cast %153 : vector<3x128xbf16> to vector<1x1x3x128xbf16>
    tpu.vector_store %arg10[%c0_204, %c2_205, %c1_206, %c0_207], %156 {strides = array<i32>} : memref<2x5x4x384xbf16, #tpu.memory_space<vmem>>, vector<1x1x3x128xbf16>,
    %c24 = arith.constant 24 : index
    %c0_208 = arith.constant 0 : index
    %157 = vector.load %arg9[%c24, %c0_208] : memref<64x128xf32, #tpu.memory_space<vmem>>, vector<4x128xf32>
    %c28 = arith.constant 28 : index
    %c0_209 = arith.constant 0 : index
    %158 = vector.load %arg9[%c28, %c0_209] : memref<64x128xf32, #tpu.memory_space<vmem>>, vector<4x128xf32>
    %c0_210 = arith.constant 0 : index
    %c3 = arith.constant 3 : index
    %c0_211 = arith.constant 0 : index
    %c0_212 = arith.constant 0 : index
    %c0_213 = arith.constant 0 : index
    %159 = vector.load %arg6[%c0_210, %c3, %c0_211, %c0_212, %c0_213] : memref<1x8x2x4x128xf32, #tpu.memory_space<vmem>>, vector<1x1x1x4x128xf32>
    %160 = vector.shape_cast %159 : vector<1x1x1x4x128xf32> to vector<4x128xf32>
    %161 = vector.shape_cast %157 : vector<4x128xf32> to vector<1x1x1x4x128xf32>
    tpu.vector_store %arg6[%c0_210, %c3, %c0_211, %c0_212, %c0_213], %161 {strides = array<i32>} : memref<1x8x2x4x128xf32, #tpu.memory_space<vmem>>, vector<1x1x1x4x128xf32>,
    %c0_214 = arith.constant 0 : index
    %c3_215 = arith.constant 3 : index
    %c1_216 = arith.constant 1 : index
    %c0_217 = arith.constant 0 : index
    %c0_218 = arith.constant 0 : index
    %162 = vector.load %arg6[%c0_214, %c3_215, %c1_216, %c0_217, %c0_218] : memref<1x8x2x4x128xf32, #tpu.memory_space<vmem>>, vector<1x1x1x4x128xf32>
    %163 = vector.shape_cast %162 : vector<1x1x1x4x128xf32> to vector<4x128xf32>
    %164 = vector.shape_cast %158 : vector<4x128xf32> to vector<1x1x1x4x128xf32>
    tpu.vector_store %arg6[%c0_214, %c3_215, %c1_216, %c0_217, %c0_218], %164 {strides = array<i32>} : memref<1x8x2x4x128xf32, #tpu.memory_space<vmem>>, vector<1x1x1x4x128xf32>,
    %cst_219 = arith.constant 0.000000e+00 : f32
    %165 = vector.broadcast %cst_219 : f32 to vector<4x128xf32>
    %166 = arith.maximumf %157, %165 : vector<4x128xf32>
    %167 = arith.truncf %166 : vector<4x128xf32> to vector<4x128xbf16>
    %cst_220 = arith.constant 0.000000e+00 : f32
    %168 = vector.broadcast %cst_220 : f32 to vector<4x128xf32>
    %169 = arith.maximumf %158, %168 : vector<4x128xf32>
    %170 = arith.truncf %169 : vector<4x128xf32> to vector<4x128xbf16>
    %c1_221 = arith.constant 1 : index
    %c2_222 = arith.constant 2 : index
    %c0_223 = arith.constant 0 : index
    %c128_224 = arith.constant 128 : index
    %171 = vector.load %arg10[%c1_221, %c2_222, %c0_223, %c128_224] : memref<2x5x4x384xbf16, #tpu.memory_space<vmem>>, vector<1x1x4x128xbf16>
    %172 = vector.shape_cast %171 : vector<1x1x4x128xbf16> to vector<4x128xbf16>
    %173 = vector.shape_cast %167 : vector<4x128xbf16> to vector<1x1x4x128xbf16>
    tpu.vector_store %arg10[%c1_221, %c2_222, %c0_223, %c128_224], %173 {strides = array<i32>} : memref<2x5x4x384xbf16, #tpu.memory_space<vmem>>, vector<1x1x4x128xbf16>,
    %c1_225 = arith.constant 1 : index
    %c2_226 = arith.constant 2 : index
    %c0_227 = arith.constant 0 : index
    %c256_228 = arith.constant 256 : index
    %174 = vector.load %arg10[%c1_225, %c2_226, %c0_227, %c256_228] : memref<2x5x4x384xbf16, #tpu.memory_space<vmem>>, vector<1x1x4x128xbf16>
    %175 = vector.shape_cast %174 : vector<1x1x4x128xbf16> to vector<4x128xbf16>
    %176 = vector.shape_cast %170 : vector<4x128xbf16> to vector<1x1x4x128xbf16>
    tpu.vector_store %arg10[%c1_225, %c2_226, %c0_227, %c256_228], %176 {strides = array<i32>} : memref<2x5x4x384xbf16, #tpu.memory_space<vmem>>, vector<1x1x4x128xbf16>,
    %177 = vector.extract_strided_slice %170 {offsets = [0, 0], sizes = [3, 128], strides = [1, 1]} : vector<4x128xbf16> to vector<3x128xbf16>
    %c1_229 = arith.constant 1 : index
    %c2_230 = arith.constant 2 : index
    %c1_231 = arith.constant 1 : index
    %c0_232 = arith.constant 0 : index
    %178 = vector.load %arg10[%c1_229, %c2_230, %c1_231, %c0_232] : memref<2x5x4x384xbf16, #tpu.memory_space<vmem>>, vector<1x1x3x128xbf16>
    %179 = vector.shape_cast %178 : vector<1x1x3x128xbf16> to vector<3x128xbf16>
    %180 = vector.shape_cast %177 : vector<3x128xbf16> to vector<1x1x3x128xbf16>
    tpu.vector_store %arg10[%c1_229, %c2_230, %c1_231, %c0_232], %180 {strides = array<i32>} : memref<2x5x4x384xbf16, #tpu.memory_space<vmem>>, vector<1x1x3x128xbf16>,
    %c32 = arith.constant 32 : index
    %c0_233 = arith.constant 0 : index
    %181 = vector.load %arg9[%c32, %c0_233] : memref<64x128xf32, #tpu.memory_space<vmem>>, vector<4x128xf32>
    %c36 = arith.constant 36 : index
    %c0_234 = arith.constant 0 : index
    %182 = vector.load %arg9[%c36, %c0_234] : memref<64x128xf32, #tpu.memory_space<vmem>>, vector<4x128xf32>
    %c0_235 = arith.constant 0 : index
    %c4_236 = arith.constant 4 : index
    %c0_237 = arith.constant 0 : index
    %c0_238 = arith.constant 0 : index
    %c0_239 = arith.constant 0 : index
    %183 = vector.load %arg6[%c0_235, %c4_236, %c0_237, %c0_238, %c0_239] : memref<1x8x2x4x128xf32, #tpu.memory_space<vmem>>, vector<1x1x1x4x128xf32>
    %184 = vector.shape_cast %183 : vector<1x1x1x4x128xf32> to vector<4x128xf32>
    %185 = vector.shape_cast %181 : vector<4x128xf32> to vector<1x1x1x4x128xf32>
    tpu.vector_store %arg6[%c0_235, %c4_236, %c0_237, %c0_238, %c0_239], %185 {strides = array<i32>} : memref<1x8x2x4x128xf32, #tpu.memory_space<vmem>>, vector<1x1x1x4x128xf32>,
    %c0_240 = arith.constant 0 : index
    %c4_241 = arith.constant 4 : index
    %c1_242 = arith.constant 1 : index
    %c0_243 = arith.constant 0 : index
    %c0_244 = arith.constant 0 : index
    %186 = vector.load %arg6[%c0_240, %c4_241, %c1_242, %c0_243, %c0_244] : memref<1x8x2x4x128xf32, #tpu.memory_space<vmem>>, vector<1x1x1x4x128xf32>
    %187 = vector.shape_cast %186 : vector<1x1x1x4x128xf32> to vector<4x128xf32>
    %188 = vector.shape_cast %182 : vector<4x128xf32> to vector<1x1x1x4x128xf32>
    tpu.vector_store %arg6[%c0_240, %c4_241, %c1_242, %c0_243, %c0_244], %188 {strides = array<i32>} : memref<1x8x2x4x128xf32, #tpu.memory_space<vmem>>, vector<1x1x1x4x128xf32>,
    %cst_245 = arith.constant 0.000000e+00 : f32
    %189 = vector.broadcast %cst_245 : f32 to vector<4x128xf32>
    %190 = arith.maximumf %181, %189 : vector<4x128xf32>
    %191 = arith.truncf %190 : vector<4x128xf32> to vector<4x128xbf16>
    %cst_246 = arith.constant 0.000000e+00 : f32
    %192 = vector.broadcast %cst_246 : f32 to vector<4x128xf32>
    %193 = arith.maximumf %182, %192 : vector<4x128xf32>
    %194 = arith.truncf %193 : vector<4x128xf32> to vector<4x128xbf16>
    %c0_247 = arith.constant 0 : index
    %c3_248 = arith.constant 3 : index
    %c0_249 = arith.constant 0 : index
    %c128_250 = arith.constant 128 : index
    %195 = vector.load %arg10[%c0_247, %c3_248, %c0_249, %c128_250] : memref<2x5x4x384xbf16, #tpu.memory_space<vmem>>, vector<1x1x4x128xbf16>
    %196 = vector.shape_cast %195 : vector<1x1x4x128xbf16> to vector<4x128xbf16>
    %197 = vector.shape_cast %191 : vector<4x128xbf16> to vector<1x1x4x128xbf16>
    tpu.vector_store %arg10[%c0_247, %c3_248, %c0_249, %c128_250], %197 {strides = array<i32>} : memref<2x5x4x384xbf16, #tpu.memory_space<vmem>>, vector<1x1x4x128xbf16>,
    %c0_251 = arith.constant 0 : index
    %c3_252 = arith.constant 3 : index
    %c0_253 = arith.constant 0 : index
    %c256_254 = arith.constant 256 : index
    %198 = vector.load %arg10[%c0_251, %c3_252, %c0_253, %c256_254] : memref<2x5x4x384xbf16, #tpu.memory_space<vmem>>, vector<1x1x4x128xbf16>
    %199 = vector.shape_cast %198 : vector<1x1x4x128xbf16> to vector<4x128xbf16>
    %200 = vector.shape_cast %194 : vector<4x128xbf16> to vector<1x1x4x128xbf16>
    tpu.vector_store %arg10[%c0_251, %c3_252, %c0_253, %c256_254], %200 {strides = array<i32>} : memref<2x5x4x384xbf16, #tpu.memory_space<vmem>>, vector<1x1x4x128xbf16>,
    %201 = vector.extract_strided_slice %194 {offsets = [0, 0], sizes = [3, 128], strides = [1, 1]} : vector<4x128xbf16> to vector<3x128xbf16>
    %c0_255 = arith.constant 0 : index
    %c3_256 = arith.constant 3 : index
    %c1_257 = arith.constant 1 : index
    %c0_258 = arith.constant 0 : index
    %202 = vector.load %arg10[%c0_255, %c3_256, %c1_257, %c0_258] : memref<2x5x4x384xbf16, #tpu.memory_space<vmem>>, vector<1x1x3x128xbf16>
    %203 = vector.shape_cast %202 : vector<1x1x3x128xbf16> to vector<3x128xbf16>
    %204 = vector.shape_cast %201 : vector<3x128xbf16> to vector<1x1x3x128xbf16>
    tpu.vector_store %arg10[%c0_255, %c3_256, %c1_257, %c0_258], %204 {strides = array<i32>} : memref<2x5x4x384xbf16, #tpu.memory_space<vmem>>, vector<1x1x3x128xbf16>,
    %c40 = arith.constant 40 : index
    %c0_259 = arith.constant 0 : index
    %205 = vector.load %arg9[%c40, %c0_259] : memref<64x128xf32, #tpu.memory_space<vmem>>, vector<4x128xf32>
    %c44 = arith.constant 44 : index
    %c0_260 = arith.constant 0 : index
    %206 = vector.load %arg9[%c44, %c0_260] : memref<64x128xf32, #tpu.memory_space<vmem>>, vector<4x128xf32>
    %c0_261 = arith.constant 0 : index
    %c5 = arith.constant 5 : index
    %c0_262 = arith.constant 0 : index
    %c0_263 = arith.constant 0 : index
    %c0_264 = arith.constant 0 : index
    %207 = vector.load %arg6[%c0_261, %c5, %c0_262, %c0_263, %c0_264] : memref<1x8x2x4x128xf32, #tpu.memory_space<vmem>>, vector<1x1x1x4x128xf32>
    %208 = vector.shape_cast %207 : vector<1x1x1x4x128xf32> to vector<4x128xf32>
    %209 = vector.shape_cast %205 : vector<4x128xf32> to vector<1x1x1x4x128xf32>
    tpu.vector_store %arg6[%c0_261, %c5, %c0_262, %c0_263, %c0_264], %209 {strides = array<i32>} : memref<1x8x2x4x128xf32, #tpu.memory_space<vmem>>, vector<1x1x1x4x128xf32>,
    %c0_265 = arith.constant 0 : index
    %c5_266 = arith.constant 5 : index
    %c1_267 = arith.constant 1 : index
    %c0_268 = arith.constant 0 : index
    %c0_269 = arith.constant 0 : index
    %210 = vector.load %arg6[%c0_265, %c5_266, %c1_267, %c0_268, %c0_269] : memref<1x8x2x4x128xf32, #tpu.memory_space<vmem>>, vector<1x1x1x4x128xf32>
    %211 = vector.shape_cast %210 : vector<1x1x1x4x128xf32> to vector<4x128xf32>
    %212 = vector.shape_cast %206 : vector<4x128xf32> to vector<1x1x1x4x128xf32>
    tpu.vector_store %arg6[%c0_265, %c5_266, %c1_267, %c0_268, %c0_269], %212 {strides = array<i32>} : memref<1x8x2x4x128xf32, #tpu.memory_space<vmem>>, vector<1x1x1x4x128xf32>,
    %cst_270 = arith.constant 0.000000e+00 : f32
    %213 = vector.broadcast %cst_270 : f32 to vector<4x128xf32>
    %214 = arith.maximumf %205, %213 : vector<4x128xf32>
    %215 = arith.truncf %214 : vector<4x128xf32> to vector<4x128xbf16>
    %cst_271 = arith.constant 0.000000e+00 : f32
    %216 = vector.broadcast %cst_271 : f32 to vector<4x128xf32>
    %217 = arith.maximumf %206, %216 : vector<4x128xf32>
    %218 = arith.truncf %217 : vector<4x128xf32> to vector<4x128xbf16>
    %c1_272 = arith.constant 1 : index
    %c3_273 = arith.constant 3 : index
    %c0_274 = arith.constant 0 : index
    %c128_275 = arith.constant 128 : index
    %219 = vector.load %arg10[%c1_272, %c3_273, %c0_274, %c128_275] : memref<2x5x4x384xbf16, #tpu.memory_space<vmem>>, vector<1x1x4x128xbf16>
    %220 = vector.shape_cast %219 : vector<1x1x4x128xbf16> to vector<4x128xbf16>
    %221 = vector.shape_cast %215 : vector<4x128xbf16> to vector<1x1x4x128xbf16>
    tpu.vector_store %arg10[%c1_272, %c3_273, %c0_274, %c128_275], %221 {strides = array<i32>} : memref<2x5x4x384xbf16, #tpu.memory_space<vmem>>, vector<1x1x4x128xbf16>,
    %c1_276 = arith.constant 1 : index
    %c3_277 = arith.constant 3 : index
    %c0_278 = arith.constant 0 : index
    %c256_279 = arith.constant 256 : index
    %222 = vector.load %arg10[%c1_276, %c3_277, %c0_278, %c256_279] : memref<2x5x4x384xbf16, #tpu.memory_space<vmem>>, vector<1x1x4x128xbf16>
    %223 = vector.shape_cast %222 : vector<1x1x4x128xbf16> to vector<4x128xbf16>
    %224 = vector.shape_cast %218 : vector<4x128xbf16> to vector<1x1x4x128xbf16>
    tpu.vector_store %arg10[%c1_276, %c3_277, %c0_278, %c256_279], %224 {strides = array<i32>} : memref<2x5x4x384xbf16, #tpu.memory_space<vmem>>, vector<1x1x4x128xbf16>,
    %225 = vector.extract_strided_slice %218 {offsets = [0, 0], sizes = [3, 128], strides = [1, 1]} : vector<4x128xbf16> to vector<3x128xbf16>
    %c1_280 = arith.constant 1 : index
    %c3_281 = arith.constant 3 : index
    %c1_282 = arith.constant 1 : index
    %c0_283 = arith.constant 0 : index
    %226 = vector.load %arg10[%c1_280, %c3_281, %c1_282, %c0_283] : memref<2x5x4x384xbf16, #tpu.memory_space<vmem>>, vector<1x1x3x128xbf16>
    %227 = vector.shape_cast %226 : vector<1x1x3x128xbf16> to vector<3x128xbf16>
    %228 = vector.shape_cast %225 : vector<3x128xbf16> to vector<1x1x3x128xbf16>
    tpu.vector_store %arg10[%c1_280, %c3_281, %c1_282, %c0_283], %228 {strides = array<i32>} : memref<2x5x4x384xbf16, #tpu.memory_space<vmem>>, vector<1x1x3x128xbf16>,
    %c48_284 = arith.constant 48 : index
    %c0_285 = arith.constant 0 : index
    %229 = vector.load %arg9[%c48_284, %c0_285] : memref<64x128xf32, #tpu.memory_space<vmem>>, vector<4x128xf32>
    %c52 = arith.constant 52 : index
    %c0_286 = arith.constant 0 : index
    %230 = vector.load %arg9[%c52, %c0_286] : memref<64x128xf32, #tpu.memory_space<vmem>>, vector<4x128xf32>
    %c0_287 = arith.constant 0 : index
    %c6 = arith.constant 6 : index
    %c0_288 = arith.constant 0 : index
    %c0_289 = arith.constant 0 : index
    %c0_290 = arith.constant 0 : index
    %231 = vector.load %arg6[%c0_287, %c6, %c0_288, %c0_289, %c0_290] : memref<1x8x2x4x128xf32, #tpu.memory_space<vmem>>, vector<1x1x1x4x128xf32>
    %232 = vector.shape_cast %231 : vector<1x1x1x4x128xf32> to vector<4x128xf32>
    %233 = vector.shape_cast %229 : vector<4x128xf32> to vector<1x1x1x4x128xf32>
    tpu.vector_store %arg6[%c0_287, %c6, %c0_288, %c0_289, %c0_290], %233 {strides = array<i32>} : memref<1x8x2x4x128xf32, #tpu.memory_space<vmem>>, vector<1x1x1x4x128xf32>,
    %c0_291 = arith.constant 0 : index
    %c6_292 = arith.constant 6 : index
    %c1_293 = arith.constant 1 : index
    %c0_294 = arith.constant 0 : index
    %c0_295 = arith.constant 0 : index
    %234 = vector.load %arg6[%c0_291, %c6_292, %c1_293, %c0_294, %c0_295] : memref<1x8x2x4x128xf32, #tpu.memory_space<vmem>>, vector<1x1x1x4x128xf32>
    %235 = vector.shape_cast %234 : vector<1x1x1x4x128xf32> to vector<4x128xf32>
    %236 = vector.shape_cast %230 : vector<4x128xf32> to vector<1x1x1x4x128xf32>
    tpu.vector_store %arg6[%c0_291, %c6_292, %c1_293, %c0_294, %c0_295], %236 {strides = array<i32>} : memref<1x8x2x4x128xf32, #tpu.memory_space<vmem>>, vector<1x1x1x4x128xf32>,
    %cst_296 = arith.constant 0.000000e+00 : f32
    %237 = vector.broadcast %cst_296 : f32 to vector<4x128xf32>
    %238 = arith.maximumf %229, %237 : vector<4x128xf32>
    %239 = arith.truncf %238 : vector<4x128xf32> to vector<4x128xbf16>
    %cst_297 = arith.constant 0.000000e+00 : f32
    %240 = vector.broadcast %cst_297 : f32 to vector<4x128xf32>
    %241 = arith.maximumf %230, %240 : vector<4x128xf32>
    %242 = arith.truncf %241 : vector<4x128xf32> to vector<4x128xbf16>
    %c0_298 = arith.constant 0 : index
    %c4_299 = arith.constant 4 : index
    %c0_300 = arith.constant 0 : index
    %c128_301 = arith.constant 128 : index
    %243 = vector.load %arg10[%c0_298, %c4_299, %c0_300, %c128_301] : memref<2x5x4x384xbf16, #tpu.memory_space<vmem>>, vector<1x1x4x128xbf16>
    %244 = vector.shape_cast %243 : vector<1x1x4x128xbf16> to vector<4x128xbf16>
    %245 = vector.shape_cast %239 : vector<4x128xbf16> to vector<1x1x4x128xbf16>
    tpu.vector_store %arg10[%c0_298, %c4_299, %c0_300, %c128_301], %245 {strides = array<i32>} : memref<2x5x4x384xbf16, #tpu.memory_space<vmem>>, vector<1x1x4x128xbf16>,
    %c0_302 = arith.constant 0 : index
    %c4_303 = arith.constant 4 : index
    %c0_304 = arith.constant 0 : index
    %c256_305 = arith.constant 256 : index
    %246 = vector.load %arg10[%c0_302, %c4_303, %c0_304, %c256_305] : memref<2x5x4x384xbf16, #tpu.memory_space<vmem>>, vector<1x1x4x128xbf16>
    %247 = vector.shape_cast %246 : vector<1x1x4x128xbf16> to vector<4x128xbf16>
    %248 = vector.shape_cast %242 : vector<4x128xbf16> to vector<1x1x4x128xbf16>
    tpu.vector_store %arg10[%c0_302, %c4_303, %c0_304, %c256_305], %248 {strides = array<i32>} : memref<2x5x4x384xbf16, #tpu.memory_space<vmem>>, vector<1x1x4x128xbf16>,
    %249 = vector.extract_strided_slice %242 {offsets = [0, 0], sizes = [3, 128], strides = [1, 1]} : vector<4x128xbf16> to vector<3x128xbf16>
    %c0_306 = arith.constant 0 : index
    %c4_307 = arith.constant 4 : index
    %c1_308 = arith.constant 1 : index
    %c0_309 = arith.constant 0 : index
    %250 = vector.load %arg10[%c0_306, %c4_307, %c1_308, %c0_309] : memref<2x5x4x384xbf16, #tpu.memory_space<vmem>>, vector<1x1x3x128xbf16>
    %251 = vector.shape_cast %250 : vector<1x1x3x128xbf16> to vector<3x128xbf16>
    %252 = vector.shape_cast %249 : vector<3x128xbf16> to vector<1x1x3x128xbf16>
    tpu.vector_store %arg10[%c0_306, %c4_307, %c1_308, %c0_309], %252 {strides = array<i32>} : memref<2x5x4x384xbf16, #tpu.memory_space<vmem>>, vector<1x1x3x128xbf16>,
    %c56 = arith.constant 56 : index
    %c0_310 = arith.constant 0 : index
    %253 = vector.load %arg9[%c56, %c0_310] : memref<64x128xf32, #tpu.memory_space<vmem>>, vector<4x128xf32>
    %c60 = arith.constant 60 : index
    %c0_311 = arith.constant 0 : index
    %254 = vector.load %arg9[%c60, %c0_311] : memref<64x128xf32, #tpu.memory_space<vmem>>, vector<4x128xf32>
    %c0_312 = arith.constant 0 : index
    %c7 = arith.constant 7 : index
    %c0_313 = arith.constant 0 : index
    %c0_314 = arith.constant 0 : index
    %c0_315 = arith.constant 0 : index
    %255 = vector.load %arg6[%c0_312, %c7, %c0_313, %c0_314, %c0_315] : memref<1x8x2x4x128xf32, #tpu.memory_space<vmem>>, vector<1x1x1x4x128xf32>
    %256 = vector.shape_cast %255 : vector<1x1x1x4x128xf32> to vector<4x128xf32>
    %257 = vector.shape_cast %253 : vector<4x128xf32> to vector<1x1x1x4x128xf32>
    tpu.vector_store %arg6[%c0_312, %c7, %c0_313, %c0_314, %c0_315], %257 {strides = array<i32>} : memref<1x8x2x4x128xf32, #tpu.memory_space<vmem>>, vector<1x1x1x4x128xf32>,
    %c0_316 = arith.constant 0 : index
    %c7_317 = arith.constant 7 : index
    %c1_318 = arith.constant 1 : index
    %c0_319 = arith.constant 0 : index
    %c0_320 = arith.constant 0 : index
    %258 = vector.load %arg6[%c0_316, %c7_317, %c1_318, %c0_319, %c0_320] : memref<1x8x2x4x128xf32, #tpu.memory_space<vmem>>, vector<1x1x1x4x128xf32>
    %259 = vector.shape_cast %258 : vector<1x1x1x4x128xf32> to vector<4x128xf32>
    %260 = vector.shape_cast %254 : vector<4x128xf32> to vector<1x1x1x4x128xf32>
    tpu.vector_store %arg6[%c0_316, %c7_317, %c1_318, %c0_319, %c0_320], %260 {strides = array<i32>} : memref<1x8x2x4x128xf32, #tpu.memory_space<vmem>>, vector<1x1x1x4x128xf32>,
    %cst_321 = arith.constant 0.000000e+00 : f32
    %261 = vector.broadcast %cst_321 : f32 to vector<4x128xf32>
    %262 = arith.maximumf %253, %261 : vector<4x128xf32>
    %263 = arith.truncf %262 : vector<4x128xf32> to vector<4x128xbf16>
    %cst_322 = arith.constant 0.000000e+00 : f32
    %264 = vector.broadcast %cst_322 : f32 to vector<4x128xf32>
    %265 = arith.maximumf %254, %264 : vector<4x128xf32>
    %266 = arith.truncf %265 : vector<4x128xf32> to vector<4x128xbf16>
    %c1_323 = arith.constant 1 : index
    %c4_324 = arith.constant 4 : index
    %c0_325 = arith.constant 0 : index
    %c128_326 = arith.constant 128 : index
    %267 = vector.load %arg10[%c1_323, %c4_324, %c0_325, %c128_326] : memref<2x5x4x384xbf16, #tpu.memory_space<vmem>>, vector<1x1x4x128xbf16>
    %268 = vector.shape_cast %267 : vector<1x1x4x128xbf16> to vector<4x128xbf16>
    %269 = vector.shape_cast %263 : vector<4x128xbf16> to vector<1x1x4x128xbf16>
    tpu.vector_store %arg10[%c1_323, %c4_324, %c0_325, %c128_326], %269 {strides = array<i32>} : memref<2x5x4x384xbf16, #tpu.memory_space<vmem>>, vector<1x1x4x128xbf16>,
    %c1_327 = arith.constant 1 : index
    %c4_328 = arith.constant 4 : index
    %c0_329 = arith.constant 0 : index
    %c256_330 = arith.constant 256 : index
    %270 = vector.load %arg10[%c1_327, %c4_328, %c0_329, %c256_330] : memref<2x5x4x384xbf16, #tpu.memory_space<vmem>>, vector<1x1x4x128xbf16>
    %271 = vector.shape_cast %270 : vector<1x1x4x128xbf16> to vector<4x128xbf16>
    %272 = vector.shape_cast %266 : vector<4x128xbf16> to vector<1x1x4x128xbf16>
    tpu.vector_store %arg10[%c1_327, %c4_328, %c0_329, %c256_330], %272 {strides = array<i32>} : memref<2x5x4x384xbf16, #tpu.memory_space<vmem>>, vector<1x1x4x128xbf16>,
    %273 = vector.extract_strided_slice %266 {offsets = [0, 0], sizes = [3, 128], strides = [1, 1]} : vector<4x128xbf16> to vector<3x128xbf16>
    %c1_331 = arith.constant 1 : index
    %c4_332 = arith.constant 4 : index
    %c1_333 = arith.constant 1 : index
    %c0_334 = arith.constant 0 : index
    %274 = vector.load %arg10[%c1_331, %c4_332, %c1_333, %c0_334] : memref<2x5x4x384xbf16, #tpu.memory_space<vmem>>, vector<1x1x3x128xbf16>
    %275 = vector.shape_cast %274 : vector<1x1x3x128xbf16> to vector<3x128xbf16>
    %276 = vector.shape_cast %273 : vector<3x128xbf16> to vector<1x1x3x128xbf16>
    tpu.vector_store %arg10[%c1_331, %c4_332, %c1_333, %c0_334], %276 {strides = array<i32>} : memref<2x5x4x384xbf16, #tpu.memory_space<vmem>>, vector<1x1x3x128xbf16>,
    %c0_335 = arith.constant 0 : index
    %c0_336 = arith.constant 0 : index
    %277 = vector.load %arg5[%c0_335, %c0_336] : memref<1x128xf32, #tpu.memory_space<vmem>>, vector<1x128xf32>
    %278 = vector.shape_cast %277 : vector<1x128xf32> to vector<1x128xf32>
    %279 = vector.broadcast %278 : vector<1x128xf32> to vector<16x128xf32>
    %c0_337 = arith.constant 0 : index
    %c0_338 = arith.constant 0 : index
    %280 = vector.load %arg11[%c0_337, %c0_338] : memref<16x128xf32, #tpu.memory_space<vmem>>, vector<16x128xf32>
    tpu.vector_store %arg11[%c0_337, %c0_338], %279 {strides = array<i32>} : memref<16x128xf32, #tpu.memory_space<vmem>>, vector<16x128xf32>,
    %c1_339 = arith.constant 1 : index
    %c0_340 = arith.constant 0 : index
    %c0_341 = arith.constant 0 : index
    %c0_342 = arith.constant 0 : index
    %281 = vector.load %arg10[%c1_339, %c0_340, %c0_341, %c0_342] : memref<2x5x4x384xbf16, #tpu.memory_space<vmem>>, vector<1x4x4x384xbf16>
    %282 = vector.shape_cast %281 : vector<1x4x4x384xbf16> to vector<4x4x384xbf16>
    %283 = vector.shape_cast %282 : vector<4x4x384xbf16> to vector<16x384xbf16>
    %c0_343 = arith.constant 0 : index
    %c0_344 = arith.constant 0 : index
    %284 = vector.load %arg11[%c0_343, %c0_344] : memref<16x128xf32, #tpu.memory_space<vmem>>, vector<16x128xf32>
    %c0_345 = arith.constant 0 : index
    %c0_346 = arith.constant 0 : index
    %c0_347 = arith.constant 0 : index
    %285 = vector.load %arg4[%c0_345, %c0_346, %c0_347] : memref<3x384x128xbf16, #tpu.memory_space<vmem>>, vector<1x384x128xbf16>
    %286 = vector.shape_cast %285 : vector<1x384x128xbf16> to vector<384x128xbf16>
    %cst_348 = arith.constant dense<0.000000e+00> : vector<16x128xf32>
    %287 = tpu.matmul %283, %286, %cst_348 {dimension_numbers = #tpu.dot_dimension_numbers<[1], [0], [0], [1], [0, 0, 1, 1], [], []>} : vector<16x384xbf16>, vector<384x128xbf16>, vector<16x128xf32> -> vector<16x128xf32>
    %288 = arith.addf %284, %287 : vector<16x128xf32>
    %c0_349 = arith.constant 0 : index
    %c0_350 = arith.constant 0 : index
    %289 = vector.load %arg11[%c0_349, %c0_350] : memref<16x128xf32, #tpu.memory_space<vmem>>, vector<16x128xf32>
    tpu.vector_store %arg11[%c0_349, %c0_350], %288 {strides = array<i32>} : memref<16x128xf32, #tpu.memory_space<vmem>>, vector<16x128xf32>,
    %c0_351 = arith.constant 0 : index
    %c1_352 = arith.constant 1 : index
    %c0_353 = arith.constant 0 : index
    %c0_354 = arith.constant 0 : index
    %290 = vector.load %arg10[%c0_351, %c1_352, %c0_353, %c0_354] : memref<2x5x4x384xbf16, #tpu.memory_space<vmem>>, vector<1x4x4x384xbf16>
    %291 = vector.shape_cast %290 : vector<1x4x4x384xbf16> to vector<4x4x384xbf16>
    %292 = vector.shape_cast %291 : vector<4x4x384xbf16> to vector<16x384xbf16>
    %c0_355 = arith.constant 0 : index
    %c0_356 = arith.constant 0 : index
    %293 = vector.load %arg11[%c0_355, %c0_356] : memref<16x128xf32, #tpu.memory_space<vmem>>, vector<16x128xf32>
    %c1_357 = arith.constant 1 : index
    %c0_358 = arith.constant 0 : index
    %c0_359 = arith.constant 0 : index
    %294 = vector.load %arg4[%c1_357, %c0_358, %c0_359] : memref<3x384x128xbf16, #tpu.memory_space<vmem>>, vector<1x384x128xbf16>
    %295 = vector.shape_cast %294 : vector<1x384x128xbf16> to vector<384x128xbf16>
    %cst_360 = arith.constant dense<0.000000e+00> : vector<16x128xf32>
    %296 = tpu.matmul %292, %295, %cst_360 {dimension_numbers = #tpu.dot_dimension_numbers<[1], [0], [0], [1], [0, 0, 1, 1], [], []>} : vector<16x384xbf16>, vector<384x128xbf16>, vector<16x128xf32> -> vector<16x128xf32>
    %297 = arith.addf %293, %296 : vector<16x128xf32>
    %c0_361 = arith.constant 0 : index
    %c0_362 = arith.constant 0 : index
    %298 = vector.load %arg11[%c0_361, %c0_362] : memref<16x128xf32, #tpu.memory_space<vmem>>, vector<16x128xf32>
    tpu.vector_store %arg11[%c0_361, %c0_362], %297 {strides = array<i32>} : memref<16x128xf32, #tpu.memory_space<vmem>>, vector<16x128xf32>,
    %c1_363 = arith.constant 1 : index
    %c1_364 = arith.constant 1 : index
    %c0_365 = arith.constant 0 : index
    %c0_366 = arith.constant 0 : index
    %299 = vector.load %arg10[%c1_363, %c1_364, %c0_365, %c0_366] : memref<2x5x4x384xbf16, #tpu.memory_space<vmem>>, vector<1x4x4x384xbf16>
    %300 = vector.shape_cast %299 : vector<1x4x4x384xbf16> to vector<4x4x384xbf16>
    %301 = vector.shape_cast %300 : vector<4x4x384xbf16> to vector<16x384xbf16>
    %c0_367 = arith.constant 0 : index
    %c0_368 = arith.constant 0 : index
    %302 = vector.load %arg11[%c0_367, %c0_368] : memref<16x128xf32, #tpu.memory_space<vmem>>, vector<16x128xf32>
    %c2_369 = arith.constant 2 : index
    %c0_370 = arith.constant 0 : index
    %c0_371 = arith.constant 0 : index
    %303 = vector.load %arg4[%c2_369, %c0_370, %c0_371] : memref<3x384x128xbf16, #tpu.memory_space<vmem>>, vector<1x384x128xbf16>
    %304 = vector.shape_cast %303 : vector<1x384x128xbf16> to vector<384x128xbf16>
    %cst_372 = arith.constant dense<0.000000e+00> : vector<16x128xf32>
    %305 = tpu.matmul %301, %304, %cst_372 {dimension_numbers = #tpu.dot_dimension_numbers<[1], [0], [0], [1], [0, 0, 1, 1], [], []>} : vector<16x384xbf16>, vector<384x128xbf16>, vector<16x128xf32> -> vector<16x128xf32>
    %306 = arith.addf %302, %305 : vector<16x128xf32>
    %c0_373 = arith.constant 0 : index
    %c0_374 = arith.constant 0 : index
    %307 = vector.load %arg11[%c0_373, %c0_374] : memref<16x128xf32, #tpu.memory_space<vmem>>, vector<16x128xf32>
    tpu.vector_store %arg11[%c0_373, %c0_374], %306 {strides = array<i32>} : memref<16x128xf32, #tpu.memory_space<vmem>>, vector<16x128xf32>,
    %c0_375 = arith.constant 0 : index
    %c0_376 = arith.constant 0 : index
    %308 = vector.load %arg11[%c0_375, %c0_376] : memref<16x128xf32, #tpu.memory_space<vmem>>, vector<16x128xf32>
    %309 = vector.shape_cast %308 : vector<16x128xf32> to vector<4x4x128xf32>
    %c0_377 = arith.constant 0 : index
    %c0_378 = arith.constant 0 : index
    %c0_379 = arith.constant 0 : index
    %c0_380 = arith.constant 0 : index
    %310 = vector.load %arg7[%c0_377, %c0_378, %c0_379, %c0_380] : memref<1x4x4x128xf32, #tpu.memory_space<vmem>>, vector<1x4x4x128xf32>
    %311 = vector.shape_cast %310 : vector<1x4x4x128xf32> to vector<4x4x128xf32>
    %312 = vector.shape_cast %309 : vector<4x4x128xf32> to vector<1x4x4x128xf32>
    tpu.vector_store %arg7[%c0_377, %c0_378, %c0_379, %c0_380], %312 {strides = array<i32>} : memref<1x4x4x128xf32, #tpu.memory_space<vmem>>, vector<1x4x4x128xf32>,
    return
  }
  func.func @transform_0(%arg0: i32) -> (i32, i32, i32, i32, i32) {
    %c0_i32 = arith.constant 0 : i32
    %c0_i32_0 = arith.constant 0 : i32
    %c0_i32_1 = arith.constant 0 : i32
    %c0_i32_2 = arith.constant 0 : i32
    %c0_i32_3 = arith.constant 0 : i32
    return %arg0, %c0_i32, %c0_i32_0, %c0_i32_1, %c0_i32_2 : i32, i32, i32, i32, i32
  }
  func.func @transform_1(%arg0: i32) -> (i32, i32, i32) {
    %c0_i32 = arith.constant 0 : i32
    %c0_i32_0 = arith.constant 0 : i32
    %c0_i32_1 = arith.constant 0 : i32
    %c0_i32_2 = arith.constant 0 : i32
    return %c0_i32, %c0_i32_0, %c0_i32_1 : i32, i32, i32
  }
  func.func @transform_2(%arg0: i32) -> (i32, i32) {
    %c0_i32 = arith.constant 0 : i32
    %c0_i32_0 = arith.constant 0 : i32
    %c0_i32_1 = arith.constant 0 : i32
    return %c0_i32, %c0_i32_0 : i32, i32
  }
  func.func @transform_3(%arg0: i32) -> (i32, i32, i32) {
    %c0_i32 = arith.constant 0 : i32
    %c0_i32_0 = arith.constant 0 : i32
    %c0_i32_1 = arith.constant 0 : i32
    %c0_i32_2 = arith.constant 0 : i32
    return %c0_i32, %c0_i32_0, %c0_i32_1 : i32, i32, i32
  }
  func.func @transform_4(%arg0: i32) -> (i32, i32) {
    %c0_i32 = arith.constant 0 : i32
    %c0_i32_0 = arith.constant 0 : i32
    %c0_i32_1 = arith.constant 0 : i32
    return %c0_i32, %c0_i32_0 : i32, i32
  }
  func.func @transform_5(%arg0: i32) -> (i32, i32, i32, i32, i32) {
    %c0_i32 = arith.constant 0 : i32
    %c0_i32_0 = arith.constant 0 : i32
    %c0_i32_1 = arith.constant 0 : i32
    %c0_i32_2 = arith.constant 0 : i32
    %c0_i32_3 = arith.constant 0 : i32
    return %arg0, %c0_i32, %c0_i32_0, %c0_i32_1, %c0_i32_2 : i32, i32, i32, i32, i32
  }
  func.func @transform_6(%arg0: i32) -> (i32, i32, i32, i32) {
    %c0_i32 = arith.constant 0 : i32
    %c0_i32_0 = arith.constant 0 : i32
    %c0_i32_1 = arith.constant 0 : i32
    %c0_i32_2 = arith.constant 0 : i32
    return %arg0, %c0_i32, %c0_i32_0, %c0_i32_1 : i32, i32, i32, i32
  }
}

</mosaic_0001>

<llo_original>
// kernel: lastlevel_p6p7_fused.1
$region0: #{lastlevel_p6p7_fused.1}
  #allocation0 [shape = 'u32[]', space=smem, size = 0x4, offset = 0x4, fixed_abs, tag = 'smem constant byte address 0x4 - core index']
  #allocation1 [shape = 'u32[72,128]{1,0:T(1,128)}', space=vmem, size = 0x9000, scoped, tag = 'internal scratch']
  #allocation2 [shape = 'bf16[2,9,2,4,48]{4,3,2,1,0:T(4,128)(2,1)}', space=vmem, size = 0x9000, scoped, tag = 'scratch operand']
  #allocation3 [shape = 'f32[64,128]{1,0:T(8,128)}', space=vmem, size = 0x8000, scoped, tag = 'scratch operand']
  #allocation4 [shape = 'bf16[2,5,4,384]{3,2,1,0:T(4,128)(2,1)}', space=vmem, size = 0x7800, scoped, tag = 'scratch operand']
  #allocation5 [shape = 'f32[16,128]{1,0:T(8,128)}', space=vmem, size = 0x2000, scoped, tag = 'scratch operand']
  %s0 = inlined_call_operand.vmem [shape: bf16[2,8,2,4,64], index: 0, kind: input, shape index: {}]
  %s1 = inlined_call_operand.vmem [shape: bf16[3,48,128], index: 1, kind: input, shape index: {}]
  %s2 = inlined_call_operand.vmem [shape: f32[1,128], index: 2, kind: input, shape index: {}]
  %s3 = inlined_call_operand.vmem [shape: bf16[3,384,128], index: 3, kind: input, shape index: {}]
  %s4 = inlined_call_operand.vmem [shape: f32[1,128], index: 4, kind: input, shape index: {}]
  %s5 = inlined_call_operand.vmem [shape: f32[2,8,2,4,128], index: 5, kind: output, shape index: {0}]
  %s6 = inlined_call_operand.vmem [shape: f32[2,4,4,128], index: 6, kind: output, shape index: {1}]
  %7 = xla_tuple %s5, %s6
  %s8 = sld [smem:[#allocation0]]
  $region61: #{lastlevel_p6p7_fused.1} parent=0
    _
  %s10 = ssub.s32 1, %s8
  %s11 = scalar_select 0, %s10, %s8
  loop: start=0, step=1, limit=4
  $region2: #{lastlevel_p6p7_fused.1} parent=0 // loop_pre_header
    _
  $region3: #{lastlevel_p6p7_fused.1} parent=0 // loop_header
    %s13 = sphi 0, %s17
    %p14 = scmp.ge.s32.totalorder %s13, 4
    %s23 = sphi 0, %s25
    %s26 = sphi 0, %s23
    %s27 = sphi 0, %s26
    %s43 = sphi 0, %s27
    %s47 = sphi 0, %s47
    %s49 = sphi 0, %s47
    %s50 = sphi 0, %s49
    %s64 = sphi 0, %s50
    %s68 = sphi 0, %s68
    %s70 = sphi 0, %s68
    %s71 = sphi 0, %s70
    %s85 = sphi 0, %s71
    %s89 = sphi 0, %s89
    %s91 = sphi 0, %s89
    %s92 = sphi 0, %s91
    %s106 = sphi 0, %s92
    %s110 = sphi 0, %s110
    %s112 = sphi 0, %s110
    %s113 = sphi 0, %s112
    %s127 = sphi 0, %s113
    %s133 = sphi 0, %s135
    %s136 = sphi 0, %s133
    %s137 = sphi 0, %s136
    %s153 = sphi 0, %s137
    %s159 = sphi 0, %s161
    %s162 = sphi 0, %s159
    %s163 = sphi 0, %s162
    %s179 = sphi 0, %s163
  $region4: #{lastlevel_p6p7_fused.1} parent=0 // loop_header_branch
    %16 = sbr.rel (%p14) target = $region8
  $region5: #{lastlevel_p6p7_fused.1} parent=0 // loop_body
    %s18 = ssub.s32 %s13, 1
    %s19 = ssub.s32 %s13, 2
    %s20 = sadd.s32 %s13, 1
    %s21 = ssub.s32 %s13, %s20
    %p22 = scmp.eq.s32.totalorder %s21, 0
    %s24 = sadd.s32 %s23, 1
    %s25 = scalar_select %p22, %s23, %s24
    %p28 = pneg %p22
    %p29 = scmp.eq.s32.totalorder %s13, 1
    %p30 = por %p28, %p29
    %p31 = scmp.ne.s32.totalorder %s23, %s26
    %p32 = scmp.eq.s32.totalorder %s13, 0
    %p33 = por %p31, %p32
    %p34 = scmp.ne.s32.totalorder %s23, %s26
    %p35 = scmp.eq.s32.totalorder %s18, 1
    %p36 = por %p34, %p35
    %p37 = scmp.ne.s32.totalorder %s26, %s27
    %p38 = scmp.eq.s32.totalorder %s18, 0
    %p39 = por %p37, %p38
    %p40 = scmp.ne.s32.totalorder %s26, %s27
    %p41 = scmp.eq.s32.totalorder %s19, 1
    %p42 = por %p40, %p41
    %p44 = scmp.ne.s32.totalorder %s27, %s43
    %p45 = scmp.eq.s32.totalorder %s19, 0
    %p46 = por %p44, %p45
    %s48 = sadd.s32 %s47, 1
    %p51 = scmp.eq.s32.totalorder %s13, 1
    %p52 = scmp.ne.s32.totalorder %s47, %s49
    %p53 = scmp.eq.s32.totalorder %s13, 0
    %p54 = por %p52, %p53
    %p55 = scmp.ne.s32.totalorder %s47, %s49
    %p56 = scmp.eq.s32.totalorder %s18, 1
    %p57 = por %p55, %p56
    %p58 = scmp.ne.s32.totalorder %s49, %s50
    %p59 = scmp.eq.s32.totalorder %s18, 0
    %p60 = por %p58, %p59
    %p61 = scmp.ne.s32.totalorder %s49, %s50
    %p62 = scmp.eq.s32.totalorder %s19, 1
    %p63 = por %p61, %p62
    %p65 = scmp.ne.s32.totalorder %s50, %s64
    %p66 = scmp.eq.s32.totalorder %s19, 0
    %p67 = por %p65, %p66
    %s69 = sadd.s32 %s68, 1
    %p72 = scmp.eq.s32.totalorder %s13, 1
    %p73 = scmp.ne.s32.totalorder %s68, %s70
    %p74 = scmp.eq.s32.totalorder %s13, 0
    %p75 = por %p73, %p74
    %p76 = scmp.ne.s32.totalorder %s68, %s70
    %p77 = scmp.eq.s32.totalorder %s18, 1
    %p78 = por %p76, %p77
    %p79 = scmp.ne.s32.totalorder %s70, %s71
    %p80 = scmp.eq.s32.totalorder %s18, 0
    %p81 = por %p79, %p80
    %p82 = scmp.ne.s32.totalorder %s70, %s71
    %p83 = scmp.eq.s32.totalorder %s19, 1
    %p84 = por %p82, %p83
    %p86 = scmp.ne.s32.totalorder %s71, %s85
    %p87 = scmp.eq.s32.totalorder %s19, 0
    %p88 = por %p86, %p87
    %s90 = sadd.s32 %s89, 1
    %p93 = scmp.eq.s32.totalorder %s13, 1
    %p94 = scmp.ne.s32.totalorder %s89, %s91
    %p95 = scmp.eq.s32.totalorder %s13, 0
    %p96 = por %p94, %p95
    %p97 = scmp.ne.s32.totalorder %s89, %s91
    %p98 = scmp.eq.s32.totalorder %s18, 1
    %p99 = por %p97, %p98
    %p100 = scmp.ne.s32.totalorder %s91, %s92
    %p101 = scmp.eq.s32.totalorder %s18, 0
    %p102 = por %p100, %p101
    %p103 = scmp.ne.s32.totalorder %s91, %s92
    %p104 = scmp.eq.s32.totalorder %s19, 1
    %p105 = por %p103, %p104
    %p107 = scmp.ne.s32.totalorder %s92, %s106
    %p108 = scmp.eq.s32.totalorder %s19, 0
    %p109 = por %p107, %p108
    %s111 = sadd.s32 %s110, 1
    %p114 = scmp.eq.s32.totalorder %s13, 1
    %p115 = scmp.ne.s32.totalorder %s110, %s112
    %p116 = scmp.eq.s32.totalorder %s13, 0
    %p117 = por %p115, %p116
    %p118 = scmp.ne.s32.totalorder %s110, %s112
    %p119 = scmp.eq.s32.totalorder %s18, 1
    %p120 = por %p118, %p119
    %p121 = scmp.ne.s32.totalorder %s112, %s113
    %p122 = scmp.eq.s32.totalorder %s18, 0
    %p123 = por %p121, %p122
    %p124 = scmp.ne.s32.totalorder %s112, %s113
    %p125 = scmp.eq.s32.totalorder %s19, 1
    %p126 = por %p124, %p125
    %p128 = scmp.ne.s32.totalorder %s113, %s127
    %p129 = scmp.eq.s32.totalorder %s19, 0
    %p130 = por %p128, %p129
    %s131 = ssub.s32 %s13, %s20
    %p132 = scmp.eq.s32.totalorder %s131, 0
    %s134 = sadd.s32 %s133, 1
    %s135 = scalar_select %p132, %s133, %s134
    %p138 = pneg %p132
    %p139 = scmp.eq.s32.totalorder %s13, 1
    %p140 = por %p138, %p139
    %p141 = scmp.ne.s32.totalorder %s133, %s136
    %p142 = scmp.eq.s32.totalorder %s13, 0
    %p143 = por %p141, %p142
    %p144 = scmp.ne.s32.totalorder %s133, %s136
    %p145 = scmp.eq.s32.totalorder %s18, 1
    %p146 = por %p144, %p145
    %p147 = scmp.ne.s32.totalorder %s136, %s137
    %p148 = scmp.eq.s32.totalorder %s18, 0
    %p149 = por %p147, %p148
    %p150 = scmp.ne.s32.totalorder %s136, %s137
    %p151 = scmp.eq.s32.totalorder %s19, 1
    %p152 = por %p150, %p151
    %p154 = scmp.ne.s32.totalorder %s137, %s153
    %p155 = scmp.eq.s32.totalorder %s19, 0
    %p156 = por %p154, %p155
    %s157 = ssub.s32 %s13, %s20
    %p158 = scmp.eq.s32.totalorder %s157, 0
    %s160 = sadd.s32 %s159, 1
    %s161 = scalar_select %p158, %s159, %s160
    %p164 = pneg %p158
    %p165 = scmp.eq.s32.totalorder %s13, 1
    %p166 = por %p164, %p165
    %p167 = scmp.ne.s32.totalorder %s159, %s162
    %p168 = scmp.eq.s32.totalorder %s13, 0
    %p169 = por %p167, %p168
    %p170 = scmp.ne.s32.totalorder %s159, %s162
    %p171 = scmp.eq.s32.totalorder %s18, 1
    %p172 = por %p170, %p171
    %p173 = scmp.ne.s32.totalorder %s162, %s163
    %p174 = scmp.eq.s32.totalorder %s18, 0
    %p175 = por %p173, %p174
    %p176 = scmp.ne.s32.totalorder %s162, %s163
    %p177 = scmp.eq.s32.totalorder %s19, 1
    %p178 = por %p176, %p177
    %p180 = scmp.ne.s32.totalorder %s163, %s179
    %p181 = scmp.eq.s32.totalorder %s19, 0
    %p182 = por %p180, %p181
    %p183 = scmp.le.s32.totalorder 1, %s13
    %p184 = scmp.lt.s32.totalorder %s13, 3
    %p185 = pnand %p183, %p184
    %p186 = pneg %p185
    // Predicated region
    $region9: #{lastlevel_p6p7_fused.1} parent=5 // pred_check
      _
    $region10: #{lastlevel_p6p7_fused.1} parent=5 // pred_check_branch
      %188 = sbr.rel (%p185) target = $region12
    $region11: #{lastlevel_p6p7_fused.1} parent=5 // pred_region
      %s189 = ssub.s32 %s13, 1
      // Predicated region
      $region13: #{lastlevel_p6p7_fused.1} parent=11 // pred_check
        %p190 = pneg %p60
      $region14: #{lastlevel_p6p7_fused.1} parent=11 // pred_check_branch
        %192 = sbr.rel (%p190) target = $region16
      $region15: #{lastlevel_p6p7_fused.1} parent=11 // pred_region
        _
      $region16: #{lastlevel_p6p7_fused.1} parent=11 // pred_fallthru
        _
      // Predicated region
      $region17: #{lastlevel_p6p7_fused.1} parent=11 // pred_check
        %p193 = pneg %p81
      $region18: #{lastlevel_p6p7_fused.1} parent=11 // pred_check_branch
        %195 = sbr.rel (%p193) target = $region20
      $region19: #{lastlevel_p6p7_fused.1} parent=11 // pred_region
        _
      $region20: #{lastlevel_p6p7_fused.1} parent=11 // pred_fallthru
        _
      // Predicated region
      $region21: #{lastlevel_p6p7_fused.1} parent=11 // pred_check
        %p196 = pneg %p102
      $region22: #{lastlevel_p6p7_fused.1} parent=11 // pred_check_branch
        %198 = sbr.rel (%p196) target = $region24
      $region23: #{lastlevel_p6p7_fused.1} parent=11 // pred_region
        _
      $region24: #{lastlevel_p6p7_fused.1} parent=11 // pred_fallthru
        _
      // Predicated region
      $region25: #{lastlevel_p6p7_fused.1} parent=11 // pred_check
        %p199 = pneg %p123
      $region26: #{lastlevel_p6p7_fused.1} parent=11 // pred_check_branch
        %201 = sbr.rel (%p199) target = $region28
      $region27: #{lastlevel_p6p7_fused.1} parent=11 // pred_region
        _
      $region28: #{lastlevel_p6p7_fused.1} parent=11 // pred_fallthru
        _
    $region12: #{lastlevel_p6p7_fused.1} parent=5 // pred_fallthru
      _
    %p202 = scmp.lt.s32.totalorder %s13, 2
    // Predicated region
    $region29: #{lastlevel_p6p7_fused.1} parent=5 // pred_check
      %p203 = pneg %p202
    $region30: #{lastlevel_p6p7_fused.1} parent=5 // pred_check_branch
      %205 = sbr.rel (%p203) target = $region32
    $region31: #{lastlevel_p6p7_fused.1} parent=5 // pred_region
      // Predicated region
      $region33: #{lastlevel_p6p7_fused.1} parent=31 // pred_check
        %p206 = pneg %p33
      $region34: #{lastlevel_p6p7_fused.1} parent=31 // pred_check_branch
        %208 = sbr.rel (%p206) target = $region36
      $region35: #{lastlevel_p6p7_fused.1} parent=31 // pred_region
        %p209 = scmp.lt.s32.totalorder %s13, 1
        %s210 = scalar_select %p209, %s13, 1
        %s211 = smul.addr %s210, 16
        %s212 = smul.addr %s211, 2
        %s213 = scalar_lea.vmem %s0, %s212
      $region36: #{lastlevel_p6p7_fused.1} parent=31 // pred_fallthru
        _
    $region32: #{lastlevel_p6p7_fused.1} parent=5 // pred_fallthru
      _
    %p214 = scmp.le.s32.totalorder 1, %s13
    %p215 = scmp.lt.s32.totalorder %s13, 3
    %p216 = pnand %p214, %p215
    %p217 = pneg %p216
    // Predicated region
    $region37: #{lastlevel_p6p7_fused.1} parent=5 // pred_check
      _
    $region38: #{lastlevel_p6p7_fused.1} parent=5 // pred_check_branch
      %219 = sbr.rel (%p216) target = $region40
    $region39: #{lastlevel_p6p7_fused.1} parent=5 // pred_region
      %s220 = ssub.s32 %s13, 1
      %p221 = scmp.lt.s32.totalorder %s18, 1
      %s222 = scalar_select %p221, %s18, 1
      %s223 = smul.addr %s222, 16
      %s224 = smul.addr %s223, 2
      %s225 = scalar_lea.vmem %s0, %s224
      %p226 = pneg %p39
      %p227 = pneg %p36
      %p228 = pneg %p60
      %p229 = pneg %p57
      %p230 = pneg %p81
      %p231 = pneg %p78
      %p232 = pneg %p102
      %p233 = pneg %p99
      %p234 = pneg %p123
      %p235 = pneg %p120
      %p236 = pneg %p149
      %p237 = pneg %p146
      %p238 = scmp.lt.s32.totalorder %s18, 1
      %s239 = scalar_select %p238, %s18, 1
      %s240 = smul.addr %s239, 16
      %s241 = smul.addr %s240, 4
      %s242 = scalar_lea.vmem %s5, %s241
      %p243 = pneg %p175
      %p244 = pneg %p172
      %p245 = scmp.lt.s32.totalorder %s18, 1
      %s246 = scalar_select %p245, %s18, 1
      %s247 = smul.addr %s246, 4
      %s248 = smul.addr %s247, 4
      %s249 = scalar_lea.vmem %s6, %s248
      %p250 = scmp.lt.s32.totalorder %s18, 1
      %s251 = scalar_select %p250, %s18, 1
      %s252 = smul.addr %s251, 16
      %s253 = smul.addr %s252, 2
      %s254 = scalar_lea.vmem %s0, %s253
      %p255 = scmp.lt.s32.totalorder %s18, 1
      %s256 = scalar_select %p255, %s18, 1
      %s257 = smul.addr %s256, 16
      %s258 = smul.addr %s257, 4
      %s259 = scalar_lea.vmem %s5, %s258
      %p260 = scmp.lt.s32.totalorder %s18, 1
      %s261 = scalar_select %p260, %s18, 1
      %s262 = smul.addr %s261, 4
      %s263 = smul.addr %s262, 4
      %s264 = scalar_lea.vmem %s6, %s263
      %vm266 = vcmask 122880
      %vm267 = vsmask.f32 256
      %vm268 = vmand %vm266, %vm267
      %v269 = vld [vmem:[#allocation2] sm:$0x1]
      %v270 = vsel %vm268, 0, %v269
      %271 = vst [vmem:[#allocation2] sm:$0x1] %v270
      %v272 = vld [vmem:[#allocation2 + $0x4] sm:$0x1]
      %v273 = vsel %vm268, 0, %v272
      %274 = vst [vmem:[#allocation2 + $0x4] sm:$0x1] %v273
      %v275 = vld [vmem:[#allocation2 + $0x8] sm:$0x1]
      %v276 = vsel %vm268, 0, %v275
      %277 = vst [vmem:[#allocation2 + $0x8] sm:$0x1] %v276
      %v278 = vld [vmem:[#allocation2 + $0xc] sm:$0x1]
      %v279 = vsel %vm268, 0, %v278
      %280 = vst [vmem:[#allocation2 + $0xc] sm:$0x1] %v279
      %v281 = vld [vmem:[#allocation2 + $0x10] sm:$0x1]
      %v282 = vsel %vm268, 0, %v281
      %283 = vst [vmem:[#allocation2 + $0x10] sm:$0x1] %v282
      %v284 = vld [vmem:[#allocation2 + $0x14] sm:$0x1]
      %v285 = vsel %vm268, 0, %v284
      %286 = vst [vmem:[#allocation2 + $0x14] sm:$0x1] %v285
      %v287 = vld [vmem:[#allocation2 + $0x18] sm:$0x1]
      %v288 = vsel %vm268, 0, %v287
      %289 = vst [vmem:[#allocation2 + $0x18] sm:$0x1] %v288
      %v290 = vld [vmem:[#allocation2 + $0x1c] sm:$0x1]
      %v291 = vsel %vm268, 0, %v290
      %292 = vst [vmem:[#allocation2 + $0x1c] sm:$0x1] %v291
      %v293 = vld [vmem:[#allocation2 + $0x20] sm:$0x1]
      %v294 = vsel %vm268, 0, %v293
      %295 = vst [vmem:[#allocation2 + $0x20] sm:$0x1] %v294
      %vm296 = vcmask 1040384
      %vm297 = vmand %vm296, %vm267
      %v298 = vld [vmem:[#allocation4] sm:$0x1]
      %v299 = vsel %vm297, 0, %v298
      %300 = vst [vmem:[#allocation4] sm:$0x1] %v299
      %v301 = vld [vmem:[#allocation4 + $0x6] sm:$0x1]
      %v302 = vsel %vm297, 0, %v301
      %303 = vst [vmem:[#allocation4 + $0x6] sm:$0x1] %v302
      %v304 = vld [vmem:[#allocation4 + $0xc] sm:$0x1]
      %v305 = vsel %vm297, 0, %v304
      %306 = vst [vmem:[#allocation4 + $0xc] sm:$0x1] %v305
      %v307 = vld [vmem:[#allocation4 + $0x12] sm:$0x1]
      %v308 = vsel %vm297, 0, %v307
      %309 = vst [vmem:[#allocation4 + $0x12] sm:$0x1] %v308
      %v310 = vld [vmem:[#allocation4 + $0x18] sm:$0x1]
      %v311 = vsel %vm297, 0, %v310
      %312 = vst [vmem:[#allocation4 + $0x18] sm:$0x1] %v311
      %s313 = scalar_lea.vmem [#allocation2], 36
      %v314 = vld [vmem:[%s313] sm:$0x1]
      %v315 = vsel %vm268, 0, %v314
      %316 = vst [vmem:[%s313] sm:$0x1] %v315
      %v317 = vld [vmem:[%s313 + $0x4] sm:$0x1]
      %v318 = vsel %vm268, 0, %v317
      %319 = vst [vmem:[%s313 + $0x4] sm:$0x1] %v318
      %v320 = vld [vmem:[%s313 + $0x8] sm:$0x1]
      %v321 = vsel %vm268, 0, %v320
      %322 = vst [vmem:[%s313 + $0x8] sm:$0x1] %v321
      %v323 = vld [vmem:[%s313 + $0xc] sm:$0x1]
      %v324 = vsel %vm268, 0, %v323
      %325 = vst [vmem:[%s313 + $0xc] sm:$0x1] %v324
      %v326 = vld [vmem:[%s313 + $0x10] sm:$0x1]
      %v327 = vsel %vm268, 0, %v326
      %328 = vst [vmem:[%s313 + $0x10] sm:$0x1] %v327
      %v329 = vld [vmem:[%s313 + $0x14] sm:$0x1]
      %v330 = vsel %vm268, 0, %v329
      %331 = vst [vmem:[%s313 + $0x14] sm:$0x1] %v330
      %v332 = vld [vmem:[%s313 + $0x18] sm:$0x1]
      %v333 = vsel %vm268, 0, %v332
      %334 = vst [vmem:[%s313 + $0x18] sm:$0x1] %v333
      %v335 = vld [vmem:[%s313 + $0x1c] sm:$0x1]
      %v336 = vsel %vm268, 0, %v335
      %337 = vst [vmem:[%s313 + $0x1c] sm:$0x1] %v336
      %v338 = vld [vmem:[%s313 + $0x20] sm:$0x1]
      %v339 = vsel %vm268, 0, %v338
      %340 = vst [vmem:[%s313 + $0x20] sm:$0x1] %v339
      %s341 = scalar_lea.vmem [#allocation4], 30
      %v342 = vld [vmem:[%s341] sm:$0x1]
      %v343 = vsel %vm297, 0, %v342
      %344 = vst [vmem:[%s341] sm:$0x1] %v343
      %v345 = vld [vmem:[%s341 + $0x6] sm:$0x1]
      %v346 = vsel %vm297, 0, %v345
      %347 = vst [vmem:[%s341 + $0x6] sm:$0x1] %v346
      %v348 = vld [vmem:[%s341 + $0xc] sm:$0x1]
      %v349 = vsel %vm297, 0, %v348
      %350 = vst [vmem:[%s341 + $0xc] sm:$0x1] %v349
      %v351 = vld [vmem:[%s341 + $0x12] sm:$0x1]
      %v352 = vsel %vm297, 0, %v351
      %353 = vst [vmem:[%s341 + $0x12] sm:$0x1] %v352
      %v354 = vld [vmem:[%s341 + $0x18] sm:$0x1]
      %v355 = vsel %vm297, 0, %v354
      %356 = vst [vmem:[%s341 + $0x18] sm:$0x1] %v355
      %vm357 = vcmask 386048
      %358 = vst.msk [vmem:[%s313] sm:$0x3] %vm357, 0
      %359 = vst.msk [vmem:[%s313 + $0x2] sm:$0x3] %vm357, 0
      %360 = vst [vmem:[%s341] sm:$0x3f] 0
      %v361 = vld [vmem:[%s254] sm:$0x3]
      %v362 = vld [vmem:[%s254 + $0x4] sm:$0x3]
      %v363 = vld [vmem:[%s254 + $0x8] sm:$0x3]
      %v364 = vld [vmem:[%s254 + $0xc] sm:$0x3]
      %v365 = vld [vmem:[%s254 + $0x10] sm:$0x3]
      %v366 = vld [vmem:[%s254 + $0x14] sm:$0x3]
      %v367 = vld [vmem:[%s254 + $0x18] sm:$0x3]
      %v368 = vld [vmem:[%s254 + $0x1c] sm:$0x3]
      %377 = vrot.lane.b32.xlu0 %v361, 112
      %v378 = vpop.permute.xlu0 %377
      %379 = vrot.lane.b32.xlu0 %v362, 112
      %v380 = vpop.permute.xlu0 %379
      %381 = vrot.lane.b32.xlu0 %v363, 112
      %v382 = vpop.permute.xlu0 %381
      %383 = vrot.lane.b32.xlu0 %v364, 112
      %v384 = vpop.permute.xlu0 %383
      %385 = vrot.lane.b32.xlu0 %v365, 112
      %v386 = vpop.permute.xlu0 %385
      %387 = vrot.lane.b32.xlu0 %v366, 112
      %v388 = vpop.permute.xlu0 %387
      %389 = vrot.lane.b32.xlu0 %v367, 112
      %v390 = vpop.permute.xlu0 %389
      %391 = vrot.lane.b32.xlu0 %v368, 112
      %v392 = vpop.permute.xlu0 %391
      %s401 = scalar_lea.vmem [#allocation2], 6
      %402 = vst.msk [vmem:[%s401] sm:$0x3] %vm357, %v378
      %403 = vst.msk [vmem:[%s401 + $0x4] sm:$0x3] %vm357, %v380
      %404 = vst.msk [vmem:[%s401 + $0x8] sm:$0x3] %vm357, %v382
      %405 = vst.msk [vmem:[%s401 + $0xc] sm:$0x3] %vm357, %v384
      %406 = vst.msk [vmem:[%s401 + $0x10] sm:$0x3] %vm357, %v386
      %407 = vst.msk [vmem:[%s401 + $0x14] sm:$0x3] %vm357, %v388
      %408 = vst.msk [vmem:[%s401 + $0x18] sm:$0x3] %vm357, %v390
      %409 = vst.msk [vmem:[%s401 + $0x1c] sm:$0x3] %vm357, %v392
      %v410 = vld [vmem:[%s254] sm:$0x3]
      %v411 = vld [vmem:[%s254 + $0x4] sm:$0x3]
      %v412 = vld [vmem:[%s254 + $0x8] sm:$0x3]
      %v413 = vld [vmem:[%s254 + $0xc] sm:$0x3]
      %v414 = vld [vmem:[%s254 + $0x10] sm:$0x3]
      %v415 = vld [vmem:[%s254 + $0x14] sm:$0x3]
      %v416 = vld [vmem:[%s254 + $0x18] sm:$0x3]
      %v417 = vld [vmem:[%s254 + $0x1c] sm:$0x3]
      %426 = vrot.lane.b32.xlu0 %v410, 16
      %v427 = vpop.permute.xlu0 %426
      %428 = vrot.lane.b32.xlu0 %v411, 16
      %v429 = vpop.permute.xlu0 %428
      %430 = vrot.lane.b32.xlu0 %v412, 16
      %v431 = vpop.permute.xlu0 %430
      %432 = vrot.lane.b32.xlu0 %v413, 16
      %v433 = vpop.permute.xlu0 %432
      %434 = vrot.lane.b32.xlu0 %v414, 16
      %v435 = vpop.permute.xlu0 %434
      %436 = vrot.lane.b32.xlu0 %v415, 16
      %v437 = vpop.permute.xlu0 %436
      %438 = vrot.lane.b32.xlu0 %v416, 16
      %v439 = vpop.permute.xlu0 %438
      %440 = vrot.lane.b32.xlu0 %v417, 16
      %v441 = vpop.permute.xlu0 %440
      %s450 = scalar_lea.vmem [#allocation2], 4
      %vm451 = vcmask 386176
      %452 = vst.msk [vmem:[%s450] sm:$0x3] %vm451, %v427
      %453 = vst.msk [vmem:[%s450 + $0x4] sm:$0x3] %vm451, %v429
      %454 = vst.msk [vmem:[%s450 + $0x8] sm:$0x3] %vm451, %v431
      %455 = vst.msk [vmem:[%s450 + $0xc] sm:$0x3] %vm451, %v433
      %456 = vst.msk [vmem:[%s450 + $0x10] sm:$0x3] %vm451, %v435
      %457 = vst.msk [vmem:[%s450 + $0x14] sm:$0x3] %vm451, %v437
      %458 = vst.msk [vmem:[%s450 + $0x18] sm:$0x3] %vm451, %v439
      %459 = vst.msk [vmem:[%s450 + $0x1c] sm:$0x3] %vm451, %v441
      %v460 = vld [vmem:[%s254] sm:$0x3]
      %v461 = vld [vmem:[%s254 + $0x4] sm:$0x3]
      %v462 = vld [vmem:[%s254 + $0x8] sm:$0x3]
      %v463 = vld [vmem:[%s254 + $0xc] sm:$0x3]
      %v464 = vld [vmem:[%s254 + $0x10] sm:$0x3]
      %v465 = vld [vmem:[%s254 + $0x14] sm:$0x3]
      %v466 = vld [vmem:[%s254 + $0x18] sm:$0x3]
      %v467 = vld [vmem:[%s254 + $0x1c] sm:$0x3]
      %v469 = vshrl.u32 %v460, 16
      %v471 = vrot.slane %v469, 7
      %v472 = vshll.u32 %v460, 16
      %v474 = vor.u32 %v471, %v472
      %v476 = vshrl.u32 %v461, 16
      %v478 = vrot.slane %v476, 7
      %v479 = vshll.u32 %v461, 16
      %v481 = vor.u32 %v478, %v479
      %v483 = vshrl.u32 %v462, 16
      %v485 = vrot.slane %v483, 7
      %v486 = vshll.u32 %v462, 16
      %v488 = vor.u32 %v485, %v486
      %v490 = vshrl.u32 %v463, 16
      %v492 = vrot.slane %v490, 7
      %v493 = vshll.u32 %v463, 16
      %v495 = vor.u32 %v492, %v493
      %v497 = vshrl.u32 %v464, 16
      %v499 = vrot.slane %v497, 7
      %v500 = vshll.u32 %v464, 16
      %v502 = vor.u32 %v499, %v500
      %v504 = vshrl.u32 %v465, 16
      %v506 = vrot.slane %v504, 7
      %v507 = vshll.u32 %v465, 16
      %v509 = vor.u32 %v506, %v507
      %v511 = vshrl.u32 %v466, 16
      %v513 = vrot.slane %v511, 7
      %v514 = vshll.u32 %v466, 16
      %v516 = vor.u32 %v513, %v514
      %v518 = vshrl.u32 %v467, 16
      %v520 = vrot.slane %v518, 7
      %v521 = vshll.u32 %v467, 16
      %v523 = vor.u32 %v520, %v521
      %524 = vrot.lane.b32.xlu0 %v474, 80
      %v525 = vpop.permute.xlu0 %524
      %526 = vrot.lane.b32.xlu0 %v481, 80
      %v527 = vpop.permute.xlu0 %526
      %528 = vrot.lane.b32.xlu0 %v488, 80
      %v529 = vpop.permute.xlu0 %528
      %530 = vrot.lane.b32.xlu0 %v495, 80
      %v531 = vpop.permute.xlu0 %530
      %532 = vrot.lane.b32.xlu0 %v502, 80
      %v533 = vpop.permute.xlu0 %532
      %534 = vrot.lane.b32.xlu0 %v509, 80
      %v535 = vpop.permute.xlu0 %534
      %536 = vrot.lane.b32.xlu0 %v516, 80
      %v537 = vpop.permute.xlu0 %536
      %538 = vrot.lane.b32.xlu0 %v523, 80
      %v539 = vpop.permute.xlu0 %538
      %vm548 = vcmask 123904
      %vm549 = vsmask.f32 7938
      %vm550 = vmand %vm548, %vm549
      %v551 = vld [vmem:[%s450] sm:$0x3]
      %v552 = vsel %vm550, %v525, %v551
      %553 = vst [vmem:[%s450] sm:$0x3] %v552
      %v554 = vld [vmem:[%s450 + $0x4] sm:$0x3]
      %v555 = vsel %vm550, %v527, %v554
      %556 = vst [vmem:[%s450 + $0x4] sm:$0x3] %v555
      %v557 = vld [vmem:[%s450 + $0x8] sm:$0x3]
      %v558 = vsel %vm550, %v529, %v557
      %559 = vst [vmem:[%s450 + $0x8] sm:$0x3] %v558
      %v560 = vld [vmem:[%s450 + $0xc] sm:$0x3]
      %v561 = vsel %vm550, %v531, %v560
      %562 = vst [vmem:[%s450 + $0xc] sm:$0x3] %v561
      %v563 = vld [vmem:[%s450 + $0x10] sm:$0x3]
      %v564 = vsel %vm550, %v533, %v563
      %565 = vst [vmem:[%s450 + $0x10] sm:$0x3] %v564
      %v566 = vld [vmem:[%s450 + $0x14] sm:$0x3]
      %v567 = vsel %vm550, %v535, %v566
      %568 = vst [vmem:[%s450 + $0x14] sm:$0x3] %v567
      %v569 = vld [vmem:[%s450 + $0x18] sm:$0x3]
      %v570 = vsel %vm550, %v537, %v569
      %571 = vst [vmem:[%s450 + $0x18] sm:$0x3] %v570
      %v572 = vld [vmem:[%s450 + $0x1c] sm:$0x3]
      %v573 = vsel %vm550, %v539, %v572
      %574 = vst [vmem:[%s450 + $0x1c] sm:$0x3] %v573
      %s575 = scalar_lea.vmem %s254, 2
      %v576 = vld [vmem:[%s575] sm:$0x3]
      %v577 = vld [vmem:[%s575 + $0x4] sm:$0x3]
      %v578 = vld [vmem:[%s575 + $0x8] sm:$0x3]
      %v579 = vld [vmem:[%s575 + $0xc] sm:$0x3]
      %v580 = vld [vmem:[%s575 + $0x10] sm:$0x3]
      %v581 = vld [vmem:[%s575 + $0x14] sm:$0x3]
      %v582 = vld [vmem:[%s575 + $0x18] sm:$0x3]
      %v583 = vld [vmem:[%s575 + $0x1c] sm:$0x3]
      %592 = vrot.lane.b32.xlu0 %v576, 112
      %v593 = vpop.permute.xlu0 %592
      %594 = vrot.lane.b32.xlu0 %v577, 112
      %v595 = vpop.permute.xlu0 %594
      %596 = vrot.lane.b32.xlu0 %v578, 112
      %v597 = vpop.permute.xlu0 %596
      %598 = vrot.lane.b32.xlu0 %v579, 112
      %v599 = vpop.permute.xlu0 %598
      %600 = vrot.lane.b32.xlu0 %v580, 112
      %v601 = vpop.permute.xlu0 %600
      %602 = vrot.lane.b32.xlu0 %v581, 112
      %v603 = vpop.permute.xlu0 %602
      %604 = vrot.lane.b32.xlu0 %v582, 112
      %v605 = vpop.permute.xlu0 %604
      %606 = vrot.lane.b32.xlu0 %v583, 112
      %v607 = vpop.permute.xlu0 %606
      %s616 = scalar_lea.vmem [#allocation2], 42
      %617 = vst.msk [vmem:[%s616] sm:$0x3] %vm357, %v593
      %618 = vst.msk [vmem:[%s616 + $0x4] sm:$0x3] %vm357, %v595
      %619 = vst.msk [vmem:[%s616 + $0x8] sm:$0x3] %vm357, %v597
      %620 = vst.msk [vmem:[%s616 + $0xc] sm:$0x3] %vm357, %v599
      %621 = vst.msk [vmem:[%s616 + $0x10] sm:$0x3] %vm357, %v601
      %622 = vst.msk [vmem:[%s616 + $0x14] sm:$0x3] %vm357, %v603
      %623 = vst.msk [vmem:[%s616 + $0x18] sm:$0x3] %vm357, %v605
      %624 = vst.msk [vmem:[%s616 + $0x1c] sm:$0x3] %vm357, %v607
      %v625 = vld [vmem:[%s575] sm:$0x3]
      %v626 = vld [vmem:[%s575 + $0x4] sm:$0x3]
      %v627 = vld [vmem:[%s575 + $0x8] sm:$0x3]
      %v628 = vld [vmem:[%s575 + $0xc] sm:$0x3]
      %v629 = vld [vmem:[%s575 + $0x10] sm:$0x3]
      %v630 = vld [vmem:[%s575 + $0x14] sm:$0x3]
      %v631 = vld [vmem:[%s575 + $0x18] sm:$0x3]
      %v632 = vld [vmem:[%s575 + $0x1c] sm:$0x3]
      %641 = vrot.lane.b32.xlu0 %v625, 16
      %v642 = vpop.permute.xlu0 %641
      %643 = vrot.lane.b32.xlu0 %v626, 16
      %v644 = vpop.permute.xlu0 %643
      %645 = vrot.lane.b32.xlu0 %v627, 16
      %v646 = vpop.permute.xlu0 %645
      %647 = vrot.lane.b32.xlu0 %v628, 16
      %v648 = vpop.permute.xlu0 %647
      %649 = vrot.lane.b32.xlu0 %v629, 16
      %v650 = vpop.permute.xlu0 %649
      %651 = vrot.lane.b32.xlu0 %v630, 16
      %v652 = vpop.permute.xlu0 %651
      %653 = vrot.lane.b32.xlu0 %v631, 16
      %v654 = vpop.permute.xlu0 %653
      %655 = vrot.lane.b32.xlu0 %v632, 16
      %v656 = vpop.permute.xlu0 %655
      %s665 = scalar_lea.vmem [#allocation2], 40
      %666 = vst.msk [vmem:[%s665] sm:$0x3] %vm451, %v642
      %667 = vst.msk [vmem:[%s665 + $0x4] sm:$0x3] %vm451, %v644
      %668 = vst.msk [vmem:[%s665 + $0x8] sm:$0x3] %vm451, %v646
      %669 = vst.msk [vmem:[%s665 + $0xc] sm:$0x3] %vm451, %v648
      %670 = vst.msk [vmem:[%s665 + $0x10] sm:$0x3] %vm451, %v650
      %671 = vst.msk [vmem:[%s665 + $0x14] sm:$0x3] %vm451, %v652
      %672 = vst.msk [vmem:[%s665 + $0x18] sm:$0x3] %vm451, %v654
      %673 = vst.msk [vmem:[%s665 + $0x1c] sm:$0x3] %vm451, %v656
      %v674 = vld [vmem:[%s575] sm:$0x3]
      %v675 = vld [vmem:[%s575 + $0x4] sm:$0x3]
      %v676 = vld [vmem:[%s575 + $0x8] sm:$0x3]
      %v677 = vld [vmem:[%s575 + $0xc] sm:$0x3]
      %v678 = vld [vmem:[%s575 + $0x10] sm:$0x3]
      %v679 = vld [vmem:[%s575 + $0x14] sm:$0x3]
      %v680 = vld [vmem:[%s575 + $0x18] sm:$0x3]
      %v681 = vld [vmem:[%s575 + $0x1c] sm:$0x3]
      %v683 = vshrl.u32 %v674, 16
      %v685 = vrot.slane %v683, 7
      %v686 = vshll.u32 %v674, 16
      %v688 = vor.u32 %v685, %v686
      %v690 = vshrl.u32 %v675, 16
      %v692 = vrot.slane %v690, 7
      %v693 = vshll.u32 %v675, 16
      %v695 = vor.u32 %v692, %v693
      %v697 = vshrl.u32 %v676, 16
      %v699 = vrot.slane %v697, 7
      %v700 = vshll.u32 %v676, 16
      %v702 = vor.u32 %v699, %v700
      %v704 = vshrl.u32 %v677, 16
      %v706 = vrot.slane %v704, 7
      %v707 = vshll.u32 %v677, 16
      %v709 = vor.u32 %v706, %v707
      %v711 = vshrl.u32 %v678, 16
      %v713 = vrot.slane %v711, 7
      %v714 = vshll.u32 %v678, 16
      %v716 = vor.u32 %v713, %v714
      %v718 = vshrl.u32 %v679, 16
      %v720 = vrot.slane %v718, 7
      %v721 = vshll.u32 %v679, 16
      %v723 = vor.u32 %v720, %v721
      %v725 = vshrl.u32 %v680, 16
      %v727 = vrot.slane %v725, 7
      %v728 = vshll.u32 %v680, 16
      %v730 = vor.u32 %v727, %v728
      %v732 = vshrl.u32 %v681, 16
      %v734 = vrot.slane %v732, 7
      %v735 = vshll.u32 %v681, 16
      %v737 = vor.u32 %v734, %v735
      %738 = vrot.lane.b32.xlu0 %v688, 80
      %v739 = vpop.permute.xlu0 %738
      %740 = vrot.lane.b32.xlu0 %v695, 80
      %v741 = vpop.permute.xlu0 %740
      %742 = vrot.lane.b32.xlu0 %v702, 80
      %v743 = vpop.permute.xlu0 %742
      %744 = vrot.lane.b32.xlu0 %v709, 80
      %v745 = vpop.permute.xlu0 %744
      %746 = vrot.lane.b32.xlu0 %v716, 80
      %v747 = vpop.permute.xlu0 %746
      %748 = vrot.lane.b32.xlu0 %v723, 80
      %v749 = vpop.permute.xlu0 %748
      %750 = vrot.lane.b32.xlu0 %v730, 80
      %v751 = vpop.permute.xlu0 %750
      %752 = vrot.lane.b32.xlu0 %v737, 80
      %v753 = vpop.permute.xlu0 %752
      %v762 = vld [vmem:[%s665] sm:$0x3]
      %v763 = vsel %vm550, %v739, %v762
      %764 = vst [vmem:[%s665] sm:$0x3] %v763
      %v765 = vld [vmem:[%s665 + $0x4] sm:$0x3]
      %v766 = vsel %vm550, %v741, %v765
      %767 = vst [vmem:[%s665 + $0x4] sm:$0x3] %v766
      %v768 = vld [vmem:[%s665 + $0x8] sm:$0x3]
      %v769 = vsel %vm550, %v743, %v768
      %770 = vst [vmem:[%s665 + $0x8] sm:$0x3] %v769
      %v771 = vld [vmem:[%s665 + $0xc] sm:$0x3]
      %v772 = vsel %vm550, %v745, %v771
      %773 = vst [vmem:[%s665 + $0xc] sm:$0x3] %v772
      %v774 = vld [vmem:[%s665 + $0x10] sm:$0x3]
      %v775 = vsel %vm550, %v747, %v774
      %776 = vst [vmem:[%s665 + $0x10] sm:$0x3] %v775
      %v777 = vld [vmem:[%s665 + $0x14] sm:$0x3]
      %v778 = vsel %vm550, %v749, %v777
      %779 = vst [vmem:[%s665 + $0x14] sm:$0x3] %v778
      %v780 = vld [vmem:[%s665 + $0x18] sm:$0x3]
      %v781 = vsel %vm550, %v751, %v780
      %782 = vst [vmem:[%s665 + $0x18] sm:$0x3] %v781
      %v783 = vld [vmem:[%s665 + $0x1c] sm:$0x3]
      %v784 = vsel %vm550, %v753, %v783
      %785 = vst [vmem:[%s665 + $0x1c] sm:$0x3] %v784
      %v786 = vld [vmem:[%s2] sm:$0x1]
      %v788 = vperm.slane %v786, 0
      %790 = vst [vmem:[#allocation3] sm:$0xff] %v788
      %791 = vst [vmem:[#allocation3 + $0x8] sm:$0xff] %v788
      %792 = vst [vmem:[#allocation3 + $0x10] sm:$0xff] %v788
      %793 = vst [vmem:[#allocation3 + $0x18] sm:$0xff] %v788
      %794 = vst [vmem:[#allocation3 + $0x20] sm:$0xff] %v788
      %795 = vst [vmem:[#allocation3 + $0x28] sm:$0xff] %v788
      %796 = vst [vmem:[#allocation3 + $0x30] sm:$0xff] %v788
      %797 = vst [vmem:[#allocation3 + $0x38] sm:$0xff] %v788
      %v798 = vld [vmem:[%s313] sm:$0x3]
      %v799 = vld [vmem:[%s313 + $0x2] sm:$0x3]
      %v800 = vld [vmem:[%s313 + $0x4] sm:$0x3]
      %v801 = vld [vmem:[%s313 + $0x6] sm:$0x3]
      %v802 = vld [vmem:[%s313 + $0x8] sm:$0x3]
      %v803 = vld [vmem:[%s313 + $0xa] sm:$0x3]
      %v804 = vld [vmem:[%s313 + $0xc] sm:$0x3]
      %v805 = vld [vmem:[%s313 + $0xe] sm:$0x3]
      %v806 = vld [vmem:[%s313 + $0x10] sm:$0x3]
      %v807 = vld [vmem:[%s313 + $0x12] sm:$0x3]
      %v808 = vld [vmem:[%s313 + $0x14] sm:$0x3]
      %v809 = vld [vmem:[%s313 + $0x16] sm:$0x3]
      %v810 = vld [vmem:[%s313 + $0x18] sm:$0x3]
      %v811 = vld [vmem:[%s313 + $0x1a] sm:$0x3]
      %v812 = vld [vmem:[%s313 + $0x1c] sm:$0x3]
      %v813 = vld [vmem:[%s313 + $0x1e] sm:$0x3]
      %v814 = vld [vmem:[#allocation3] sm:$0xff]
      %v815 = vld [vmem:[#allocation3 + $0x8] sm:$0xff]
      %v816 = vld [vmem:[#allocation3 + $0x10] sm:$0xff]
      %v817 = vld [vmem:[#allocation3 + $0x18] sm:$0xff]
      %v818 = vld [vmem:[#allocation3 + $0x20] sm:$0xff]
      %v819 = vld [vmem:[#allocation3 + $0x28] sm:$0xff]
      %v820 = vld [vmem:[#allocation3 + $0x30] sm:$0xff]
      %v821 = vld [vmem:[#allocation3 + $0x38] sm:$0xff]
      %v822 = vld [vmem:[%s1] sm:$0xf]
      %v823 = vld [vmem:[%s1 + $0x4] sm:$0xf]
      %v824 = vld [vmem:[%s1 + $0x8] sm:$0xf]
      %v825 = vld [vmem:[%s1 + $0xc] sm:$0xf]
      %v826 = vld [vmem:[%s1 + $0x10] sm:$0xf]
      %v827 = vld [vmem:[%s1 + $0x14] sm:$0xf]
      %829 = vst [vmem:[#allocation1] ss:$4 sm:$0xff] %v798
      %s831 = scalar_lea.vmem [#allocation1], 1
      %832 = vst [vmem:[%s831] ss:$4 sm:$0xff] %v799
      %s834 = scalar_lea.vmem [#allocation1], 2
      %835 = vst [vmem:[%s834] ss:$4 sm:$0xff] %v800
      %s837 = scalar_lea.vmem [#allocation1], 3
      %838 = vst [vmem:[%s837] ss:$4 sm:$0xff] %v801
      %s840 = scalar_lea.vmem [#allocation1], 32
      %841 = vst [vmem:[%s840] ss:$4 sm:$0xff] %v802
      %s843 = scalar_lea.vmem [#allocation1], 33
      %844 = vst [vmem:[%s843] ss:$4 sm:$0xff] %v803
      %s846 = scalar_lea.vmem [#allocation1], 34
      %847 = vst [vmem:[%s846] ss:$4 sm:$0xff] %v804
      %s849 = scalar_lea.vmem [#allocation1], 35
      %850 = vst [vmem:[%s849] ss:$4 sm:$0xff] %v805
      %v851 = vld.sshfl [vmem:[#allocation1] sm:$0xff pattern:$0x73625140]
      %v852 = vld.sshfl [vmem:[#allocation1 + $0x20] sm:$0xff pattern:$0x73625140]
      %854 = vst [vmem:[#allocation1] ss:$4 sm:$0xff] %v806
      %856 = vst [vmem:[%s831] ss:$4 sm:$0xff] %v807
      %858 = vst [vmem:[%s834] ss:$4 sm:$0xff] %v808
      %860 = vst [vmem:[%s837] ss:$4 sm:$0xff] %v809
      %862 = vst [vmem:[%s840] ss:$4 sm:$0xff] %v810
      %864 = vst [vmem:[%s843] ss:$4 sm:$0xff] %v811
      %866 = vst [vmem:[%s846] ss:$4 sm:$0xff] %v812
      %868 = vst [vmem:[%s849] ss:$4 sm:$0xff] %v813
      %v869 = vld.sshfl [vmem:[#allocation1] sm:$0xff pattern:$0x73625140]
      %v870 = vld.sshfl [vmem:[#allocation1 + $0x20] sm:$0xff pattern:$0x73625140]
      %v877 = vunpack.c.l.b16 %v822
      %v878 = vunpack.c.l.b16 %v823
      %v879 = vunpack.c.l.b16 %v824
      %v880 = vunpack.c.l.b16 %v825
      %v881 = vunpack.c.l.b16 %v826
      %v882 = vunpack.c.l.b16 %v827
      %v883 = vpack.c.b16 %v878, %v877
      %v884 = vpack.c.b16 %v880, %v879
      %v885 = vpack.c.b16 %v882, %v881
      %vm889 = vcmask 392192
      %v890 = vsel %vm889, %v851, 0
      %v892 = vsel %vm889, %v852, 0
      %v894 = vsel %vm889, %v869, 0
      %v896 = vsel %vm889, %v870, 0
      %898 = vmatpush.bf16.msra.mxu0 0
      %899 = vmatpush.bf16.msra.mxu0 0
      %900 = vmatpush.bf16.msra.mxu0 0
      %901 = vmatpush.bf16.msra.mxu0 0
      %902 = vmatpush.bf16.msra.mxu0 0
      %903 = vmatpush.bf16.msra.mxu0 %v885
      %904 = vmatpush.bf16.msra.mxu0 %v884
      %905 = vmatpush.bf16.msra.mxu0 %v883
      %906 = vmatmul.bf16.gmra.mxu0 %v890
      %v907 = vpop.f32.mrf.mxu0
      %v908 = vadd.f32 0.0, %v907
      %v909 = vpop.f32.mrf.mxu0
      %v910 = vadd.f32 0.0, %v909
      %911 = vmatmul.bf16.gmra.mxu0 %v892
      %v912 = vpop.f32.mrf.mxu0
      %v913 = vadd.f32 0.0, %v912
      %v914 = vpop.f32.mrf.mxu0
      %v915 = vadd.f32 0.0, %v914
      %916 = vmatmul.bf16.gmra.mxu0 %v894
      %v917 = vpop.f32.mrf.mxu0
      %v918 = vadd.f32 0.0, %v917
      %v919 = vpop.f32.mrf.mxu0
      %v920 = vadd.f32 0.0, %v919
      %921 = vmatmul.bf16.gmra.mxu0 %v896
      %v922 = vpop.f32.mrf.mxu0
      %v923 = vadd.f32 0.0, %v922
      %v924 = vpop.f32.mrf.mxu0
      %v925 = vadd.f32 0.0, %v924
      %926 = vdwg.mxu0
      %v927 = vadd.f32 %v814, %v908
      %v928 = vadd.f32 %v815, %v910
      %v929 = vadd.f32 %v816, %v913
      %v930 = vadd.f32 %v817, %v915
      %v931 = vadd.f32 %v818, %v918
      %v932 = vadd.f32 %v819, %v920
      %v933 = vadd.f32 %v820, %v923
      %v934 = vadd.f32 %v821, %v925
      %935 = vst [vmem:[#allocation3] sm:$0xff] %v927
      %936 = vst [vmem:[#allocation3 + $0x8] sm:$0xff] %v928
      %937 = vst [vmem:[#allocation3 + $0x10] sm:$0xff] %v929
      %938 = vst [vmem:[#allocation3 + $0x18] sm:$0xff] %v930
      %939 = vst [vmem:[#allocation3 + $0x20] sm:$0xff] %v931
      %940 = vst [vmem:[#allocation3 + $0x28] sm:$0xff] %v932
      %941 = vst [vmem:[#allocation3 + $0x30] sm:$0xff] %v933
      %942 = vst [vmem:[#allocation3 + $0x38] sm:$0xff] %v934
      %v943 = vld [vmem:[%s450] sm:$0x3]
      %v944 = vld [vmem:[%s450 + $0x2] sm:$0x3]
      %v945 = vld [vmem:[%s450 + $0x4] sm:$0x3]
      %v946 = vld [vmem:[%s450 + $0x6] sm:$0x3]
      %v947 = vld [vmem:[%s450 + $0x8] sm:$0x3]
      %v948 = vld [vmem:[%s450 + $0xa] sm:$0x3]
      %v949 = vld [vmem:[%s450 + $0xc] sm:$0x3]
      %v950 = vld [vmem:[%s450 + $0xe] sm:$0x3]
      %v951 = vld [vmem:[%s450 + $0x10] sm:$0x3]
      %v952 = vld [vmem:[%s450 + $0x12] sm:$0x3]
      %v953 = vld [vmem:[%s450 + $0x14] sm:$0x3]
      %v954 = vld [vmem:[%s450 + $0x16] sm:$0x3]
      %v955 = vld [vmem:[%s450 + $0x18] sm:$0x3]
      %v956 = vld [vmem:[%s450 + $0x1a] sm:$0x3]
      %v957 = vld [vmem:[%s450 + $0x1c] sm:$0x3]
      %v958 = vld [vmem:[%s450 + $0x1e] sm:$0x3]
      %v959 = vld [vmem:[#allocation3] sm:$0xff]
      %v960 = vld [vmem:[#allocation3 + $0x8] sm:$0xff]
      %v961 = vld [vmem:[#allocation3 + $0x10] sm:$0xff]
      %v962 = vld [vmem:[#allocation3 + $0x18] sm:$0xff]
      %v963 = vld [vmem:[#allocation3 + $0x20] sm:$0xff]
      %v964 = vld [vmem:[#allocation3 + $0x28] sm:$0xff]
      %v965 = vld [vmem:[#allocation3 + $0x30] sm:$0xff]
      %v966 = vld [vmem:[#allocation3 + $0x38] sm:$0xff]
      %s967 = scalar_lea.vmem %s1, 24
      %v968 = vld [vmem:[%s967] sm:$0xf]
      %v969 = vld [vmem:[%s967 + $0x4] sm:$0xf]
      %v970 = vld [vmem:[%s967 + $0x8] sm:$0xf]
      %v971 = vld [vmem:[%s967 + $0xc] sm:$0xf]
      %v972 = vld [vmem:[%s967 + $0x10] sm:$0xf]
      %v973 = vld [vmem:[%s967 + $0x14] sm:$0xf]
      %975 = vst [vmem:[#allocation1] ss:$4 sm:$0xff] %v943
      %s977 = scalar_lea.vmem [#allocation1], 1
      %978 = vst [vmem:[%s977] ss:$4 sm:$0xff] %v944
      %s980 = scalar_lea.vmem [#allocation1], 2
      %981 = vst [vmem:[%s980] ss:$4 sm:$0xff] %v945
      %s983 = scalar_lea.vmem [#allocation1], 3
      %984 = vst [vmem:[%s983] ss:$4 sm:$0xff] %v946
      %s986 = scalar_lea.vmem [#allocation1], 32
      %987 = vst [vmem:[%s986] ss:$4 sm:$0xff] %v947
      %s989 = scalar_lea.vmem [#allocation1], 33
      %990 = vst [vmem:[%s989] ss:$4 sm:$0xff] %v948
      %s992 = scalar_lea.vmem [#allocation1], 34
      %993 = vst [vmem:[%s992] ss:$4 sm:$0xff] %v949
      %s995 = scalar_lea.vmem [#allocation1], 35
      %996 = vst [vmem:[%s995] ss:$4 sm:$0xff] %v950
      %v997 = vld.sshfl [vmem:[#allocation1] sm:$0xff pattern:$0x73625140]
      %v998 = vld.sshfl [vmem:[#allocation1 + $0x20] sm:$0xff pattern:$0x73625140]
      %1000 = vst [vmem:[#allocation1] ss:$4 sm:$0xff] %v951
      %1002 = vst [vmem:[%s977] ss:$4 sm:$0xff] %v952
      %1004 = vst [vmem:[%s980] ss:$4 sm:$0xff] %v953
      %1006 = vst [vmem:[%s983] ss:$4 sm:$0xff] %v954
      %1008 = vst [vmem:[%s986] ss:$4 sm:$0xff] %v955
      %1010 = vst [vmem:[%s989] ss:$4 sm:$0xff] %v956
      %1012 = vst [vmem:[%s992] ss:$4 sm:$0xff] %v957
      %1014 = vst [vmem:[%s995] ss:$4 sm:$0xff] %v958
      %v1015 = vld.sshfl [vmem:[#allocation1] sm:$0xff pattern:$0x73625140]
      %v1016 = vld.sshfl [vmem:[#allocation1 + $0x20] sm:$0xff pattern:$0x73625140]
      %v1023 = vunpack.c.l.b16 %v968
      %v1024 = vunpack.c.l.b16 %v969
      %v1025 = vunpack.c.l.b16 %v970
      %v1026 = vunpack.c.l.b16 %v971
      %v1027 = vunpack.c.l.b16 %v972
      %v1028 = vunpack.c.l.b16 %v973
      %v1029 = vpack.c.b16 %v1024, %v1023
      %v1030 = vpack.c.b16 %v1026, %v1025
      %v1031 = vpack.c.b16 %v1028, %v1027
      %v1035 = vsel %vm889, %v997, 0
      %v1037 = vsel %vm889, %v998, 0
      %v1039 = vsel %vm889, %v1015, 0
      %v1041 = vsel %vm889, %v1016, 0
      %1043 = vmatpush.bf16.msra.mxu0 0
      %1044 = vmatpush.bf16.msra.mxu0 0
      %1045 = vmatpush.bf16.msra.mxu0 0
      %1046 = vmatpush.bf16.msra.mxu0 0
      %1047 = vmatpush.bf16.msra.mxu0 0
      %1048 = vmatpush.bf16.msra.mxu0 %v1031
      %1049 = vmatpush.bf16.msra.mxu0 %v1030
      %1050 = vmatpush.bf16.msra.mxu0 %v1029
      %1051 = vmatmul.bf16.gmra.mxu0 %v1035
      %v1052 = vpop.f32.mrf.mxu0
      %v1053 = vadd.f32 0.0, %v1052
      %v1054 = vpop.f32.mrf.mxu0
      %v1055 = vadd.f32 0.0, %v1054
      %1056 = vmatmul.bf16.gmra.mxu0 %v1037
      %v1057 = vpop.f32.mrf.mxu0
      %v1058 = vadd.f32 0.0, %v1057
      %v1059 = vpop.f32.mrf.mxu0
      %v1060 = vadd.f32 0.0, %v1059
      %1061 = vmatmul.bf16.gmra.mxu0 %v1039
      %v1062 = vpop.f32.mrf.mxu0
      %v1063 = vadd.f32 0.0, %v1062
      %v1064 = vpop.f32.mrf.mxu0
      %v1065 = vadd.f32 0.0, %v1064
      %1066 = vmatmul.bf16.gmra.mxu0 %v1041
      %v1067 = vpop.f32.mrf.mxu0
      %v1068 = vadd.f32 0.0, %v1067
      %v1069 = vpop.f32.mrf.mxu0
      %v1070 = vadd.f32 0.0, %v1069
      %1071 = vdwg.mxu0
      %v1072 = vadd.f32 %v959, %v1053
      %v1073 = vadd.f32 %v960, %v1055
      %v1074 = vadd.f32 %v961, %v1058
      %v1075 = vadd.f32 %v962, %v1060
      %v1076 = vadd.f32 %v963, %v1063
      %v1077 = vadd.f32 %v964, %v1065
      %v1078 = vadd.f32 %v965, %v1068
      %v1079 = vadd.f32 %v966, %v1070
      %1080 = vst [vmem:[#allocation3] sm:$0xff] %v1072
      %1081 = vst [vmem:[#allocation3 + $0x8] sm:$0xff] %v1073
      %1082 = vst [vmem:[#allocation3 + $0x10] sm:$0xff] %v1074
      %1083 = vst [vmem:[#allocation3 + $0x18] sm:$0xff] %v1075
      %1084 = vst [vmem:[#allocation3 + $0x20] sm:$0xff] %v1076
      %1085 = vst [vmem:[#allocation3 + $0x28] sm:$0xff] %v1077
      %1086 = vst [vmem:[#allocation3 + $0x30] sm:$0xff] %v1078
      %1087 = vst [vmem:[#allocation3 + $0x38] sm:$0xff] %v1079
      %v1088 = vld [vmem:[%s665] sm:$0x3]
      %v1089 = vld [vmem:[%s665 + $0x2] sm:$0x3]
      %v1090 = vld [vmem:[%s665 + $0x4] sm:$0x3]
      %v1091 = vld [vmem:[%s665 + $0x6] sm:$0x3]
      %v1092 = vld [vmem:[%s665 + $0x8] sm:$0x3]
      %v1093 = vld [vmem:[%s665 + $0xa] sm:$0x3]
      %v1094 = vld [vmem:[%s665 + $0xc] sm:$0x3]
      %v1095 = vld [vmem:[%s665 + $0xe] sm:$0x3]
      %v1096 = vld [vmem:[%s665 + $0x10] sm:$0x3]
      %v1097 = vld [vmem:[%s665 + $0x12] sm:$0x3]
      %v1098 = vld [vmem:[%s665 + $0x14] sm:$0x3]
      %v1099 = vld [vmem:[%s665 + $0x16] sm:$0x3]
      %v1100 = vld [vmem:[%s665 + $0x18] sm:$0x3]
      %v1101 = vld [vmem:[%s665 + $0x1a] sm:$0x3]
      %v1102 = vld [vmem:[%s665 + $0x1c] sm:$0x3]
      %v1103 = vld [vmem:[%s665 + $0x1e] sm:$0x3]
      %v1104 = vld [vmem:[#allocation3] sm:$0xff]
      %v1105 = vld [vmem:[#allocation3 + $0x8] sm:$0xff]
      %v1106 = vld [vmem:[#allocation3 + $0x10] sm:$0xff]
      %v1107 = vld [vmem:[#allocation3 + $0x18] sm:$0xff]
      %v1108 = vld [vmem:[#allocation3 + $0x20] sm:$0xff]
      %v1109 = vld [vmem:[#allocation3 + $0x28] sm:$0xff]
      %v1110 = vld [vmem:[#allocation3 + $0x30] sm:$0xff]
      %v1111 = vld [vmem:[#allocation3 + $0x38] sm:$0xff]
      %s1112 = scalar_lea.vmem %s1, 48
      %v1113 = vld [vmem:[%s1112] sm:$0xf]
      %v1114 = vld [vmem:[%s1112 + $0x4] sm:$0xf]
      %v1115 = vld [vmem:[%s1112 + $0x8] sm:$0xf]
      %v1116 = vld [vmem:[%s1112 + $0xc] sm:$0xf]
      %v1117 = vld [vmem:[%s1112 + $0x10] sm:$0xf]
      %v1118 = vld [vmem:[%s1112 + $0x14] sm:$0xf]
      %1120 = vst [vmem:[#allocation1] ss:$4 sm:$0xff] %v1088
      %s1122 = scalar_lea.vmem [#allocation1], 1
      %1123 = vst [vmem:[%s1122] ss:$4 sm:$0xff] %v1089
      %s1125 = scalar_lea.vmem [#allocation1], 2
      %1126 = vst [vmem:[%s1125] ss:$4 sm:$0xff] %v1090
      %s1128 = scalar_lea.vmem [#allocation1], 3
      %1129 = vst [vmem:[%s1128] ss:$4 sm:$0xff] %v1091
      %s1131 = scalar_lea.vmem [#allocation1], 32
      %1132 = vst [vmem:[%s1131] ss:$4 sm:$0xff] %v1092
      %s1134 = scalar_lea.vmem [#allocation1], 33
      %1135 = vst [vmem:[%s1134] ss:$4 sm:$0xff] %v1093
      %s1137 = scalar_lea.vmem [#allocation1], 34
      %1138 = vst [vmem:[%s1137] ss:$4 sm:$0xff] %v1094
      %s1140 = scalar_lea.vmem [#allocation1], 35
      %1141 = vst [vmem:[%s1140] ss:$4 sm:$0xff] %v1095
      %v1142 = vld.sshfl [vmem:[#allocation1] sm:$0xff pattern:$0x73625140]
      %v1143 = vld.sshfl [vmem:[#allocation1 + $0x20] sm:$0xff pattern:$0x73625140]
      %1145 = vst [vmem:[#allocation1] ss:$4 sm:$0xff] %v1096
      %1147 = vst [vmem:[%s1122] ss:$4 sm:$0xff] %v1097
      %1149 = vst [vmem:[%s1125] ss:$4 sm:$0xff] %v1098
      %1151 = vst [vmem:[%s1128] ss:$4 sm:$0xff] %v1099
      %1153 = vst [vmem:[%s1131] ss:$4 sm:$0xff] %v1100
      %1155 = vst [vmem:[%s1134] ss:$4 sm:$0xff] %v1101
      %1157 = vst [vmem:[%s1137] ss:$4 sm:$0xff] %v1102
      %1159 = vst [vmem:[%s1140] ss:$4 sm:$0xff] %v1103
      %v1160 = vld.sshfl [vmem:[#allocation1] sm:$0xff pattern:$0x73625140]
      %v1161 = vld.sshfl [vmem:[#allocation1 + $0x20] sm:$0xff pattern:$0x73625140]
      %v1168 = vunpack.c.l.b16 %v1113
      %v1169 = vunpack.c.l.b16 %v1114
      %v1170 = vunpack.c.l.b16 %v1115
      %v1171 = vunpack.c.l.b16 %v1116
      %v1172 = vunpack.c.l.b16 %v1117
      %v1173 = vunpack.c.l.b16 %v1118
      %v1174 = vpack.c.b16 %v1169, %v1168
      %v1175 = vpack.c.b16 %v1171, %v1170
      %v1176 = vpack.c.b16 %v1173, %v1172
      %v1180 = vsel %vm889, %v1142, 0
      %v1182 = vsel %vm889, %v1143, 0
      %v1184 = vsel %vm889, %v1160, 0
      %v1186 = vsel %vm889, %v1161, 0
      %1188 = vmatpush.bf16.msra.mxu0 0
      %1189 = vmatpush.bf16.msra.mxu0 0
      %1190 = vmatpush.bf16.msra.mxu0 0
      %1191 = vmatpush.bf16.msra.mxu0 0
      %1192 = vmatpush.bf16.msra.mxu0 0
      %1193 = vmatpush.bf16.msra.mxu0 %v1176
      %1194 = vmatpush.bf16.msra.mxu0 %v1175
      %1195 = vmatpush.bf16.msra.mxu0 %v1174
      %1196 = vmatmul.bf16.gmra.mxu0 %v1180
      %v1197 = vpop.f32.mrf.mxu0
      %v1198 = vadd.f32 0.0, %v1197
      %v1199 = vpop.f32.mrf.mxu0
      %v1200 = vadd.f32 0.0, %v1199
      %1201 = vmatmul.bf16.gmra.mxu0 %v1182
      %v1202 = vpop.f32.mrf.mxu0
      %v1203 = vadd.f32 0.0, %v1202
      %v1204 = vpop.f32.mrf.mxu0
      %v1205 = vadd.f32 0.0, %v1204
      %1206 = vmatmul.bf16.gmra.mxu0 %v1184
      %v1207 = vpop.f32.mrf.mxu0
      %v1208 = vadd.f32 0.0, %v1207
      %v1209 = vpop.f32.mrf.mxu0
      %v1210 = vadd.f32 0.0, %v1209
      %1211 = vmatmul.bf16.gmra.mxu0 %v1186
      %v1212 = vpop.f32.mrf.mxu0
      %v1213 = vadd.f32 0.0, %v1212
      %v1214 = vpop.f32.mrf.mxu0
      %v1215 = vadd.f32 0.0, %v1214
      %1216 = vdwg.mxu0
      %v1217 = vadd.f32 %v1104, %v1198
      %v1218 = vadd.f32 %v1105, %v1200
      %v1219 = vadd.f32 %v1106, %v1203
      %v1220 = vadd.f32 %v1107, %v1205
      %v1221 = vadd.f32 %v1108, %v1208
      %v1222 = vadd.f32 %v1109, %v1210
      %v1223 = vadd.f32 %v1110, %v1213
      %v1224 = vadd.f32 %v1111, %v1215
      %1225 = vst [vmem:[#allocation3] sm:$0xff] %v1217
      %1226 = vst [vmem:[#allocation3 + $0x8] sm:$0xff] %v1218
      %1227 = vst [vmem:[#allocation3 + $0x10] sm:$0xff] %v1219
      %1228 = vst [vmem:[#allocation3 + $0x18] sm:$0xff] %v1220
      %1229 = vst [vmem:[#allocation3 + $0x20] sm:$0xff] %v1221
      %1230 = vst [vmem:[#allocation3 + $0x28] sm:$0xff] %v1222
      %1231 = vst [vmem:[#allocation3 + $0x30] sm:$0xff] %v1223
      %1232 = vst [vmem:[#allocation3 + $0x38] sm:$0xff] %v1224
      %v1233 = vld [vmem:[#allocation3] sm:$0xf]
      %v1234 = vld [vmem:[#allocation3 + $0x4] sm:$0xf]
      %1235 = vst [vmem:[%s259] sm:$0xf] %v1233
      %s1236 = scalar_lea.vmem %s259, 4
      %1237 = vst [vmem:[%s1236] sm:$0xf] %v1234
      %v1238 = vmax.f32 %v1233, 0.0
      %v1239 = vpack.c.bf16 %v1238, %v1238
      %v1240 = vmax.f32 %v1234, 0.0
      %v1241 = vpack.c.bf16 %v1240, %v1240
      %s1242 = scalar_lea.vmem [#allocation4], 6
      %1243 = vst [vmem:[%s1242 + $0x2] sm:$0x3] %v1239
      %1244 = vst [vmem:[%s1242 + $0x4] sm:$0x3] %v1241
      %v1246 = vrot.slane %v1241, 2
      %vm1247 = vcmask 1041408
      %v1250 = vsel %vm1247, %v1241, %v1246
      %v1251 = vshrl.u32 %v1250, 16
      %v1253 = vrot.slane %v1251, 7
      %v1254 = vshll.u32 %v1250, 16
      %v1256 = vor.u32 %v1253, %v1254
      %vm1258 = vcmask 1041408
      %vm1259 = vmand %vm1258, %vm549
      %v1260 = vld [vmem:[%s1242] sm:$0x3]
      %v1261 = vsel %vm1259, %v1256, %v1260
      %1262 = vst [vmem:[%s1242] sm:$0x3] %v1261
      %v1263 = vld [vmem:[#allocation3 + $0x8] sm:$0xf]
      %v1264 = vld [vmem:[#allocation3 + $0xc] sm:$0xf]
      %s1265 = scalar_lea.vmem %s259, 8
      %1266 = vst [vmem:[%s1265] sm:$0xf] %v1263
      %s1267 = scalar_lea.vmem %s259, 12
      %1268 = vst [vmem:[%s1267] sm:$0xf] %v1264
      %v1269 = vmax.f32 %v1263, 0.0
      %v1270 = vpack.c.bf16 %v1269, %v1269
      %v1271 = vmax.f32 %v1264, 0.0
      %v1272 = vpack.c.bf16 %v1271, %v1271
      %s1273 = scalar_lea.vmem [#allocation4], 36
      %1274 = vst [vmem:[%s1273 + $0x2] sm:$0x3] %v1270
      %1275 = vst [vmem:[%s1273 + $0x4] sm:$0x3] %v1272
      %v1277 = vrot.slane %v1272, 2
      %v1280 = vsel %vm1247, %v1272, %v1277
      %v1281 = vshrl.u32 %v1280, 16
      %v1283 = vrot.slane %v1281, 7
      %v1284 = vshll.u32 %v1280, 16
      %v1286 = vor.u32 %v1283, %v1284
      %v1288 = vld [vmem:[%s1273] sm:$0x3]
      %v1289 = vsel %vm1259, %v1286, %v1288
      %1290 = vst [vmem:[%s1273] sm:$0x3] %v1289
      %v1291 = vld [vmem:[#allocation3 + $0x10] sm:$0xf]
      %v1292 = vld [vmem:[#allocation3 + $0x14] sm:$0xf]
      %s1293 = scalar_lea.vmem %s259, 16
      %1294 = vst [vmem:[%s1293] sm:$0xf] %v1291
      %s1295 = scalar_lea.vmem %s259, 20
      %1296 = vst [vmem:[%s1295] sm:$0xf] %v1292
      %v1297 = vmax.f32 %v1291, 0.0
      %v1298 = vpack.c.bf16 %v1297, %v1297
      %v1299 = vmax.f32 %v1292, 0.0
      %v1300 = vpack.c.bf16 %v1299, %v1299
      %s1301 = scalar_lea.vmem [#allocation4], 12
      %1302 = vst [vmem:[%s1301 + $0x2] sm:$0x3] %v1298
      %1303 = vst [vmem:[%s1301 + $0x4] sm:$0x3] %v1300
      %v1305 = vrot.slane %v1300, 2
      %v1308 = vsel %vm1247, %v1300, %v1305
      %v1309 = vshrl.u32 %v1308, 16
      %v1311 = vrot.slane %v1309, 7
      %v1312 = vshll.u32 %v1308, 16
      %v1314 = vor.u32 %v1311, %v1312
      %v1316 = vld [vmem:[%s1301] sm:$0x3]
      %v1317 = vsel %vm1259, %v1314, %v1316
      %1318 = vst [vmem:[%s1301] sm:$0x3] %v1317
      %v1319 = vld [vmem:[#allocation3 + $0x18] sm:$0xf]
      %v1320 = vld [vmem:[#allocation3 + $0x1c] sm:$0xf]
      %s1321 = scalar_lea.vmem %s259, 24
      %1322 = vst [vmem:[%s1321] sm:$0xf] %v1319
      %s1323 = scalar_lea.vmem %s259, 28
      %1324 = vst [vmem:[%s1323] sm:$0xf] %v1320
      %v1325 = vmax.f32 %v1319, 0.0
      %v1326 = vpack.c.bf16 %v1325, %v1325
      %v1327 = vmax.f32 %v1320, 0.0
      %v1328 = vpack.c.bf16 %v1327, %v1327
      %s1329 = scalar_lea.vmem [#allocation4], 42
      %1330 = vst [vmem:[%s1329 + $0x2] sm:$0x3] %v1326
      %1331 = vst [vmem:[%s1329 + $0x4] sm:$0x3] %v1328
      %v1333 = vrot.slane %v1328, 2
      %v1336 = vsel %vm1247, %v1328, %v1333
      %v1337 = vshrl.u32 %v1336, 16
      %v1339 = vrot.slane %v1337, 7
      %v1340 = vshll.u32 %v1336, 16
      %v1342 = vor.u32 %v1339, %v1340
      %v1344 = vld [vmem:[%s1329] sm:$0x3]
      %v1345 = vsel %vm1259, %v1342, %v1344
      %1346 = vst [vmem:[%s1329] sm:$0x3] %v1345
      %v1347 = vld [vmem:[#allocation3 + $0x20] sm:$0xf]
      %v1348 = vld [vmem:[#allocation3 + $0x24] sm:$0xf]
      %s1349 = scalar_lea.vmem %s259, 32
      %1350 = vst [vmem:[%s1349] sm:$0xf] %v1347
      %s1351 = scalar_lea.vmem %s259, 36
      %1352 = vst [vmem:[%s1351] sm:$0xf] %v1348
      %v1353 = vmax.f32 %v1347, 0.0
      %v1354 = vpack.c.bf16 %v1353, %v1353
      %v1355 = vmax.f32 %v1348, 0.0
      %v1356 = vpack.c.bf16 %v1355, %v1355
      %s1357 = scalar_lea.vmem [#allocation4], 18
      %1358 = vst [vmem:[%s1357 + $0x2] sm:$0x3] %v1354
      %1359 = vst [vmem:[%s1357 + $0x4] sm:$0x3] %v1356
      %v1361 = vrot.slane %v1356, 2
      %v1364 = vsel %vm1247, %v1356, %v1361
      %v1365 = vshrl.u32 %v1364, 16
      %v1367 = vrot.slane %v1365, 7
      %v1368 = vshll.u32 %v1364, 16
      %v1370 = vor.u32 %v1367, %v1368
      %v1372 = vld [vmem:[%s1357] sm:$0x3]
      %v1373 = vsel %vm1259, %v1370, %v1372
      %1374 = vst [vmem:[%s1357] sm:$0x3] %v1373
      %v1375 = vld [vmem:[#allocation3 + $0x28] sm:$0xf]
      %v1376 = vld [vmem:[#allocation3 + $0x2c] sm:$0xf]
      %s1377 = scalar_lea.vmem %s259, 40
      %1378 = vst [vmem:[%s1377] sm:$0xf] %v1375
      %s1379 = scalar_lea.vmem %s259, 44
      %1380 = vst [vmem:[%s1379] sm:$0xf] %v1376
      %v1381 = vmax.f32 %v1375, 0.0
      %v1382 = vpack.c.bf16 %v1381, %v1381
      %v1383 = vmax.f32 %v1376, 0.0
      %v1384 = vpack.c.bf16 %v1383, %v1383
      %s1385 = scalar_lea.vmem [#allocation4], 48
      %1386 = vst [vmem:[%s1385 + $0x2] sm:$0x3] %v1382
      %1387 = vst [vmem:[%s1385 + $0x4] sm:$0x3] %v1384
      %v1389 = vrot.slane %v1384, 2
      %v1392 = vsel %vm1247, %v1384, %v1389
      %v1393 = vshrl.u32 %v1392, 16
      %v1395 = vrot.slane %v1393, 7
      %v1396 = vshll.u32 %v1392, 16
      %v1398 = vor.u32 %v1395, %v1396
      %v1400 = vld [vmem:[%s1385] sm:$0x3]
      %v1401 = vsel %vm1259, %v1398, %v1400
      %1402 = vst [vmem:[%s1385] sm:$0x3] %v1401
      %v1403 = vld [vmem:[#allocation3 + $0x30] sm:$0xf]
      %v1404 = vld [vmem:[#allocation3 + $0x34] sm:$0xf]
      %s1405 = scalar_lea.vmem %s259, 48
      %1406 = vst [vmem:[%s1405] sm:$0xf] %v1403
      %s1407 = scalar_lea.vmem %s259, 52
      %1408 = vst [vmem:[%s1407] sm:$0xf] %v1404
      %v1409 = vmax.f32 %v1403, 0.0
      %v1410 = vpack.c.bf16 %v1409, %v1409
      %v1411 = vmax.f32 %v1404, 0.0
      %v1412 = vpack.c.bf16 %v1411, %v1411
      %s1413 = scalar_lea.vmem [#allocation4], 24
      %1414 = vst [vmem:[%s1413 + $0x2] sm:$0x3] %v1410
      %1415 = vst [vmem:[%s1413 + $0x4] sm:$0x3] %v1412
      %v1417 = vrot.slane %v1412, 2
      %v1420 = vsel %vm1247, %v1412, %v1417
      %v1421 = vshrl.u32 %v1420, 16
      %v1423 = vrot.slane %v1421, 7
      %v1424 = vshll.u32 %v1420, 16
      %v1426 = vor.u32 %v1423, %v1424
      %v1428 = vld [vmem:[%s1413] sm:$0x3]
      %v1429 = vsel %vm1259, %v1426, %v1428
      %1430 = vst [vmem:[%s1413] sm:$0x3] %v1429
      %v1431 = vld [vmem:[#allocation3 + $0x38] sm:$0xf]
      %v1432 = vld [vmem:[#allocation3 + $0x3c] sm:$0xf]
      %s1433 = scalar_lea.vmem %s259, 56
      %1434 = vst [vmem:[%s1433] sm:$0xf] %v1431
      %s1435 = scalar_lea.vmem %s259, 60
      %1436 = vst [vmem:[%s1435] sm:$0xf] %v1432
      %v1437 = vmax.f32 %v1431, 0.0
      %v1438 = vpack.c.bf16 %v1437, %v1437
      %v1439 = vmax.f32 %v1432, 0.0
      %v1440 = vpack.c.bf16 %v1439, %v1439
      %s1441 = scalar_lea.vmem [#allocation4], 54
      %1442 = vst [vmem:[%s1441 + $0x2] sm:$0x3] %v1438
      %1443 = vst [vmem:[%s1441 + $0x4] sm:$0x3] %v1440
      %v1445 = vrot.slane %v1440, 2
      %v1448 = vsel %vm1247, %v1440, %v1445
      %v1449 = vshrl.u32 %v1448, 16
      %v1451 = vrot.slane %v1449, 7
      %v1452 = vshll.u32 %v1448, 16
      %v1454 = vor.u32 %v1451, %v1452
      %v1456 = vld [vmem:[%s1441] sm:$0x3]
      %v1457 = vsel %vm1259, %v1454, %v1456
      %1458 = vst [vmem:[%s1441] sm:$0x3] %v1457
      %v1459 = vld [vmem:[%s4] sm:$0x1]
      %v1461 = vperm.slane %v1459, 0
      %1463 = vst [vmem:[#allocation5] sm:$0xff] %v1461
      %1464 = vst [vmem:[#allocation5 + $0x8] sm:$0xff] %v1461
      %v1465 = vld [vmem:[%s341] sm:$0x3f]
      %v1466 = vld [vmem:[%s341 + $0x6] sm:$0x3f]
      %v1467 = vld [vmem:[%s341 + $0xc] sm:$0x3f]
      %v1468 = vld [vmem:[%s341 + $0x12] sm:$0x3f]
      %v1469 = vld [vmem:[#allocation5] sm:$0xff]
      %v1470 = vld [vmem:[#allocation5 + $0x8] sm:$0xff]
      %v1471 = vld [vmem:[%s3] sm:$0xf]
      %v1472 = vld [vmem:[%s3 + $0x4] sm:$0xf]
      %v1473 = vld [vmem:[%s3 + $0x8] sm:$0xf]
      %v1474 = vld [vmem:[%s3 + $0xc] sm:$0xf]
      %v1475 = vld [vmem:[%s3 + $0x10] sm:$0xf]
      %v1476 = vld [vmem:[%s3 + $0x14] sm:$0xf]
      %v1477 = vld [vmem:[%s3 + $0x18] sm:$0xf]
      %v1478 = vld [vmem:[%s3 + $0x1c] sm:$0xf]
      %v1479 = vld [vmem:[%s3 + $0x20] sm:$0xf]
      %v1480 = vld [vmem:[%s3 + $0x24] sm:$0xf]
      %v1481 = vld [vmem:[%s3 + $0x28] sm:$0xf]
      %v1482 = vld [vmem:[%s3 + $0x2c] sm:$0xf]
      %v1483 = vld [vmem:[%s3 + $0x30] sm:$0xf]
      %v1484 = vld [vmem:[%s3 + $0x34] sm:$0xf]
      %v1485 = vld [vmem:[%s3 + $0x38] sm:$0xf]
      %v1486 = vld [vmem:[%s3 + $0x3c] sm:$0xf]
      %v1487 = vld [vmem:[%s3 + $0x40] sm:$0xf]
      %v1488 = vld [vmem:[%s3 + $0x44] sm:$0xf]
      %v1489 = vld [vmem:[%s3 + $0x48] sm:$0xf]
      %v1490 = vld [vmem:[%s3 + $0x4c] sm:$0xf]
      %v1491 = vld [vmem:[%s3 + $0x50] sm:$0xf]
      %v1492 = vld [vmem:[%s3 + $0x54] sm:$0xf]
      %v1493 = vld [vmem:[%s3 + $0x58] sm:$0xf]
      %v1494 = vld [vmem:[%s3 + $0x5c] sm:$0xf]
      %v1495 = vld [vmem:[%s3 + $0x60] sm:$0xf]
      %v1496 = vld [vmem:[%s3 + $0x64] sm:$0xf]
      %v1497 = vld [vmem:[%s3 + $0x68] sm:$0xf]
      %v1498 = vld [vmem:[%s3 + $0x6c] sm:$0xf]
      %v1499 = vld [vmem:[%s3 + $0x70] sm:$0xf]
      %v1500 = vld [vmem:[%s3 + $0x74] sm:$0xf]
      %v1501 = vld [vmem:[%s3 + $0x78] sm:$0xf]
      %v1502 = vld [vmem:[%s3 + $0x7c] sm:$0xf]
      %v1503 = vld [vmem:[%s3 + $0x80] sm:$0xf]
      %v1504 = vld [vmem:[%s3 + $0x84] sm:$0xf]
      %v1505 = vld [vmem:[%s3 + $0x88] sm:$0xf]
      %v1506 = vld [vmem:[%s3 + $0x8c] sm:$0xf]
      %v1507 = vld [vmem:[%s3 + $0x90] sm:$0xf]
      %v1508 = vld [vmem:[%s3 + $0x94] sm:$0xf]
      %v1509 = vld [vmem:[%s3 + $0x98] sm:$0xf]
      %v1510 = vld [vmem:[%s3 + $0x9c] sm:$0xf]
      %v1511 = vld [vmem:[%s3 + $0xa0] sm:$0xf]
      %v1512 = vld [vmem:[%s3 + $0xa4] sm:$0xf]
      %v1513 = vld [vmem:[%s3 + $0xa8] sm:$0xf]
      %v1514 = vld [vmem:[%s3 + $0xac] sm:$0xf]
      %v1515 = vld [vmem:[%s3 + $0xb0] sm:$0xf]
      %v1516 = vld [vmem:[%s3 + $0xb4] sm:$0xf]
      %v1517 = vld [vmem:[%s3 + $0xb8] sm:$0xf]
      %v1518 = vld [vmem:[%s3 + $0xbc] sm:$0xf]
      %1520 = vst [vmem:[#allocation1] ss:$4 sm:$0xff] %v1465
      %s1522 = scalar_lea.vmem [#allocation1], 1
      %1523 = vst [vmem:[%s1522] ss:$4 sm:$0xff] %v1466
      %s1525 = scalar_lea.vmem [#allocation1], 2
      %1526 = vst [vmem:[%s1525] ss:$4 sm:$0xff] %v1467
      %s1528 = scalar_lea.vmem [#allocation1], 3
      %1529 = vst [vmem:[%s1528] ss:$4 sm:$0xff] %v1468
      %v1530 = vld.sshfl [vmem:[#allocation1] sm:$0xff pattern:$0x73625140]
      %v1531 = vld.sshfl [vmem:[#allocation1 + $0x8] sm:$0xff pattern:$0x73625140]
      %v1532 = vld.sshfl [vmem:[#allocation1 + $0x10] sm:$0xff pattern:$0x73625140]
      %v1584 = vunpack.c.l.b16 %v1471
      %v1585 = vunpack.c.l.b16 %v1472
      %v1586 = vunpack.c.l.b16 %v1473
      %v1587 = vunpack.c.l.b16 %v1474
      %v1588 = vunpack.c.l.b16 %v1475
      %v1589 = vunpack.c.l.b16 %v1476
      %v1590 = vunpack.c.l.b16 %v1477
      %v1591 = vunpack.c.l.b16 %v1478
      %v1592 = vunpack.c.l.b16 %v1479
      %v1593 = vunpack.c.l.b16 %v1480
      %v1594 = vunpack.c.l.b16 %v1481
      %v1595 = vunpack.c.l.b16 %v1482
      %v1596 = vunpack.c.l.b16 %v1483
      %v1597 = vunpack.c.l.b16 %v1484
      %v1598 = vunpack.c.l.b16 %v1485
      %v1599 = vunpack.c.l.b16 %v1486
      %v1600 = vunpack.c.l.b16 %v1487
      %v1601 = vunpack.c.l.b16 %v1488
      %v1602 = vunpack.c.l.b16 %v1489
      %v1603 = vunpack.c.l.b16 %v1490
      %v1604 = vunpack.c.l.b16 %v1491
      %v1605 = vunpack.c.l.b16 %v1492
      %v1606 = vunpack.c.l.b16 %v1493
      %v1607 = vunpack.c.l.b16 %v1494
      %v1608 = vunpack.c.l.b16 %v1495
      %v1609 = vunpack.c.l.b16 %v1496
      %v1610 = vunpack.c.l.b16 %v1497
      %v1611 = vunpack.c.l.b16 %v1498
      %v1612 = vunpack.c.l.b16 %v1499
      %v1613 = vunpack.c.l.b16 %v1500
      %v1614 = vunpack.c.l.b16 %v1501
      %v1615 = vunpack.c.l.b16 %v1502
      %v1616 = vunpack.c.l.b16 %v1503
      %v1617 = vunpack.c.l.b16 %v1504
      %v1618 = vunpack.c.l.b16 %v1505
      %v1619 = vunpack.c.l.b16 %v1506
      %v1620 = vunpack.c.l.b16 %v1507
      %v1621 = vunpack.c.l.b16 %v1508
      %v1622 = vunpack.c.l.b16 %v1509
      %v1623 = vunpack.c.l.b16 %v1510
      %v1624 = vunpack.c.l.b16 %v1511
      %v1625 = vunpack.c.l.b16 %v1512
      %v1626 = vunpack.c.l.b16 %v1513
      %v1627 = vunpack.c.l.b16 %v1514
      %v1628 = vunpack.c.l.b16 %v1515
      %v1629 = vunpack.c.l.b16 %v1516
      %v1630 = vunpack.c.l.b16 %v1517
      %v1631 = vunpack.c.l.b16 %v1518
      %v1632 = vpack.c.b16 %v1585, %v1584
      %v1633 = vpack.c.b16 %v1587, %v1586
      %v1634 = vpack.c.b16 %v1589, %v1588
      %v1635 = vpack.c.b16 %v1591, %v1590
      %v1636 = vpack.c.b16 %v1593, %v1592
      %v1637 = vpack.c.b16 %v1595, %v1594
      %v1638 = vpack.c.b16 %v1597, %v1596
      %v1639 = vpack.c.b16 %v1599, %v1598
      %v1640 = vpack.c.b16 %v1601, %v1600
      %v1641 = vpack.c.b16 %v1603, %v1602
      %v1642 = vpack.c.b16 %v1605, %v1604
      %v1643 = vpack.c.b16 %v1607, %v1606
      %v1644 = vpack.c.b16 %v1609, %v1608
      %v1645 = vpack.c.b16 %v1611, %v1610
      %v1646 = vpack.c.b16 %v1613, %v1612
      %v1647 = vpack.c.b16 %v1615, %v1614
      %v1648 = vpack.c.b16 %v1617, %v1616
      %v1649 = vpack.c.b16 %v1619, %v1618
      %v1650 = vpack.c.b16 %v1621, %v1620
      %v1651 = vpack.c.b16 %v1623, %v1622
      %v1652 = vpack.c.b16 %v1625, %v1624
      %v1653 = vpack.c.b16 %v1627, %v1626
      %v1654 = vpack.c.b16 %v1629, %v1628
      %v1655 = vpack.c.b16 %v1631, %v1630
      %1680 = vmatpush.bf16.msra.mxu0 %v1639
      %1681 = vmatpush.bf16.msra.mxu0 %v1638
      %1682 = vmatpush.bf16.msra.mxu0 %v1637
      %1683 = vmatpush.bf16.msra.mxu0 %v1636
      %1684 = vmatpush.bf16.msra.mxu0 %v1635
      %1685 = vmatpush.bf16.msra.mxu0 %v1634
      %1686 = vmatpush.bf16.msra.mxu0 %v1633
      %1687 = vmatpush.bf16.msra.mxu0 %v1632
      %1688 = vmatmul.bf16.gmra.mxu0 %v1530
      %v1689 = vpop.f32.mrf.mxu0
      %v1690 = vadd.f32 0.0, %v1689
      %v1691 = vpop.f32.mrf.mxu0
      %v1692 = vadd.f32 0.0, %v1691
      %1693 = vdwg.mxu0
      %1694 = vmatpush.bf16.msra.mxu0 %v1647
      %1695 = vmatpush.bf16.msra.mxu0 %v1646
      %1696 = vmatpush.bf16.msra.mxu0 %v1645
      %1697 = vmatpush.bf16.msra.mxu0 %v1644
      %1698 = vmatpush.bf16.msra.mxu0 %v1643
      %1699 = vmatpush.bf16.msra.mxu0 %v1642
      %1700 = vmatpush.bf16.msra.mxu0 %v1641
      %1701 = vmatpush.bf16.msra.mxu0 %v1640
      %1702 = vmatmul.bf16.gmra.mxu0 %v1531
      %v1703 = vpop.f32.mrf.mxu0
      %v1704 = vadd.f32 %v1690, %v1703
      %v1705 = vpop.f32.mrf.mxu0
      %v1706 = vadd.f32 %v1692, %v1705
      %1707 = vdwg.mxu0
      %1708 = vmatpush.bf16.msra.mxu0 %v1655
      %1709 = vmatpush.bf16.msra.mxu0 %v1654
      %1710 = vmatpush.bf16.msra.mxu0 %v1653
      %1711 = vmatpush.bf16.msra.mxu0 %v1652
      %1712 = vmatpush.bf16.msra.mxu0 %v1651
      %1713 = vmatpush.bf16.msra.mxu0 %v1650
      %1714 = vmatpush.bf16.msra.mxu0 %v1649
      %1715 = vmatpush.bf16.msra.mxu0 %v1648
      %1716 = vmatmul.bf16.gmra.mxu0 %v1532
      %v1717 = vpop.f32.mrf.mxu0
      %v1718 = vadd.f32 %v1704, %v1717
      %v1719 = vpop.f32.mrf.mxu0
      %v1720 = vadd.f32 %v1706, %v1719
      %1721 = vdwg.mxu0
      %v1722 = vadd.f32 %v1469, %v1718
      %v1723 = vadd.f32 %v1470, %v1720
      %1724 = vst [vmem:[#allocation5] sm:$0xff] %v1722
      %1725 = vst [vmem:[#allocation5 + $0x8] sm:$0xff] %v1723
      %v1726 = vld [vmem:[%s1242] sm:$0x3f]
      %v1727 = vld [vmem:[%s1242 + $0x6] sm:$0x3f]
      %v1728 = vld [vmem:[%s1242 + $0xc] sm:$0x3f]
      %v1729 = vld [vmem:[%s1242 + $0x12] sm:$0x3f]
      %v1730 = vld [vmem:[#allocation5] sm:$0xff]
      %v1731 = vld [vmem:[#allocation5 + $0x8] sm:$0xff]
      %s1732 = scalar_lea.vmem %s3, 192
      %v1733 = vld [vmem:[%s1732] sm:$0xf]
      %v1734 = vld [vmem:[%s1732 + $0x4] sm:$0xf]
      %v1735 = vld [vmem:[%s1732 + $0x8] sm:$0xf]
      %v1736 = vld [vmem:[%s1732 + $0xc] sm:$0xf]
      %v1737 = vld [vmem:[%s1732 + $0x10] sm:$0xf]
      %v1738 = vld [vmem:[%s1732 + $0x14] sm:$0xf]
      %v1739 = vld [vmem:[%s1732 + $0x18] sm:$0xf]
      %v1740 = vld [vmem:[%s1732 + $0x1c] sm:$0xf]
      %v1741 = vld [vmem:[%s1732 + $0x20] sm:$0xf]
      %v1742 = vld [vmem:[%s1732 + $0x24] sm:$0xf]
      %v1743 = vld [vmem:[%s1732 + $0x28] sm:$0xf]
      %v1744 = vld [vmem:[%s1732 + $0x2c] sm:$0xf]
      %v1745 = vld [vmem:[%s1732 + $0x30] sm:$0xf]
      %v1746 = vld [vmem:[%s1732 + $0x34] sm:$0xf]
      %v1747 = vld [vmem:[%s1732 + $0x38] sm:$0xf]
      %v1748 = vld [vmem:[%s1732 + $0x3c] sm:$0xf]
      %v1749 = vld [vmem:[%s1732 + $0x40] sm:$0xf]
      %v1750 = vld [vmem:[%s1732 + $0x44] sm:$0xf]
      %v1751 = vld [vmem:[%s1732 + $0x48] sm:$0xf]
      %v1752 = vld [vmem:[%s1732 + $0x4c] sm:$0xf]
      %v1753 = vld [vmem:[%s1732 + $0x50] sm:$0xf]
      %v1754 = vld [vmem:[%s1732 + $0x54] sm:$0xf]
      %v1755 = vld [vmem:[%s1732 + $0x58] sm:$0xf]
      %v1756 = vld [vmem:[%s1732 + $0x5c] sm:$0xf]
      %v1757 = vld [vmem:[%s1732 + $0x60] sm:$0xf]
      %v1758 = vld [vmem:[%s1732 + $0x64] sm:$0xf]
      %v1759 = vld [vmem:[%s1732 + $0x68] sm:$0xf]
      %v1760 = vld [vmem:[%s1732 + $0x6c] sm:$0xf]
      %v1761 = vld [vmem:[%s1732 + $0x70] sm:$0xf]
      %v1762 = vld [vmem:[%s1732 + $0x74] sm:$0xf]
      %v1763 = vld [vmem:[%s1732 + $0x78] sm:$0xf]
      %v1764 = vld [vmem:[%s1732 + $0x7c] sm:$0xf]
      %v1765 = vld [vmem:[%s1732 + $0x80] sm:$0xf]
      %v1766 = vld [vmem:[%s1732 + $0x84] sm:$0xf]
      %v1767 = vld [vmem:[%s1732 + $0x88] sm:$0xf]
      %v1768 = vld [vmem:[%s1732 + $0x8c] sm:$0xf]
      %v1769 = vld [vmem:[%s1732 + $0x90] sm:$0xf]
      %v1770 = vld [vmem:[%s1732 + $0x94] sm:$0xf]
      %v1771 = vld [vmem:[%s1732 + $0x98] sm:$0xf]
      %v1772 = vld [vmem:[%s1732 + $0x9c] sm:$0xf]
      %v1773 = vld [vmem:[%s1732 + $0xa0] sm:$0xf]
      %v1774 = vld [vmem:[%s1732 + $0xa4] sm:$0xf]
      %v1775 = vld [vmem:[%s1732 + $0xa8] sm:$0xf]
      %v1776 = vld [vmem:[%s1732 + $0xac] sm:$0xf]
      %v1777 = vld [vmem:[%s1732 + $0xb0] sm:$0xf]
      %v1778 = vld [vmem:[%s1732 + $0xb4] sm:$0xf]
      %v1779 = vld [vmem:[%s1732 + $0xb8] sm:$0xf]
      %v1780 = vld [vmem:[%s1732 + $0xbc] sm:$0xf]
      %1782 = vst [vmem:[#allocation1] ss:$4 sm:$0xff] %v1726
      %s1784 = scalar_lea.vmem [#allocation1], 1
      %1785 = vst [vmem:[%s1784] ss:$4 sm:$0xff] %v1727
      %s1787 = scalar_lea.vmem [#allocation1], 2
      %1788 = vst [vmem:[%s1787] ss:$4 sm:$0xff] %v1728
      %s1790 = scalar_lea.vmem [#allocation1], 3
      %1791 = vst [vmem:[%s1790] ss:$4 sm:$0xff] %v1729
      %v1792 = vld.sshfl [vmem:[#allocation1] sm:$0xff pattern:$0x73625140]
      %v1793 = vld.sshfl [vmem:[#allocation1 + $0x8] sm:$0xff pattern:$0x73625140]
      %v1794 = vld.sshfl [vmem:[#allocation1 + $0x10] sm:$0xff pattern:$0x73625140]
      %v1846 = vunpack.c.l.b16 %v1733
      %v1847 = vunpack.c.l.b16 %v1734
      %v1848 = vunpack.c.l.b16 %v1735
      %v1849 = vunpack.c.l.b16 %v1736
      %v1850 = vunpack.c.l.b16 %v1737
      %v1851 = vunpack.c.l.b16 %v1738
      %v1852 = vunpack.c.l.b16 %v1739
      %v1853 = vunpack.c.l.b16 %v1740
      %v1854 = vunpack.c.l.b16 %v1741
      %v1855 = vunpack.c.l.b16 %v1742
      %v1856 = vunpack.c.l.b16 %v1743
      %v1857 = vunpack.c.l.b16 %v1744
      %v1858 = vunpack.c.l.b16 %v1745
      %v1859 = vunpack.c.l.b16 %v1746
      %v1860 = vunpack.c.l.b16 %v1747
      %v1861 = vunpack.c.l.b16 %v1748
      %v1862 = vunpack.c.l.b16 %v1749
      %v1863 = vunpack.c.l.b16 %v1750
      %v1864 = vunpack.c.l.b16 %v1751
      %v1865 = vunpack.c.l.b16 %v1752
      %v1866 = vunpack.c.l.b16 %v1753
      %v1867 = vunpack.c.l.b16 %v1754
      %v1868 = vunpack.c.l.b16 %v1755
      %v1869 = vunpack.c.l.b16 %v1756
      %v1870 = vunpack.c.l.b16 %v1757
      %v1871 = vunpack.c.l.b16 %v1758
      %v1872 = vunpack.c.l.b16 %v1759
      %v1873 = vunpack.c.l.b16 %v1760
      %v1874 = vunpack.c.l.b16 %v1761
      %v1875 = vunpack.c.l.b16 %v1762
      %v1876 = vunpack.c.l.b16 %v1763
      %v1877 = vunpack.c.l.b16 %v1764
      %v1878 = vunpack.c.l.b16 %v1765
      %v1879 = vunpack.c.l.b16 %v1766
      %v1880 = vunpack.c.l.b16 %v1767
      %v1881 = vunpack.c.l.b16 %v1768
      %v1882 = vunpack.c.l.b16 %v1769
      %v1883 = vunpack.c.l.b16 %v1770
      %v1884 = vunpack.c.l.b16 %v1771
      %v1885 = vunpack.c.l.b16 %v1772
      %v1886 = vunpack.c.l.b16 %v1773
      %v1887 = vunpack.c.l.b16 %v1774
      %v1888 = vunpack.c.l.b16 %v1775
      %v1889 = vunpack.c.l.b16 %v1776
      %v1890 = vunpack.c.l.b16 %v1777
      %v1891 = vunpack.c.l.b16 %v1778
      %v1892 = vunpack.c.l.b16 %v1779
      %v1893 = vunpack.c.l.b16 %v1780
      %v1894 = vpack.c.b16 %v1847, %v1846
      %v1895 = vpack.c.b16 %v1849, %v1848
      %v1896 = vpack.c.b16 %v1851, %v1850
      %v1897 = vpack.c.b16 %v1853, %v1852
      %v1898 = vpack.c.b16 %v1855, %v1854
      %v1899 = vpack.c.b16 %v1857, %v1856
      %v1900 = vpack.c.b16 %v1859, %v1858
      %v1901 = vpack.c.b16 %v1861, %v1860
      %v1902 = vpack.c.b16 %v1863, %v1862
      %v1903 = vpack.c.b16 %v1865, %v1864
      %v1904 = vpack.c.b16 %v1867, %v1866
      %v1905 = vpack.c.b16 %v1869, %v1868
      %v1906 = vpack.c.b16 %v1871, %v1870
      %v1907 = vpack.c.b16 %v1873, %v1872
      %v1908 = vpack.c.b16 %v1875, %v1874
      %v1909 = vpack.c.b16 %v1877, %v1876
      %v1910 = vpack.c.b16 %v1879, %v1878
      %v1911 = vpack.c.b16 %v1881, %v1880
      %v1912 = vpack.c.b16 %v1883, %v1882
      %v1913 = vpack.c.b16 %v1885, %v1884
      %v1914 = vpack.c.b16 %v1887, %v1886
      %v1915 = vpack.c.b16 %v1889, %v1888
      %v1916 = vpack.c.b16 %v1891, %v1890
      %v1917 = vpack.c.b16 %v1893, %v1892
      %1942 = vmatpush.bf16.msra.mxu0 %v1901
      %1943 = vmatpush.bf16.msra.mxu0 %v1900
      %1944 = vmatpush.bf16.msra.mxu0 %v1899
      %1945 = vmatpush.bf16.msra.mxu0 %v1898
      %1946 = vmatpush.bf16.msra.mxu0 %v1897
      %1947 = vmatpush.bf16.msra.mxu0 %v1896
      %1948 = vmatpush.bf16.msra.mxu0 %v1895
      %1949 = vmatpush.bf16.msra.mxu0 %v1894
      %1950 = vmatmul.bf16.gmra.mxu0 %v1792
      %v1951 = vpop.f32.mrf.mxu0
      %v1952 = vadd.f32 0.0, %v1951
      %v1953 = vpop.f32.mrf.mxu0
      %v1954 = vadd.f32 0.0, %v1953
      %1955 = vdwg.mxu0
      %1956 = vmatpush.bf16.msra.mxu0 %v1909
      %1957 = vmatpush.bf16.msra.mxu0 %v1908
      %1958 = vmatpush.bf16.msra.mxu0 %v1907
      %1959 = vmatpush.bf16.msra.mxu0 %v1906
      %1960 = vmatpush.bf16.msra.mxu0 %v1905
      %1961 = vmatpush.bf16.msra.mxu0 %v1904
      %1962 = vmatpush.bf16.msra.mxu0 %v1903
      %1963 = vmatpush.bf16.msra.mxu0 %v1902
      %1964 = vmatmul.bf16.gmra.mxu0 %v1793
      %v1965 = vpop.f32.mrf.mxu0
      %v1966 = vadd.f32 %v1952, %v1965
      %v1967 = vpop.f32.mrf.mxu0
      %v1968 = vadd.f32 %v1954, %v1967
      %1969 = vdwg.mxu0
      %1970 = vmatpush.bf16.msra.mxu0 %v1917
      %1971 = vmatpush.bf16.msra.mxu0 %v1916
      %1972 = vmatpush.bf16.msra.mxu0 %v1915
      %1973 = vmatpush.bf16.msra.mxu0 %v1914
      %1974 = vmatpush.bf16.msra.mxu0 %v1913
      %1975 = vmatpush.bf16.msra.mxu0 %v1912
      %1976 = vmatpush.bf16.msra.mxu0 %v1911
      %1977 = vmatpush.bf16.msra.mxu0 %v1910
      %1978 = vmatmul.bf16.gmra.mxu0 %v1794
      %v1979 = vpop.f32.mrf.mxu0
      %v1980 = vadd.f32 %v1966, %v1979
      %v1981 = vpop.f32.mrf.mxu0
      %v1982 = vadd.f32 %v1968, %v1981
      %1983 = vdwg.mxu0
      %v1984 = vadd.f32 %v1730, %v1980
      %v1985 = vadd.f32 %v1731, %v1982
      %1986 = vst [vmem:[#allocation5] sm:$0xff] %v1984
      %1987 = vst [vmem:[#allocation5 + $0x8] sm:$0xff] %v1985
      %v1988 = vld [vmem:[%s1273] sm:$0x3f]
      %v1989 = vld [vmem:[%s1273 + $0x6] sm:$0x3f]
      %v1990 = vld [vmem:[%s1273 + $0xc] sm:$0x3f]
      %v1991 = vld [vmem:[%s1273 + $0x12] sm:$0x3f]
      %v1992 = vld [vmem:[#allocation5] sm:$0xff]
      %v1993 = vld [vmem:[#allocation5 + $0x8] sm:$0xff]
      %s1994 = scalar_lea.vmem %s3, 384
      %v1995 = vld [vmem:[%s1994] sm:$0xf]
      %v1996 = vld [vmem:[%s1994 + $0x4] sm:$0xf]
      %v1997 = vld [vmem:[%s1994 + $0x8] sm:$0xf]
      %v1998 = vld [vmem:[%s1994 + $0xc] sm:$0xf]
      %v1999 = vld [vmem:[%s1994 + $0x10] sm:$0xf]
      %v2000 = vld [vmem:[%s1994 + $0x14] sm:$0xf]
      %v2001 = vld [vmem:[%s1994 + $0x18] sm:$0xf]
      %v2002 = vld [vmem:[%s1994 + $0x1c] sm:$0xf]
      %v2003 = vld [vmem:[%s1994 + $0x20] sm:$0xf]
      %v2004 = vld [vmem:[%s1994 + $0x24] sm:$0xf]
      %v2005 = vld [vmem:[%s1994 + $0x28] sm:$0xf]
      %v2006 = vld [vmem:[%s1994 + $0x2c] sm:$0xf]
      %v2007 = vld [vmem:[%s1994 + $0x30] sm:$0xf]
      %v2008 = vld [vmem:[%s1994 + $0x34] sm:$0xf]
      %v2009 = vld [vmem:[%s1994 + $0x38] sm:$0xf]
      %v2010 = vld [vmem:[%s1994 + $0x3c] sm:$0xf]
      %v2011 = vld [vmem:[%s1994 + $0x40] sm:$0xf]
      %v2012 = vld [vmem:[%s1994 + $0x44] sm:$0xf]
      %v2013 = vld [vmem:[%s1994 + $0x48] sm:$0xf]
      %v2014 = vld [vmem:[%s1994 + $0x4c] sm:$0xf]
      %v2015 = vld [vmem:[%s1994 + $0x50] sm:$0xf]
      %v2016 = vld [vmem:[%s1994 + $0x54] sm:$0xf]
      %v2017 = vld [vmem:[%s1994 + $0x58] sm:$0xf]
      %v2018 = vld [vmem:[%s1994 + $0x5c] sm:$0xf]
      %v2019 = vld [vmem:[%s1994 + $0x60] sm:$0xf]
      %v2020 = vld [vmem:[%s1994 + $0x64] sm:$0xf]
      %v2021 = vld [vmem:[%s1994 + $0x68] sm:$0xf]
      %v2022 = vld [vmem:[%s1994 + $0x6c] sm:$0xf]
      %v2023 = vld [vmem:[%s1994 + $0x70] sm:$0xf]
      %v2024 = vld [vmem:[%s1994 + $0x74] sm:$0xf]
      %v2025 = vld [vmem:[%s1994 + $0x78] sm:$0xf]
      %v2026 = vld [vmem:[%s1994 + $0x7c] sm:$0xf]
      %v2027 = vld [vmem:[%s1994 + $0x80] sm:$0xf]
      %v2028 = vld [vmem:[%s1994 + $0x84] sm:$0xf]
      %v2029 = vld [vmem:[%s1994 + $0x88] sm:$0xf]
      %v2030 = vld [vmem:[%s1994 + $0x8c] sm:$0xf]
      %v2031 = vld [vmem:[%s1994 + $0x90] sm:$0xf]
      %v2032 = vld [vmem:[%s1994 + $0x94] sm:$0xf]
      %v2033 = vld [vmem:[%s1994 + $0x98] sm:$0xf]
      %v2034 = vld [vmem:[%s1994 + $0x9c] sm:$0xf]
      %v2035 = vld [vmem:[%s1994 + $0xa0] sm:$0xf]
      %v2036 = vld [vmem:[%s1994 + $0xa4] sm:$0xf]
      %v2037 = vld [vmem:[%s1994 + $0xa8] sm:$0xf]
      %v2038 = vld [vmem:[%s1994 + $0xac] sm:$0xf]
      %v2039 = vld [vmem:[%s1994 + $0xb0] sm:$0xf]
      %v2040 = vld [vmem:[%s1994 + $0xb4] sm:$0xf]
      %v2041 = vld [vmem:[%s1994 + $0xb8] sm:$0xf]
      %v2042 = vld [vmem:[%s1994 + $0xbc] sm:$0xf]
      %2044 = vst [vmem:[#allocation1] ss:$4 sm:$0xff] %v1988
      %s2046 = scalar_lea.vmem [#allocation1], 1
      %2047 = vst [vmem:[%s2046] ss:$4 sm:$0xff] %v1989
      %s2049 = scalar_lea.vmem [#allocation1], 2
      %2050 = vst [vmem:[%s2049] ss:$4 sm:$0xff] %v1990
      %s2052 = scalar_lea.vmem [#allocation1], 3
      %2053 = vst [vmem:[%s2052] ss:$4 sm:$0xff] %v1991
      %v2054 = vld.sshfl [vmem:[#allocation1] sm:$0xff pattern:$0x73625140]
      %v2055 = vld.sshfl [vmem:[#allocation1 + $0x8] sm:$0xff pattern:$0x73625140]
      %v2056 = vld.sshfl [vmem:[#allocation1 + $0x10] sm:$0xff pattern:$0x73625140]
      %v2108 = vunpack.c.l.b16 %v1995
      %v2109 = vunpack.c.l.b16 %v1996
      %v2110 = vunpack.c.l.b16 %v1997
      %v2111 = vunpack.c.l.b16 %v1998
      %v2112 = vunpack.c.l.b16 %v1999
      %v2113 = vunpack.c.l.b16 %v2000
      %v2114 = vunpack.c.l.b16 %v2001
      %v2115 = vunpack.c.l.b16 %v2002
      %v2116 = vunpack.c.l.b16 %v2003
      %v2117 = vunpack.c.l.b16 %v2004
      %v2118 = vunpack.c.l.b16 %v2005
      %v2119 = vunpack.c.l.b16 %v2006
      %v2120 = vunpack.c.l.b16 %v2007
      %v2121 = vunpack.c.l.b16 %v2008
      %v2122 = vunpack.c.l.b16 %v2009
      %v2123 = vunpack.c.l.b16 %v2010
      %v2124 = vunpack.c.l.b16 %v2011
      %v2125 = vunpack.c.l.b16 %v2012
      %v2126 = vunpack.c.l.b16 %v2013
      %v2127 = vunpack.c.l.b16 %v2014
      %v2128 = vunpack.c.l.b16 %v2015
      %v2129 = vunpack.c.l.b16 %v2016
      %v2130 = vunpack.c.l.b16 %v2017
      %v2131 = vunpack.c.l.b16 %v2018
      %v2132 = vunpack.c.l.b16 %v2019
      %v2133 = vunpack.c.l.b16 %v2020
      %v2134 = vunpack.c.l.b16 %v2021
      %v2135 = vunpack.c.l.b16 %v2022
      %v2136 = vunpack.c.l.b16 %v2023
      %v2137 = vunpack.c.l.b16 %v2024
      %v2138 = vunpack.c.l.b16 %v2025
      %v2139 = vunpack.c.l.b16 %v2026
      %v2140 = vunpack.c.l.b16 %v2027
      %v2141 = vunpack.c.l.b16 %v2028
      %v2142 = vunpack.c.l.b16 %v2029
      %v2143 = vunpack.c.l.b16 %v2030
      %v2144 = vunpack.c.l.b16 %v2031
      %v2145 = vunpack.c.l.b16 %v2032
      %v2146 = vunpack.c.l.b16 %v2033
      %v2147 = vunpack.c.l.b16 %v2034
      %v2148 = vunpack.c.l.b16 %v2035
      %v2149 = vunpack.c.l.b16 %v2036
      %v2150 = vunpack.c.l.b16 %v2037
      %v2151 = vunpack.c.l.b16 %v2038
      %v2152 = vunpack.c.l.b16 %v2039
      %v2153 = vunpack.c.l.b16 %v2040
      %v2154 = vunpack.c.l.b16 %v2041
      %v2155 = vunpack.c.l.b16 %v2042
      %v2156 = vpack.c.b16 %v2109, %v2108
      %v2157 = vpack.c.b16 %v2111, %v2110
      %v2158 = vpack.c.b16 %v2113, %v2112
      %v2159 = vpack.c.b16 %v2115, %v2114
      %v2160 = vpack.c.b16 %v2117, %v2116
      %v2161 = vpack.c.b16 %v2119, %v2118
      %v2162 = vpack.c.b16 %v2121, %v2120
      %v2163 = vpack.c.b16 %v2123, %v2122
      %v2164 = vpack.c.b16 %v2125, %v2124
      %v2165 = vpack.c.b16 %v2127, %v2126
      %v2166 = vpack.c.b16 %v2129, %v2128
      %v2167 = vpack.c.b16 %v2131, %v2130
      %v2168 = vpack.c.b16 %v2133, %v2132
      %v2169 = vpack.c.b16 %v2135, %v2134
      %v2170 = vpack.c.b16 %v2137, %v2136
      %v2171 = vpack.c.b16 %v2139, %v2138
      %v2172 = vpack.c.b16 %v2141, %v2140
      %v2173 = vpack.c.b16 %v2143, %v2142
      %v2174 = vpack.c.b16 %v2145, %v2144
      %v2175 = vpack.c.b16 %v2147, %v2146
      %v2176 = vpack.c.b16 %v2149, %v2148
      %v2177 = vpack.c.b16 %v2151, %v2150
      %v2178 = vpack.c.b16 %v2153, %v2152
      %v2179 = vpack.c.b16 %v2155, %v2154
      %2204 = vmatpush.bf16.msra.mxu0 %v2163
      %2205 = vmatpush.bf16.msra.mxu0 %v2162
      %2206 = vmatpush.bf16.msra.mxu0 %v2161
      %2207 = vmatpush.bf16.msra.mxu0 %v2160
      %2208 = vmatpush.bf16.msra.mxu0 %v2159
      %2209 = vmatpush.bf16.msra.mxu0 %v2158
      %2210 = vmatpush.bf16.msra.mxu0 %v2157
      %2211 = vmatpush.bf16.msra.mxu0 %v2156
      %2212 = vmatmul.bf16.gmra.mxu0 %v2054
      %v2213 = vpop.f32.mrf.mxu0
      %v2214 = vadd.f32 0.0, %v2213
      %v2215 = vpop.f32.mrf.mxu0
      %v2216 = vadd.f32 0.0, %v2215
      %2217 = vdwg.mxu0
      %2218 = vmatpush.bf16.msra.mxu0 %v2171
      %2219 = vmatpush.bf16.msra.mxu0 %v2170
      %2220 = vmatpush.bf16.msra.mxu0 %v2169
      %2221 = vmatpush.bf16.msra.mxu0 %v2168
      %2222 = vmatpush.bf16.msra.mxu0 %v2167
      %2223 = vmatpush.bf16.msra.mxu0 %v2166
      %2224 = vmatpush.bf16.msra.mxu0 %v2165
      %2225 = vmatpush.bf16.msra.mxu0 %v2164
      %2226 = vmatmul.bf16.gmra.mxu0 %v2055
      %v2227 = vpop.f32.mrf.mxu0
      %v2228 = vadd.f32 %v2214, %v2227
      %v2229 = vpop.f32.mrf.mxu0
      %v2230 = vadd.f32 %v2216, %v2229
      %2231 = vdwg.mxu0
      %2232 = vmatpush.bf16.msra.mxu0 %v2179
      %2233 = vmatpush.bf16.msra.mxu0 %v2178
      %2234 = vmatpush.bf16.msra.mxu0 %v2177
      %2235 = vmatpush.bf16.msra.mxu0 %v2176
      %2236 = vmatpush.bf16.msra.mxu0 %v2175
      %2237 = vmatpush.bf16.msra.mxu0 %v2174
      %2238 = vmatpush.bf16.msra.mxu0 %v2173
      %2239 = vmatpush.bf16.msra.mxu0 %v2172
      %2240 = vmatmul.bf16.gmra.mxu0 %v2056
      %v2241 = vpop.f32.mrf.mxu0
      %v2242 = vadd.f32 %v2228, %v2241
      %v2243 = vpop.f32.mrf.mxu0
      %v2244 = vadd.f32 %v2230, %v2243
      %2245 = vdwg.mxu0
      %v2246 = vadd.f32 %v1992, %v2242
      %v2247 = vadd.f32 %v1993, %v2244
      %2248 = vst [vmem:[#allocation5] sm:$0xff] %v2246
      %2249 = vst [vmem:[#allocation5 + $0x8] sm:$0xff] %v2247
      %v2250 = vld [vmem:[#allocation5] sm:$0xff]
      %v2251 = vld [vmem:[#allocation5 + $0x8] sm:$0xff]
      %v2254 = vrot.slane %v2250, 4
      %v2255 = vrot.slane %v2251, 4
      %2258 = vst [vmem:[%s264] sm:$0xf] %v2250
      %2259 = vst [vmem:[%s264 + $0x4] sm:$0xf] %v2254
      %2260 = vst [vmem:[%s264 + $0x8] sm:$0xf] %v2251
      %2261 = vst [vmem:[%s264 + $0xc] sm:$0xf] %v2255
      %p2262 = scmp.lt.s32.totalorder %s18, 1
      %s2263 = scalar_select %p2262, %s18, 1
      %s2264 = smul.addr %s2263, 16
      %s2265 = smul.addr %s2264, 4
      %s2266 = scalar_lea.vmem %s5, %s2265
      %p2267 = scmp.lt.s32.totalorder %s18, 1
      %s2268 = scalar_select %p2267, %s18, 1
      %s2269 = smul.addr %s2268, 4
      %s2270 = smul.addr %s2269, 4
      %s2271 = scalar_lea.vmem %s6, %s2270
      // Predicated region
      $region41: #{lastlevel_p6p7_fused.1} parent=39 // pred_check
        %p2272 = pneg %p146
      $region42: #{lastlevel_p6p7_fused.1} parent=39 // pred_check_branch
        %2274 = sbr.rel (%p2272) target = $region44
      $region43: #{lastlevel_p6p7_fused.1} parent=39 // pred_region
        _
      $region44: #{lastlevel_p6p7_fused.1} parent=39 // pred_fallthru
        _
      // Predicated region
      $region45: #{lastlevel_p6p7_fused.1} parent=39 // pred_check
        %p2275 = pneg %p172
      $region46: #{lastlevel_p6p7_fused.1} parent=39 // pred_check_branch
        %2277 = sbr.rel (%p2275) target = $region48
      $region47: #{lastlevel_p6p7_fused.1} parent=39 // pred_region
        _
      $region48: #{lastlevel_p6p7_fused.1} parent=39 // pred_fallthru
        _
    $region40: #{lastlevel_p6p7_fused.1} parent=5 // pred_fallthru
      _
    %p2278 = scmp.le.s32.totalorder 2, %s13
    // Predicated region
    $region49: #{lastlevel_p6p7_fused.1} parent=5 // pred_check
      %p2279 = pneg %p2278
    $region50: #{lastlevel_p6p7_fused.1} parent=5 // pred_check_branch
      %2281 = sbr.rel (%p2279) target = $region52
    $region51: #{lastlevel_p6p7_fused.1} parent=5 // pred_region
      %s2282 = ssub.s32 %s13, 2
      // Predicated region
      $region53: #{lastlevel_p6p7_fused.1} parent=51 // pred_check
        %p2283 = pneg %p152
      $region54: #{lastlevel_p6p7_fused.1} parent=51 // pred_check_branch
        %2285 = sbr.rel (%p2283) target = $region56
      $region55: #{lastlevel_p6p7_fused.1} parent=51 // pred_region
        %p2286 = scmp.lt.s32.totalorder %s19, 1
        %s2287 = scalar_select %p2286, %s19, 1
        %s2288 = smul.addr %s2287, 16
        %s2289 = smul.addr %s2288, 4
        %s2290 = scalar_lea.vmem %s5, %s2289
      $region56: #{lastlevel_p6p7_fused.1} parent=51 // pred_fallthru
        _
      // Predicated region
      $region57: #{lastlevel_p6p7_fused.1} parent=51 // pred_check
        %p2291 = pneg %p178
      $region58: #{lastlevel_p6p7_fused.1} parent=51 // pred_check_branch
        %2293 = sbr.rel (%p2291) target = $region60
      $region59: #{lastlevel_p6p7_fused.1} parent=51 // pred_region
        %p2294 = scmp.lt.s32.totalorder %s19, 1
        %s2295 = scalar_select %p2294, %s19, 1
        %s2296 = smul.addr %s2295, 4
        %s2297 = smul.addr %s2296, 4
        %s2298 = scalar_lea.vmem %s6, %s2297
      $region60: #{lastlevel_p6p7_fused.1} parent=51 // pred_fallthru
        _
    $region52: #{lastlevel_p6p7_fused.1} parent=5 // pred_fallthru
      _
  $region6: #{lastlevel_p6p7_fused.1} parent=0 // loop_footer
    %s17 = sadd.s32 1, %s13
  $region7: #{lastlevel_p6p7_fused.1} parent=0 // loop_footer_branch
    %12 = sbr.rel target = $region3
  $region8: #{lastlevel_p6p7_fused.1} parent=0 // loop_exit
    _

</llo_original>
